<compile_context>
chip_gen: v6e
topology: v6e:2x2x1
jax: 0.10.0
libtpu: 0.0.40
codegen_flags: <defaults>
</compile_context>

<pallas_src>
import functools

import jax
import jax.numpy as jnp
from jax.experimental import pallas as pl
from jax.experimental.pallas import tpu as pltpu


# -----------------------------------------------------------------------------
# Per-generation scoped-VMEM budget (review: 64 MiB is v7x's *entire* VMEM ->
# leave ~25% headroom; v5e/v6e have 128 MiB physical -> raise well above the
# 16/32 MiB defaults).
# -----------------------------------------------------------------------------
@functools.lru_cache(maxsize=None)
def _vmem_limit_bytes():
    cap = None
    try:
        cap = int(pltpu.get_tpu_info().vmem_capacity_bytes)
    except Exception:
        cap = None
    if not cap:
        cap = 64 * 1024 * 1024            # conservative fallback (v7x-sized VMEM)
    return min((cap * 3) // 4, 112 * 1024 * 1024)


def _mosaic_params(dimension_semantics):
    return pltpu.CompilerParams(dimension_semantics=dimension_semantics,
                                vmem_limit_bytes=_vmem_limit_bytes())


def _spatial_tile(s, per_col_bytes):
    """Largest 128-aligned tile dividing S whose double-buffered footprint
    stays within ~1/4 of the scoped VMEM budget."""
    budget = _vmem_limit_bytes() // 4
    for t in (4096, 2048, 1024, 512, 256, 128):
        if s % t == 0 and 2 * t * per_col_bytes <= budget:
            return t
    # TODO(synk): when S is not a multiple of 128, pad S with a masked tail
    # instead of falling back to one full-S (un-pipelined) block.
    return s


# -----------------------------------------------------------------------------
# Pointwise (1x1) ConvBNReLU6:  relu6(sum_j W_j @ X_j + bias) [+ residual]
# -----------------------------------------------------------------------------
def pointwise_conv_bn_relu6(xs, ws, bias, residual=None, out_dtype=jnp.bfloat16):
    """xs: list of (B, Ck, S) bf16; ws: list of (Cout, Ck) BN-scale-folded bf16;
    bias: (Cout,) f32.  Multiple (x, w) pairs implement a conv on a channel
    concat without materializing the concat; `residual` (B, Cout, S) is added
    after the ReLU6 clip (fused epilogue)."""
    B, _, S = xs[0].shape
    Cout = ws[0].shape[0]
    n_in = len(xs)
    has_res = residual is not None

    per_col = sum(int(x.shape[1]) * x.dtype.itemsize for x in xs)
    per_col += Cout * jnp.dtype(out_dtype).itemsize
    if has_res:
        per_col += int(residual.shape[1]) * residual.dtype.itemsize
    t = _spatial_tile(S, per_col)
    grid = (B, S // t)

    bias2 = bias.reshape(Cout, 1).astype(jnp.float32)

    def kernel(*refs):
        x_refs = refs[:n_in]
        w_refs = refs[n_in:2 * n_in]
        b_ref = refs[2 * n_in]
        r_ref = refs[2 * n_in + 1] if has_res else None
        o_ref = refs[-1]

        acc = jnp.dot(w_refs[0][...], x_refs[0][0].astype(jnp.bfloat16),
                      preferred_element_type=jnp.float32)
        for j in range(1, n_in):
            acc = acc + jnp.dot(w_refs[j][...], x_refs[j][0].astype(jnp.bfloat16),
                                preferred_element_type=jnp.float32)
        y = jnp.clip(acc + b_ref[...], 0.0, 6.0)
        if has_res:
            y = y + r_ref[0].astype(jnp.float32)
        o_ref[0] = y.astype(o_ref.dtype)

    in_specs = []
    args = []
    for xk in xs:
        Ck = xk.shape[1]
        in_specs.append(pl.BlockSpec((1, Ck, t), lambda b, i: (b, 0, i)))
        args.append(xk)
    for wk in ws:
        in_specs.append(pl.BlockSpec(wk.shape, lambda b, i: (0, 0)))
        args.append(wk.astype(jnp.bfloat16))
    in_specs.append(pl.BlockSpec((Cout, 1), lambda b, i: (0, 0)))
    args.append(bias2)
    if has_res:
        # NOTE: pipeline_mode=pl.Buffered(3) on the x / residual specs is a
        # further knob (review item); kept at the default depth of 2 here since
        # raising it needs on-hardware measurement to justify the extra VMEM.
        in_specs.append(pl.BlockSpec((1, Cout, t), lambda b, i: (b, 0, i)))
        args.append(residual)

    return pl.pallas_call(
        kernel,
        out_shape=jax.ShapeDtypeStruct((B, Cout, S), out_dtype),
        grid=grid,
        in_specs=in_specs,
        out_specs=pl.BlockSpec((1, Cout, t), lambda b, i: (b, 0, i)),
        compiler_params=_mosaic_params(("parallel", "parallel")),
    )(*args)


# -----------------------------------------------------------------------------
# 3x3 ConvBNReLU6: row-tiled halo windows, 9 taps fused into one matmul when
# Cin is small (no HBM im2col).
# -----------------------------------------------------------------------------
def _row_tile(H, W, Cin, Cout, in_bytes, out_bytes):
    budget = _vmem_limit_bytes() // 4

    def fits(th):
        in_b = Cin * ((th + 2) * W + 2) * in_bytes
        out_b = Cout * th * W * out_bytes
        stack_b = 9 * Cin * th * W * in_bytes      # in-kernel stacked-tap temp
        return 2 * (in_b + out_b) + stack_b <= budget

    cands = [d for d in range(H, 0, -1)
             if H % d == 0 and ((d * W) % 128 == 0 or d == H)]
    for d in cands:
        if fits(d):
            return d
    return cands[-1]


def _conv3x3_kernel(xw_ref, w_ref, b_ref, o_ref, *, Th, W, fuse_taps):
    # xw_ref: (1, 1, Cin, (Th+2)*W + 2)  halo window, row-flattened, bf16
    # w_ref : fused  -> (Cout, 9*Cin)  tap-major along K, BN-scale folded, bf16
    #         unfused-> (9, Cout, Cin)
    # b_ref : (Cout, 1) f32;  o_ref: (1, Cout, Th*W)
    x = xw_ref[0, 0]
    L = Th * W

    # Column index of each flattened output position; masks the wrap-around
    # reads at the left/right image edge for kw = 0 / 2 taps.
    col = jax.lax.broadcasted_iota(jnp.int32, (1, L), 1) % W
    left_ok = col > 0
    right_ok = col < (W - 1)

    taps = []
    for kh in range(3):
        for kw in range(3):
            start = kh * W + kw
            tap = x[:, start:start + L]
            if kw == 0:
                tap = jnp.where(left_ok, tap, 0.0)
            elif kw == 2:
                tap = jnp.where(right_ok, tap, 0.0)
            taps.append(tap)

    if fuse_taps:
        # One K = 9*Cin contraction: 1 MXU push/drain instead of 9 (Cin small).
        stacked = jnp.concatenate(taps, axis=0)                 # (9*Cin, L)
        acc = jnp.dot(w_ref[...], stacked, preferred_element_type=jnp.float32)
    else:
        Cout = b_ref.shape[0]
        acc = jnp.zeros((Cout, L), jnp.float32)
        for i, tap in enumerate(taps):
            acc = acc + jnp.dot(w_ref[i], tap, preferred_element_type=jnp.float32)

    y = jnp.clip(acc + b_ref[...], 0.0, 6.0)
    o_ref[0] = y.astype(o_ref.dtype)


def conv3x3_bn_relu6(x_nchw, p, out_dtype=jnp.bfloat16):
    """x: (B, Cin, H, W) bf16 -> (B, Cout, H*W) (channels-as-sublanes layout)."""
    B, Cin, H, W = x_nchw.shape
    Cout = p["w"].shape[0]

    # Fold the BN scale into the conv weights (host side) and pre-cast to bf16.
    w = (p["scale"][:, None, None, None] * p["w"]).astype(jnp.bfloat16)
    bias2 = p["bias"].reshape(Cout, 1).astype(jnp.float32)

    # Height-pad by 1 row each side, flatten row-major, pad the flat axis by 1
    # element each side: tap (kh, kw) is a contiguous length-L slice at offset
    # kh*W + kw (left/right column wrap masked in-kernel).
    xp = jnp.pad(x_nchw, ((0, 0), (0, 0), (1, 1), (0, 0)))
    xp = xp.reshape(B, Cin, (H + 2) * W)
    xp = jnp.pad(xp, ((0, 0), (0, 0), (1, 1)))

    Th = _row_tile(H, W, Cin, Cout, x_nchw.dtype.itemsize,
                   jnp.dtype(out_dtype).itemsize)
    nt = H // Th
    win = (Th + 2) * W + 2
    if nt == 1:
        xw = xp[:, None]                                        # (B, 1, Cin, win)
    else:
        # Overlapping (Th+2)-row halo windows materialized once in HBM so each
        # tile is a plain auto-pipelined BlockSpec; the duplicated halo is only
        # 2/Th of the input, vs. an un-tiled full-image block blowing VMEM.
        xw = jnp.stack([xp[:, :, t * Th * W: t * Th * W + win]
                        for t in range(nt)], axis=1)            # (B, nt, Cin, win)

    fuse_taps = Cin <= 32
    if fuse_taps:
        wk = jnp.transpose(w, (0, 2, 3, 1)).reshape(Cout, 9 * Cin)
    else:
        wk = jnp.transpose(w, (2, 3, 0, 1)).reshape(9, Cout, Cin)

    kern = functools.partial(_conv3x3_kernel, Th=Th, W=W, fuse_taps=fuse_taps)
    return pl.pallas_call(
        kern,
        out_shape=jax.ShapeDtypeStruct((B, Cout, H * W), out_dtype),
        grid=(B, nt),
        in_specs=[
            pl.BlockSpec((1, 1, Cin, win), lambda b, t: (b, t, 0, 0)),
            pl.BlockSpec(wk.shape, lambda b, t: (0,) * wk.ndim),
            pl.BlockSpec((Cout, 1), lambda b, t: (0, 0)),
        ],
        out_specs=pl.BlockSpec((1, Cout, Th * W), lambda b, t: (b, 0, t)),
        compiler_params=_mosaic_params(("parallel", "parallel")),
    )(xw, wk, bias2)


# -----------------------------------------------------------------------------
# Cross-attention (softmax over the QUERY axis, as nn.Softmax(dim=1)),
# Np-tiled with a context accumulator.
# -----------------------------------------------------------------------------
def _attention_kernel(q_ref, kv_ref, o_ref, acc_ref, *,
                      scale, Kc, np_real, np_total, tnp):
    # q_ref : (1, Kc, N)   bf16 query (channels-first)
    # kv_ref: (1, 2Kc, Tnp) bf16; rows [0:Kc) = key, [Kc:2Kc) = value
    # acc   : (N, Kc) f32 running context^T, accumulated over Np tiles
    t = pl.program_id(1)

    @pl.when(t == 0)
    def _():
        acc_ref[...] = jnp.zeros_like(acc_ref)

    q = q_ref[0]                                           # (Kc, N)
    kvb = kv_ref[0]                                        # (2Kc, Tnp)
    k = (kvb[:Kc, :].astype(jnp.float32) * scale).astype(jnp.bfloat16)
    v = kvb[Kc:, :]
    if np_real < np_total:
        # Zero the values at padded proxy columns so they contribute nothing
        # (the per-column softmax of padded key columns is then irrelevant).
        col = jax.lax.broadcasted_iota(jnp.int32, (1, tnp), 1) + t * tnp
        v = jnp.where(col < np_real, v, 0.0)

    # scores[n, np] = sum_kc q[kc, n] * k[kc, np]  -> (N, Tnp)
    s = jax.lax.dot_general(q, k, (((0,), (0,)), ((), ())),
                            preferred_element_type=jnp.float32)

    # Softmax over the query axis (PyTorch nn.Softmax(dim=1)); each key column
    # is normalized independently, so Np tiles are self-contained.  The query
    # axis is the sublane axis here (the cheap reduction orientation).
    m = jnp.max(s, axis=0, keepdims=True)
    e = jnp.exp(s - m)
    p = e * pl.reciprocal(jnp.sum(e, axis=0, keepdims=True), approx=True)

    # ctx^T[n, kc] += sum_np p[n, np] * v[kc, np].  p (the big (N, Tnp) matrix)
    # is consumed in its native contract-on-last-axis orientation, so it is
    # never transposed; only the tiny (Kc, Tnp) value tile and the final
    # (N, Kc) accumulator are.
    acc_ref[...] += jax.lax.dot_general(
        p.astype(jnp.bfloat16), v, (((1,), (1,)), ((), ())),
        preferred_element_type=jnp.float32)

    @pl.when(t == pl.num_programs(1) - 1)
    def _():
        o_ref[0] = acc_ref[...].T.astype(o_ref.dtype)      # (Kc, N)


def attention(query, kv, key_channels, np_real, out_dtype=jnp.bfloat16):
    """query: (B, Kc, N); kv: (B, 2*Kc, Np_pad) -> context (B, Kc, N)."""
    B, Kc, N = query.shape
    np_total = kv.shape[2]

    budget = _vmem_limit_bytes() // 4
    tnp = 128
    for cand in (2048, 1024, 512, 256, 128):
        if np_total % cand == 0 and (4 * Kc * cand * kv.dtype.itemsize
                                     + N * cand * 4) <= budget:
            tnp = cand
            break
    nt = np_total // tnp

    scale = float(key_channels) ** (-0.5)
    kern = functools.partial(_attention_kernel, scale=scale, Kc=Kc,
                             np_real=np_real, np_total=np_total, tnp=tnp)
    # TODO(synk): for B == 1 on v7x, additionally tile the query axis N with an
    # online softmax so both TensorCores get parallel work.
    return pl.pallas_call(
        kern,
        out_shape=jax.ShapeDtypeStruct((B, Kc, N), out_dtype),
        grid=(B, nt),
        in_specs=[
            pl.BlockSpec((1, Kc, N), lambda b, t: (b, 0, 0)),
            pl.BlockSpec((1, 2 * Kc, tnp), lambda b, t: (b, 0, t)),
        ],
        out_specs=pl.BlockSpec((1, Kc, N), lambda b, t: (b, 0, 0)),
        scratch_shapes=[pltpu.VMEM((N, Kc), jnp.float32)],
        compiler_params=_mosaic_params(("parallel", "arbitrary")),
    )(query, kv)


# -----------------------------------------------------------------------------
# CIAFM forward (Pallas path)
# -----------------------------------------------------------------------------
def ciafm_forward(x_nchw, proxy_nchw, params, key_channels):
    B, Cin, H, W = x_nchw.shape
    _, _, Hp, Wp = proxy_nchw.shape
    Kc = key_channels
    N = H * W
    Np = Hp * Wp
    act = jnp.bfloat16     # inter-kernel activation dtype (halves HBM traffic)

    def fold1x1(p):        # BN scale folded into the 1x1 weight, bf16
        return (p["scale"][:, None] * p["w"][:, :, 0, 0]).astype(jnp.bfloat16)

    x_bf = x_nchw.astype(act)
    x_flat = x_bf.reshape(B, Cin, N)

    # Pad the proxy's flattened spatial dim up to a multiple of 128 so the kv
    # conv and attention blocks are lane-dense; padded key/value columns are
    # masked inside the attention kernel (values -> 0, so no contribution).
    Np_pad = max(128, ((Np + 127) // 128) * 128)
    proxy_flat = proxy_nchw.astype(act).reshape(B, Cin, Np)
    if Np_pad != Np:
        proxy_flat = jnp.pad(proxy_flat, ((0, 0), (0, 0), (0, Np_pad - Np)))

    # f_query: 3x3 ConvBNReLU6 -> (B, Kc, N)
    query = conv3x3_bn_relu6(x_bf, params["f_query"], out_dtype=act)

    # f_key + f_value fused into one 1x1 matmul (Cout = 2*Kc): halves proxy reads.
    kv_w = jnp.concatenate([fold1x1(params["f_key"]),
                            fold1x1(params["f_value"])], axis=0)
    kv_bias = jnp.concatenate([params["f_key"]["bias"], params["f_value"]["bias"]])
    kv = pointwise_conv_bn_relu6([proxy_flat], [kv_w], kv_bias, out_dtype=act)

    context = attention(query, kv, Kc, Np, out_dtype=act)                 # (B, Kc, N)

    # f_up (1x1) with the residual `+ x` fused into the kernel epilogue.
    ctx_plus_x = pointwise_conv_bn_relu6([context], [fold1x1(params["f_up"])],
                                         params["f_up"]["bias"],
                                         residual=x_flat, out_dtype=act)  # (B, Cin, N)

    fused = conv3x3_bn_relu6(ctx_plus_x.reshape(B, Cin, H, W),
                             params["fuse"], out_dtype=act)
    space = conv3x3_bn_relu6(x_bf, params["conv3x3"], out_dtype=act)

    # conv1x1 on cat([fused, space], channels): split the weight along K and sum
    # two partial matmuls inside one kernel (no HBM concat tensor).
    w_cat = fold1x1(params["conv1x1"])                                    # (Cout, 2*Cin)
    out = pointwise_conv_bn_relu6([fused, space],
                                  [w_cat[:, :Cin], w_cat[:, Cin:]],
                                  params["conv1x1"]["bias"],
                                  out_dtype=jnp.float32)                  # (B, Cout, N)
    # Dropout2d(p=0.0) is identity in eval mode -> omitted.
    return out.reshape(B, -1, H, W)


# -----------------------------------------------------------------------------
# Pure-JAX f32 reference (NCHW, lax.conv) to validate semantics
# -----------------------------------------------------------------------------
def conv_bn_relu6_ref(x_nchw, p):
    k = p["w"].shape[-1]
    pad = (k - 1) // 2
    y = jax.lax.conv_general_dilated(
        x_nchw, p["w"], window_strides=(1, 1),
        padding=[(pad, pad), (pad, pad)],
        dimension_numbers=("NCHW", "OIHW", "NCHW"))
    y = y * p["scale"][None, :, None, None] + p["bias"][None, :, None, None]
    return jnp.clip(y, 0.0, 6.0)


def ciafm_ref(x, proxy, params, key_channels):
    B, Cin, H, W = x.shape
    Kc = key_channels
    query = conv_bn_relu6_ref(x, params["f_query"]).reshape(B, Kc, -1)
    query = jnp.transpose(query, (0, 2, 1))
    key = conv_bn_relu6_ref(proxy, params["f_key"]).reshape(B, Kc, -1)
    value = conv_bn_relu6_ref(proxy, params["f_value"]).reshape(B, Kc, -1)
    value = jnp.transpose(value, (0, 2, 1))
    min_map = jnp.matmul(query, key) * (Kc ** (-0.5))
    min_map = jax.nn.softmax(min_map, axis=1)
    context = jnp.matmul(min_map, value)
    context = jnp.transpose(context, (0, 2, 1)).reshape(B, Kc, H, W)
    context = conv_bn_relu6_ref(context, params["f_up"])
    context = conv_bn_relu6_ref(context + x, params["fuse"])
    space = conv_bn_relu6_ref(x, params["conv3x3"])
    out = jnp.concatenate([context, space], axis=1)
    out = conv_bn_relu6_ref(out, params["conv1x1"])
    return out


# -----------------------------------------------------------------------------
# Deterministic parameter construction (BN folded into scale/bias)
# -----------------------------------------------------------------------------
def make_conv_bn_params(key, cin, cout, ksize):
    kw_, kg, kb, km, kv = jax.random.split(key, 5)
    w = 0.1 * jax.random.normal(kw_, (cout, cin, ksize, ksize), jnp.float32)
    gamma = 1.0 + 0.1 * jax.random.normal(kg, (cout,), jnp.float32)
    beta = 0.1 * jax.random.normal(kb, (cout,), jnp.float32)
    mean = 0.05 * jax.random.normal(km, (cout,), jnp.float32)
    var = 0.9 + 0.2 * jax.random.uniform(kv, (cout,), jnp.float32)
    eps = 1e-5
    scale = gamma / jnp.sqrt(var + eps)
    bias = beta - mean * scale
    return {"w": w, "scale": scale, "bias": bias}


def make_ciafm_params(key, in_channels, key_channels, out_channels):
    keys = jax.random.split(key, 7)
    return {
        "f_query": make_conv_bn_params(keys[0], in_channels, key_channels, 3),
        "f_key": make_conv_bn_params(keys[1], in_channels, key_channels, 1),
        "f_value": make_conv_bn_params(keys[2], in_channels, key_channels, 1),
        "f_up": make_conv_bn_params(keys[3], key_channels, in_channels, 1),
        "fuse": make_conv_bn_params(keys[4], in_channels, in_channels, 3),
        "conv3x3": make_conv_bn_params(keys[5], in_channels, out_channels, 3),
        "conv1x1": make_conv_bn_params(keys[6], 2 * in_channels, out_channels, 1),
    }


# -----------------------------------------------------------------------------
if __name__ == "__main__":
    # Module wiring: cat([context(Cin), space(Cout)]) feeds a 2*Cin conv, so
    # out_channels must equal in_channels (as in the original module's usage).
    in_channels = 8
    key_channels = 8
    out_channels = 8

    B, H, W = 2, 16, 16     # H*W = 256 -> lane-dense output blocks
    Hp, Wp = 8, 8           # Np = 64 -> padded to 128 inside ciafm_forward

    root = jax.random.PRNGKey(0)
    kx, kp, kparams = jax.random.split(root, 3)
    x = jax.random.normal(kx, (B, in_channels, H, W), jnp.float32)
    proxy = jax.random.normal(kp, (B, in_channels, Hp, Wp), jnp.float32)
    params = make_ciafm_params(kparams, in_channels, key_channels, out_channels)

    fwd = jax.jit(ciafm_forward, static_argnums=(3,))
    out = jax.block_until_ready(fwd(x, proxy, params, key_channels))

    ref = jax.block_until_ready(ciafm_ref(x, proxy, params, key_channels))

    assert out.shape == (B, out_channels, H, W), out.shape
    max_err = float(jnp.max(jnp.abs(out - ref)))
    rel_err = float(jnp.linalg.norm((out - ref).ravel())
                    / (jnp.linalg.norm(ref.ravel()) + 1e-12))
    # Tolerances account for bf16 MXU operands, bf16-stored intermediate
    # activations, and the approximate softmax reciprocal, vs. the pure-f32
    # reference (f32 accumulation is kept inside every kernel).
    assert max_err < 2.5e-1 and rel_err < 7e-2, (max_err, rel_err)

    print("KERNEL_OK")
</pallas_src>

<mosaic_0001>
module attributes {stable_mosaic.version = 11 : i64} {
  func.func @_conv3x3_kernel(%arg0: i32, %arg1: i32, %arg2: memref<1x1x8x290xbf16, #tpu.memory_space<vmem>>, %arg3: memref<8x72xbf16, #tpu.memory_space<vmem>>, %arg4: memref<8x1xf32, #tpu.memory_space<vmem>>, %arg5: memref<1x8x256xbf16, #tpu.memory_space<vmem>>) attributes {dimension_semantics = [#tpu.dimension_semantics<parallel>, #tpu.dimension_semantics<parallel>], iteration_bounds = array<i64: 2, 1>, scalar_prefetch = 0 : i64, scratch_operands = 0 : i64, tpu.core_type = #tpu.core_type<tc>, window_params = [{transform_indices = @transform_0, window_bounds = array<i64: 1, 1, 8, 290>}, {pipeline_mode = #tpu.pipeline_mode<synchronous>, transform_indices = @transform_1, window_bounds = array<i64: 8, 72>}, {pipeline_mode = #tpu.pipeline_mode<synchronous>, transform_indices = @transform_2, window_bounds = array<i64: 8, 1>}, {transform_indices = @transform_3, window_bounds = array<i64: 1, 8, 256>}]} {
    %c0 = arith.constant 0 : index
    %c0_0 = arith.constant 0 : index
    %c0_1 = arith.constant 0 : index
    %c0_2 = arith.constant 0 : index
    %0 = vector.load %arg2[%c0, %c0_0, %c0_1, %c0_2] : memref<1x1x8x290xbf16, #tpu.memory_space<vmem>>, vector<1x1x8x290xbf16>
    %1 = vector.shape_cast %0 : vector<1x1x8x290xbf16> to vector<8x290xbf16>
    %2 = tpu.iota {dimensions = array<i32: 1>} : vector<1x256xi32>
    %c16_i32 = arith.constant 16 : i32
    %c0_i32 = arith.constant 0 : i32
    %3 = arith.cmpi eq, %c16_i32, %c0_i32 : i32
    %c1_i32 = arith.constant 1 : i32
    %4 = arith.select %3, %c1_i32, %c16_i32 : i32
    %5 = vector.broadcast %4 : i32 to vector<1x256xi32>
    %6 = arith.remsi %2, %5 : vector<1x256xi32>
    %c0_i32_3 = arith.constant 0 : i32
    %7 = vector.broadcast %c0_i32_3 : i32 to vector<1x256xi32>
    %8 = arith.cmpi ne, %6, %7 : vector<1x256xi32>
    %c0_i32_4 = arith.constant 0 : i32
    %9 = vector.broadcast %c0_i32_4 : i32 to vector<1x256xi32>
    %10 = arith.cmpi slt, %6, %9 : vector<1x256xi32>
    %c0_i32_5 = arith.constant 0 : i32
    %11 = arith.cmpi slt, %4, %c0_i32_5 : i32
    %12 = vector.broadcast %11 : i1 to vector<1x256xi1>
    %13 = vector.broadcast %12 : vector<1x256xi1> to vector<1x256xi1>
    %14 = arith.xori %10, %13 : vector<1x256xi1>
    %15 = arith.andi %14, %8 : vector<1x256xi1>
    %16 = vector.broadcast %4 : i32 to vector<1x256xi32>
    %17 = arith.addi %6, %16 : vector<1x256xi32>
    %18 = arith.select %15, %17, %6 : vector<1x256xi1>, vector<1x256xi32>
    %c0_i32_6 = arith.constant 0 : i32
    %19 = vector.broadcast %c0_i32_6 : i32 to vector<1x256xi32>
    %20 = arith.cmpi sgt, %18, %19 : vector<1x256xi32>
    %c15_i32 = arith.constant 15 : i32
    %21 = vector.broadcast %c15_i32 : i32 to vector<1x256xi32>
    %22 = arith.cmpi slt, %18, %21 : vector<1x256xi32>
    %23 = vector.extract_strided_slice %1 {offsets = [0, 0], sizes = [8, 256], strides = [1, 1]} : vector<8x290xbf16> to vector<8x256xbf16>
    %cst = arith.constant 0.000000e+00 : f32
    %24 = arith.truncf %cst : f32 to bf16
    %25 = vector.shape_cast %20 : vector<1x256xi1> to vector<1x256xi1>
    %26 = vector.broadcast %25 : vector<1x256xi1> to vector<8x256xi1>
    %27 = vector.broadcast %24 : bf16 to vector<8x256xbf16>
    %28 = arith.select %26, %23, %27 : vector<8x256xi1>, vector<8x256xbf16>
    %29 = vector.extract_strided_slice %1 {offsets = [0, 1], sizes = [8, 256], strides = [1, 1]} : vector<8x290xbf16> to vector<8x256xbf16>
    %30 = vector.extract_strided_slice %1 {offsets = [0, 2], sizes = [8, 256], strides = [1, 1]} : vector<8x290xbf16> to vector<8x256xbf16>
    %cst_7 = arith.constant 0.000000e+00 : f32
    %31 = arith.truncf %cst_7 : f32 to bf16
    %32 = vector.shape_cast %22 : vector<1x256xi1> to vector<1x256xi1>
    %33 = vector.broadcast %32 : vector<1x256xi1> to vector<8x256xi1>
    %34 = vector.broadcast %31 : bf16 to vector<8x256xbf16>
    %35 = arith.select %33, %30, %34 : vector<8x256xi1>, vector<8x256xbf16>
    %36 = vector.extract_strided_slice %1 {offsets = [0, 16], sizes = [8, 256], strides = [1, 1]} : vector<8x290xbf16> to vector<8x256xbf16>
    %cst_8 = arith.constant 0.000000e+00 : f32
    %37 = arith.truncf %cst_8 : f32 to bf16
    %38 = vector.shape_cast %20 : vector<1x256xi1> to vector<1x256xi1>
    %39 = vector.broadcast %38 : vector<1x256xi1> to vector<8x256xi1>
    %40 = vector.broadcast %37 : bf16 to vector<8x256xbf16>
    %41 = arith.select %39, %36, %40 : vector<8x256xi1>, vector<8x256xbf16>
    %42 = vector.extract_strided_slice %1 {offsets = [0, 17], sizes = [8, 256], strides = [1, 1]} : vector<8x290xbf16> to vector<8x256xbf16>
    %43 = vector.extract_strided_slice %1 {offsets = [0, 18], sizes = [8, 256], strides = [1, 1]} : vector<8x290xbf16> to vector<8x256xbf16>
    %cst_9 = arith.constant 0.000000e+00 : f32
    %44 = arith.truncf %cst_9 : f32 to bf16
    %45 = vector.shape_cast %22 : vector<1x256xi1> to vector<1x256xi1>
    %46 = vector.broadcast %45 : vector<1x256xi1> to vector<8x256xi1>
    %47 = vector.broadcast %44 : bf16 to vector<8x256xbf16>
    %48 = arith.select %46, %43, %47 : vector<8x256xi1>, vector<8x256xbf16>
    %49 = vector.extract_strided_slice %1 {offsets = [0, 32], sizes = [8, 256], strides = [1, 1]} : vector<8x290xbf16> to vector<8x256xbf16>
    %cst_10 = arith.constant 0.000000e+00 : f32
    %50 = arith.truncf %cst_10 : f32 to bf16
    %51 = vector.shape_cast %20 : vector<1x256xi1> to vector<1x256xi1>
    %52 = vector.broadcast %51 : vector<1x256xi1> to vector<8x256xi1>
    %53 = vector.broadcast %50 : bf16 to vector<8x256xbf16>
    %54 = arith.select %52, %49, %53 : vector<8x256xi1>, vector<8x256xbf16>
    %55 = vector.extract_strided_slice %1 {offsets = [0, 33], sizes = [8, 256], strides = [1, 1]} : vector<8x290xbf16> to vector<8x256xbf16>
    %56 = vector.extract_strided_slice %1 {offsets = [0, 34], sizes = [8, 256], strides = [1, 1]} : vector<8x290xbf16> to vector<8x256xbf16>
    %cst_11 = arith.constant 0.000000e+00 : f32
    %57 = arith.truncf %cst_11 : f32 to bf16
    %58 = vector.shape_cast %22 : vector<1x256xi1> to vector<1x256xi1>
    %59 = vector.broadcast %58 : vector<1x256xi1> to vector<8x256xi1>
    %60 = vector.broadcast %57 : bf16 to vector<8x256xbf16>
    %61 = arith.select %59, %56, %60 : vector<8x256xi1>, vector<8x256xbf16>
    %62 = tpu.concatenate %28, %29, %35, %41, %42, %48, %54, %55, %61 in 0 : vector<8x256xbf16>, vector<8x256xbf16>, vector<8x256xbf16>, vector<8x256xbf16>, vector<8x256xbf16>, vector<8x256xbf16>, vector<8x256xbf16>, vector<8x256xbf16>, vector<8x256xbf16> -> vector<72x256xbf16>
    %c0_12 = arith.constant 0 : index
    %c0_13 = arith.constant 0 : index
    %63 = vector.load %arg3[%c0_12, %c0_13] : memref<8x72xbf16, #tpu.memory_space<vmem>>, vector<8x72xbf16>
    %cst_14 = arith.constant dense<0.000000e+00> : vector<8x256xf32>
    %64 = tpu.matmul %63, %62, %cst_14 {dimension_numbers = #tpu.dot_dimension_numbers<[1], [0], [0], [1], [0, 0, 1, 1], [], []>} : vector<8x72xbf16>, vector<72x256xbf16>, vector<8x256xf32> -> vector<8x256xf32>
    %c0_15 = arith.constant 0 : index
    %c0_16 = arith.constant 0 : index
    %65 = vector.load %arg4[%c0_15, %c0_16] : memref<8x1xf32, #tpu.memory_space<vmem>>, vector<8x1xf32>
    %66 = vector.broadcast %65 : vector<8x1xf32> to vector<8x256xf32>
    %67 = arith.addf %64, %66 : vector<8x256xf32>
    %cst_17 = arith.constant 0.000000e+00 : f32
    %cst_18 = arith.constant 6.000000e+00 : f32
    %68 = vector.broadcast %cst_17 : f32 to vector<8x256xf32>
    %69 = arith.maximumf %68, %67 : vector<8x256xf32>
    %70 = vector.broadcast %cst_18 : f32 to vector<8x256xf32>
    %71 = arith.minimumf %70, %69 : vector<8x256xf32>
    %72 = arith.truncf %71 : vector<8x256xf32> to vector<8x256xbf16>
    %c0_19 = arith.constant 0 : index
    %c0_20 = arith.constant 0 : index
    %c0_21 = arith.constant 0 : index
    %73 = vector.load %arg5[%c0_19, %c0_20, %c0_21] : memref<1x8x256xbf16, #tpu.memory_space<vmem>>, vector<1x8x256xbf16>
    %74 = vector.shape_cast %73 : vector<1x8x256xbf16> to vector<8x256xbf16>
    %75 = vector.shape_cast %72 : vector<8x256xbf16> to vector<1x8x256xbf16>
    tpu.vector_store %arg5[%c0_19, %c0_20, %c0_21], %75 {strides = array<i32>} : memref<1x8x256xbf16, #tpu.memory_space<vmem>>, vector<1x8x256xbf16>,
    return
  }
  func.func @transform_0(%arg0: i32, %arg1: i32) -> (i32, i32, i32, i32) {
    %c0_i32 = arith.constant 0 : i32
    %c0_i32_0 = arith.constant 0 : i32
    %c0_i32_1 = arith.constant 0 : i32
    return %arg0, %arg1, %c0_i32, %c0_i32_0 : i32, i32, i32, i32
  }
  func.func @transform_1(%arg0: i32, %arg1: i32) -> (i32, i32) {
    %c0_i32 = arith.constant 0 : i32
    %c0_i32_0 = arith.constant 0 : i32
    %c0_i32_1 = arith.constant 0 : i32
    return %c0_i32, %c0_i32_0 : i32, i32
  }
  func.func @transform_2(%arg0: i32, %arg1: i32) -> (i32, i32) {
    %c0_i32 = arith.constant 0 : i32
    %c0_i32_0 = arith.constant 0 : i32
    %c0_i32_1 = arith.constant 0 : i32
    return %c0_i32, %c0_i32_0 : i32, i32
  }
  func.func @transform_3(%arg0: i32, %arg1: i32) -> (i32, i32, i32) {
    %c0_i32 = arith.constant 0 : i32
    %c0_i32_0 = arith.constant 0 : i32
    return %arg0, %c0_i32, %arg1 : i32, i32, i32
  }
}

module attributes {stable_mosaic.version = 11 : i64} {
  func.func @_attention_kernel(%arg0: i32, %arg1: i32, %arg2: memref<1x8x256xbf16, #tpu.memory_space<vmem>>, %arg3: memref<1x16x128xbf16, #tpu.memory_space<vmem>>, %arg4: memref<1x8x256xbf16, #tpu.memory_space<vmem>>, %arg5: memref<256x8xf32, #tpu.memory_space<vmem>>) attributes {dimension_semantics = [#tpu.dimension_semantics<parallel>, #tpu.dimension_semantics<arbitrary>], iteration_bounds = array<i64: 2, 1>, scalar_prefetch = 0 : i64, scratch_operands = 1 : i64, tpu.core_type = #tpu.core_type<tc>, window_params = [{transform_indices = @transform_0, window_bounds = array<i64: 1, 8, 256>}, {transform_indices = @transform_1, window_bounds = array<i64: 1, 16, 128>}, {transform_indices = @transform_2, window_bounds = array<i64: 1, 8, 256>}]} {
    %c0_i32 = arith.constant 0 : i32
    %0 = arith.cmpi eq, %arg1, %c0_i32 : i32
    %1 = arith.extui %0 : i1 to i32
    %c0_i32_0 = arith.constant 0 : i32
    %2 = arith.cmpi ne, %1, %c0_i32_0 : i32
    scf.if %2 {
      %cst_17 = arith.constant 0.000000e+00 : f32
      %43 = vector.broadcast %cst_17 : f32 to vector<256x8xf32>
      %c0_18 = arith.constant 0 : index
      %c0_19 = arith.constant 0 : index
      %44 = vector.load %arg5[%c0_18, %c0_19] : memref<256x8xf32, #tpu.memory_space<vmem>>, vector<256x8xf32>
      tpu.vector_store %arg5[%c0_18, %c0_19], %43 {strides = array<i32>} : memref<256x8xf32, #tpu.memory_space<vmem>>, vector<256x8xf32>,
    } else {
    }
    %c0 = arith.constant 0 : index
    %c0_1 = arith.constant 0 : index
    %c0_2 = arith.constant 0 : index
    %3 = vector.load %arg2[%c0, %c0_1, %c0_2] : memref<1x8x256xbf16, #tpu.memory_space<vmem>>, vector<1x8x256xbf16>
    %4 = vector.shape_cast %3 : vector<1x8x256xbf16> to vector<8x256xbf16>
    %c0_3 = arith.constant 0 : index
    %c0_4 = arith.constant 0 : index
    %c0_5 = arith.constant 0 : index
    %5 = vector.load %arg3[%c0_3, %c0_4, %c0_5] : memref<1x16x128xbf16, #tpu.memory_space<vmem>>, vector<1x16x128xbf16>
    %6 = vector.shape_cast %5 : vector<1x16x128xbf16> to vector<16x128xbf16>
    %7 = vector.extract_strided_slice %6 {offsets = [0, 0], sizes = [8, 128], strides = [1, 1]} : vector<16x128xbf16> to vector<8x128xbf16>
    %8 = arith.extf %7 : vector<8x128xbf16> to vector<8x128xf32>
    %cst = arith.constant 0.353553385 : f32
    %9 = vector.broadcast %cst : f32 to vector<8x128xf32>
    %10 = arith.mulf %8, %9 : vector<8x128xf32>
    %11 = arith.truncf %10 : vector<8x128xf32> to vector<8x128xbf16>
    %12 = vector.extract_strided_slice %6 {offsets = [8, 0], sizes = [8, 128], strides = [1, 1]} : vector<16x128xbf16> to vector<8x128xbf16>
    %13 = tpu.iota {dimensions = array<i32: 1>} : vector<1x128xi32>
    %c128_i32 = arith.constant 128 : i32
    %14 = arith.muli %arg1, %c128_i32 : i32
    %15 = vector.broadcast %14 : i32 to vector<1x128xi32>
    %16 = arith.addi %13, %15 : vector<1x128xi32>
    %c64_i32 = arith.constant 64 : i32
    %17 = vector.broadcast %c64_i32 : i32 to vector<1x128xi32>
    %18 = arith.cmpi slt, %16, %17 : vector<1x128xi32>
    %cst_6 = arith.constant 0.000000e+00 : f32
    %19 = arith.truncf %cst_6 : f32 to bf16
    %20 = vector.shape_cast %18 : vector<1x128xi1> to vector<1x128xi1>
    %21 = vector.broadcast %20 : vector<1x128xi1> to vector<8x128xi1>
    %22 = vector.broadcast %19 : bf16 to vector<8x128xbf16>
    %23 = arith.select %21, %12, %22 : vector<8x128xi1>, vector<8x128xbf16>
    %cst_7 = arith.constant dense<0.000000e+00> : vector<256x128xf32>
    %24 = tpu.matmul %4, %11, %cst_7 {dimension_numbers = #tpu.dot_dimension_numbers<[0], [0], [1], [1], [0, 1, 1, 1], [], []>} : vector<8x256xbf16>, vector<8x128xbf16>, vector<256x128xf32> -> vector<256x128xf32>
    %cst_8 = arith.constant dense<0xFF800000> : vector<128xf32>
    %25 = vector.multi_reduction <maximumf>, %24, %cst_8 [0] : vector<256x128xf32> to vector<128xf32>
    %26 = vector.shape_cast %25 : vector<128xf32> to vector<1x128xf32>
    %27 = vector.broadcast %26 : vector<1x128xf32> to vector<256x128xf32>
    %28 = arith.subf %24, %27 : vector<256x128xf32>
    %29 = math.exp %28 : vector<256x128xf32>
    %cst_9 = arith.constant dense<0.000000e+00> : vector<128xf32>
    %30 = vector.multi_reduction <add>, %29, %cst_9 [0] : vector<256x128xf32> to vector<128xf32>
    %31 = vector.shape_cast %30 : vector<128xf32> to vector<1x128xf32>
    %32 = tpu.reciprocal %31 {approx = true} : vector<1x128xf32> -> vector<1x128xf32>
    %33 = vector.broadcast %32 : vector<1x128xf32> to vector<256x128xf32>
    %34 = arith.mulf %29, %33 : vector<256x128xf32>
    %c0_10 = arith.constant 0 : index
    %c0_11 = arith.constant 0 : index
    %35 = vector.load %arg5[%c0_10, %c0_11] : memref<256x8xf32, #tpu.memory_space<vmem>>, vector<256x8xf32>
    %36 = arith.truncf %34 : vector<256x128xf32> to vector<256x128xbf16>
    %cst_12 = arith.constant dense<0.000000e+00> : vector<256x8xf32>
    %37 = tpu.matmul %36, %23, %cst_12 {dimension_numbers = #tpu.dot_dimension_numbers<[1], [1], [0], [0], [0, 0, 1, 0], [], []>} : vector<256x128xbf16>, vector<8x128xbf16>, vector<256x8xf32> -> vector<256x8xf32>
    %38 = arith.addf %35, %37 : vector<256x8xf32>
    %c0_13 = arith.constant 0 : index
    %c0_14 = arith.constant 0 : index
    %39 = vector.load %arg5[%c0_13, %c0_14] : memref<256x8xf32, #tpu.memory_space<vmem>>, vector<256x8xf32>
    tpu.vector_store %arg5[%c0_13, %c0_14], %38 {strides = array<i32>} : memref<256x8xf32, #tpu.memory_space<vmem>>, vector<256x8xf32>,
    %c0_i32_15 = arith.constant 0 : i32
    %40 = arith.cmpi eq, %arg1, %c0_i32_15 : i32
    %41 = arith.extui %40 : i1 to i32
    %c0_i32_16 = arith.constant 0 : i32
    %42 = arith.cmpi ne, %41, %c0_i32_16 : i32
    scf.if %42 {
      %c0_17 = arith.constant 0 : index
      %c0_18 = arith.constant 0 : index
      %43 = vector.load %arg5[%c0_17, %c0_18] : memref<256x8xf32, #tpu.memory_space<vmem>>, vector<256x8xf32>
      %44 = tpu.transpose %43, [1, 0] : vector<256x8xf32> -> vector<8x256xf32>
      %45 = arith.truncf %44 : vector<8x256xf32> to vector<8x256xbf16>
      %c0_19 = arith.constant 0 : index
      %c0_20 = arith.constant 0 : index
      %c0_21 = arith.constant 0 : index
      %46 = vector.load %arg4[%c0_19, %c0_20, %c0_21] : memref<1x8x256xbf16, #tpu.memory_space<vmem>>, vector<1x8x256xbf16>
      %47 = vector.shape_cast %46 : vector<1x8x256xbf16> to vector<8x256xbf16>
      %48 = vector.shape_cast %45 : vector<8x256xbf16> to vector<1x8x256xbf16>
      tpu.vector_store %arg4[%c0_19, %c0_20, %c0_21], %48 {strides = array<i32>} : memref<1x8x256xbf16, #tpu.memory_space<vmem>>, vector<1x8x256xbf16>,
    } else {
    }
    return
  }
  func.func @transform_0(%arg0: i32, %arg1: i32) -> (i32, i32, i32) {
    %c0_i32 = arith.constant 0 : i32
    %c0_i32_0 = arith.constant 0 : i32
    %c0_i32_1 = arith.constant 0 : i32
    return %arg0, %c0_i32, %c0_i32_0 : i32, i32, i32
  }
  func.func @transform_1(%arg0: i32, %arg1: i32) -> (i32, i32, i32) {
    %c0_i32 = arith.constant 0 : i32
    %c0_i32_0 = arith.constant 0 : i32
    return %arg0, %c0_i32, %arg1 : i32, i32, i32
  }
  func.func @transform_2(%arg0: i32, %arg1: i32) -> (i32, i32, i32) {
    %c0_i32 = arith.constant 0 : i32
    %c0_i32_0 = arith.constant 0 : i32
    %c0_i32_1 = arith.constant 0 : i32
    return %arg0, %c0_i32, %c0_i32_0 : i32, i32, i32
  }
}

module attributes {stable_mosaic.version = 11 : i64} {
  func.func @kernel(%arg0: i32, %arg1: i32, %arg2: memref<1x8x128xbf16, #tpu.memory_space<vmem>>, %arg3: memref<16x8xbf16, #tpu.memory_space<vmem>>, %arg4: memref<16x1xf32, #tpu.memory_space<vmem>>, %arg5: memref<1x16x128xbf16, #tpu.memory_space<vmem>>) attributes {dimension_semantics = [#tpu.dimension_semantics<parallel>, #tpu.dimension_semantics<parallel>], iteration_bounds = array<i64: 2, 1>, scalar_prefetch = 0 : i64, scratch_operands = 0 : i64, tpu.core_type = #tpu.core_type<tc>, window_params = [{transform_indices = @transform_0, window_bounds = array<i64: 1, 8, 128>}, {pipeline_mode = #tpu.pipeline_mode<synchronous>, transform_indices = @transform_1, window_bounds = array<i64: 16, 8>}, {pipeline_mode = #tpu.pipeline_mode<synchronous>, transform_indices = @transform_2, window_bounds = array<i64: 16, 1>}, {transform_indices = @transform_3, window_bounds = array<i64: 1, 16, 128>}]} {
    %c0 = arith.constant 0 : index
    %c0_0 = arith.constant 0 : index
    %0 = vector.load %arg3[%c0, %c0_0] : memref<16x8xbf16, #tpu.memory_space<vmem>>, vector<16x8xbf16>
    %c0_1 = arith.constant 0 : index
    %c0_2 = arith.constant 0 : index
    %c0_3 = arith.constant 0 : index
    %1 = vector.load %arg2[%c0_1, %c0_2, %c0_3] : memref<1x8x128xbf16, #tpu.memory_space<vmem>>, vector<1x8x128xbf16>
    %2 = vector.shape_cast %1 : vector<1x8x128xbf16> to vector<8x128xbf16>
    %cst = arith.constant dense<0.000000e+00> : vector<16x128xf32>
    %3 = tpu.matmul %0, %2, %cst {dimension_numbers = #tpu.dot_dimension_numbers<[1], [0], [0], [1], [0, 0, 1, 1], [], []>} : vector<16x8xbf16>, vector<8x128xbf16>, vector<16x128xf32> -> vector<16x128xf32>
    %c0_4 = arith.constant 0 : index
    %c0_5 = arith.constant 0 : index
    %4 = vector.load %arg4[%c0_4, %c0_5] : memref<16x1xf32, #tpu.memory_space<vmem>>, vector<16x1xf32>
    %5 = vector.broadcast %4 : vector<16x1xf32> to vector<16x128xf32>
    %6 = arith.addf %3, %5 : vector<16x128xf32>
    %cst_6 = arith.constant 0.000000e+00 : f32
    %cst_7 = arith.constant 6.000000e+00 : f32
    %7 = vector.broadcast %cst_6 : f32 to vector<16x128xf32>
    %8 = arith.maximumf %7, %6 : vector<16x128xf32>
    %9 = vector.broadcast %cst_7 : f32 to vector<16x128xf32>
    %10 = arith.minimumf %9, %8 : vector<16x128xf32>
    %11 = arith.truncf %10 : vector<16x128xf32> to vector<16x128xbf16>
    %c0_8 = arith.constant 0 : index
    %c0_9 = arith.constant 0 : index
    %c0_10 = arith.constant 0 : index
    %12 = vector.load %arg5[%c0_8, %c0_9, %c0_10] : memref<1x16x128xbf16, #tpu.memory_space<vmem>>, vector<1x16x128xbf16>
    %13 = vector.shape_cast %12 : vector<1x16x128xbf16> to vector<16x128xbf16>
    %14 = vector.shape_cast %11 : vector<16x128xbf16> to vector<1x16x128xbf16>
    tpu.vector_store %arg5[%c0_8, %c0_9, %c0_10], %14 {strides = array<i32>} : memref<1x16x128xbf16, #tpu.memory_space<vmem>>, vector<1x16x128xbf16>,
    return
  }
  func.func @transform_0(%arg0: i32, %arg1: i32) -> (i32, i32, i32) {
    %c0_i32 = arith.constant 0 : i32
    %c0_i32_0 = arith.constant 0 : i32
    return %arg0, %c0_i32, %arg1 : i32, i32, i32
  }
  func.func @transform_1(%arg0: i32, %arg1: i32) -> (i32, i32) {
    %c0_i32 = arith.constant 0 : i32
    %c0_i32_0 = arith.constant 0 : i32
    %c0_i32_1 = arith.constant 0 : i32
    return %c0_i32, %c0_i32_0 : i32, i32
  }
  func.func @transform_2(%arg0: i32, %arg1: i32) -> (i32, i32) {
    %c0_i32 = arith.constant 0 : i32
    %c0_i32_0 = arith.constant 0 : i32
    %c0_i32_1 = arith.constant 0 : i32
    return %c0_i32, %c0_i32_0 : i32, i32
  }
  func.func @transform_3(%arg0: i32, %arg1: i32) -> (i32, i32, i32) {
    %c0_i32 = arith.constant 0 : i32
    %c0_i32_0 = arith.constant 0 : i32
    return %arg0, %c0_i32, %arg1 : i32, i32, i32
  }
}

module attributes {stable_mosaic.version = 11 : i64} {
  func.func @kernel(%arg0: i32, %arg1: i32, %arg2: memref<1x8x256xbf16, #tpu.memory_space<vmem>>, %arg3: memref<8x8xbf16, #tpu.memory_space<vmem>>, %arg4: memref<8x1xf32, #tpu.memory_space<vmem>>, %arg5: memref<1x8x256xbf16, #tpu.memory_space<vmem>>, %arg6: memref<1x8x256xbf16, #tpu.memory_space<vmem>>) attributes {dimension_semantics = [#tpu.dimension_semantics<parallel>, #tpu.dimension_semantics<parallel>], iteration_bounds = array<i64: 2, 1>, scalar_prefetch = 0 : i64, scratch_operands = 0 : i64, tpu.core_type = #tpu.core_type<tc>, window_params = [{transform_indices = @transform_0, window_bounds = array<i64: 1, 8, 256>}, {pipeline_mode = #tpu.pipeline_mode<synchronous>, transform_indices = @transform_1, window_bounds = array<i64: 8, 8>}, {pipeline_mode = #tpu.pipeline_mode<synchronous>, transform_indices = @transform_2, window_bounds = array<i64: 8, 1>}, {transform_indices = @transform_3, window_bounds = array<i64: 1, 8, 256>}, {transform_indices = @transform_4, window_bounds = array<i64: 1, 8, 256>}]} {
    %c0 = arith.constant 0 : index
    %c0_0 = arith.constant 0 : index
    %0 = vector.load %arg3[%c0, %c0_0] : memref<8x8xbf16, #tpu.memory_space<vmem>>, vector<8x8xbf16>
    %c0_1 = arith.constant 0 : index
    %c0_2 = arith.constant 0 : index
    %c0_3 = arith.constant 0 : index
    %1 = vector.load %arg2[%c0_1, %c0_2, %c0_3] : memref<1x8x256xbf16, #tpu.memory_space<vmem>>, vector<1x8x256xbf16>
    %2 = vector.shape_cast %1 : vector<1x8x256xbf16> to vector<8x256xbf16>
    %cst = arith.constant dense<0.000000e+00> : vector<8x256xf32>
    %3 = tpu.matmul %0, %2, %cst {dimension_numbers = #tpu.dot_dimension_numbers<[1], [0], [0], [1], [0, 0, 1, 1], [], []>} : vector<8x8xbf16>, vector<8x256xbf16>, vector<8x256xf32> -> vector<8x256xf32>
    %c0_4 = arith.constant 0 : index
    %c0_5 = arith.constant 0 : index
    %4 = vector.load %arg4[%c0_4, %c0_5] : memref<8x1xf32, #tpu.memory_space<vmem>>, vector<8x1xf32>
    %5 = vector.broadcast %4 : vector<8x1xf32> to vector<8x256xf32>
    %6 = arith.addf %3, %5 : vector<8x256xf32>
    %cst_6 = arith.constant 0.000000e+00 : f32
    %cst_7 = arith.constant 6.000000e+00 : f32
    %7 = vector.broadcast %cst_6 : f32 to vector<8x256xf32>
    %8 = arith.maximumf %7, %6 : vector<8x256xf32>
    %9 = vector.broadcast %cst_7 : f32 to vector<8x256xf32>
    %10 = arith.minimumf %9, %8 : vector<8x256xf32>
    %c0_8 = arith.constant 0 : index
    %c0_9 = arith.constant 0 : index
    %c0_10 = arith.constant 0 : index
    %11 = vector.load %arg5[%c0_8, %c0_9, %c0_10] : memref<1x8x256xbf16, #tpu.memory_space<vmem>>, vector<1x8x256xbf16>
    %12 = vector.shape_cast %11 : vector<1x8x256xbf16> to vector<8x256xbf16>
    %13 = arith.extf %12 : vector<8x256xbf16> to vector<8x256xf32>
    %14 = arith.addf %10, %13 : vector<8x256xf32>
    %15 = arith.truncf %14 : vector<8x256xf32> to vector<8x256xbf16>
    %c0_11 = arith.constant 0 : index
    %c0_12 = arith.constant 0 : index
    %c0_13 = arith.constant 0 : index
    %16 = vector.load %arg6[%c0_11, %c0_12, %c0_13] : memref<1x8x256xbf16, #tpu.memory_space<vmem>>, vector<1x8x256xbf16>
    %17 = vector.shape_cast %16 : vector<1x8x256xbf16> to vector<8x256xbf16>
    %18 = vector.shape_cast %15 : vector<8x256xbf16> to vector<1x8x256xbf16>
    tpu.vector_store %arg6[%c0_11, %c0_12, %c0_13], %18 {strides = array<i32>} : memref<1x8x256xbf16, #tpu.memory_space<vmem>>, vector<1x8x256xbf16>,
    return
  }
  func.func @transform_0(%arg0: i32, %arg1: i32) -> (i32, i32, i32) {
    %c0_i32 = arith.constant 0 : i32
    %c0_i32_0 = arith.constant 0 : i32
    return %arg0, %c0_i32, %arg1 : i32, i32, i32
  }
  func.func @transform_1(%arg0: i32, %arg1: i32) -> (i32, i32) {
    %c0_i32 = arith.constant 0 : i32
    %c0_i32_0 = arith.constant 0 : i32
    %c0_i32_1 = arith.constant 0 : i32
    return %c0_i32, %c0_i32_0 : i32, i32
  }
  func.func @transform_2(%arg0: i32, %arg1: i32) -> (i32, i32) {
    %c0_i32 = arith.constant 0 : i32
    %c0_i32_0 = arith.constant 0 : i32
    %c0_i32_1 = arith.constant 0 : i32
    return %c0_i32, %c0_i32_0 : i32, i32
  }
  func.func @transform_3(%arg0: i32, %arg1: i32) -> (i32, i32, i32) {
    %c0_i32 = arith.constant 0 : i32
    %c0_i32_0 = arith.constant 0 : i32
    return %arg0, %c0_i32, %arg1 : i32, i32, i32
  }
  func.func @transform_4(%arg0: i32, %arg1: i32) -> (i32, i32, i32) {
    %c0_i32 = arith.constant 0 : i32
    %c0_i32_0 = arith.constant 0 : i32
    return %arg0, %c0_i32, %arg1 : i32, i32, i32
  }
}

module attributes {stable_mosaic.version = 11 : i64} {
  func.func @kernel(%arg0: i32, %arg1: i32, %arg2: memref<1x8x256xbf16, #tpu.memory_space<vmem>>, %arg3: memref<1x8x256xbf16, #tpu.memory_space<vmem>>, %arg4: memref<8x8xbf16, #tpu.memory_space<vmem>>, %arg5: memref<8x8xbf16, #tpu.memory_space<vmem>>, %arg6: memref<8x1xf32, #tpu.memory_space<vmem>>, %arg7: memref<1x8x256xf32, #tpu.memory_space<vmem>>) attributes {dimension_semantics = [#tpu.dimension_semantics<parallel>, #tpu.dimension_semantics<parallel>], iteration_bounds = array<i64: 2, 1>, scalar_prefetch = 0 : i64, scratch_operands = 0 : i64, tpu.core_type = #tpu.core_type<tc>, window_params = [{transform_indices = @transform_0, window_bounds = array<i64: 1, 8, 256>}, {transform_indices = @transform_1, window_bounds = array<i64: 1, 8, 256>}, {pipeline_mode = #tpu.pipeline_mode<synchronous>, transform_indices = @transform_2, window_bounds = array<i64: 8, 8>}, {pipeline_mode = #tpu.pipeline_mode<synchronous>, transform_indices = @transform_3, window_bounds = array<i64: 8, 8>}, {pipeline_mode = #tpu.pipeline_mode<synchronous>, transform_indices = @transform_4, window_bounds = array<i64: 8, 1>}, {transform_indices = @transform_5, window_bounds = array<i64: 1, 8, 256>}]} {
    %c0 = arith.constant 0 : index
    %c0_0 = arith.constant 0 : index
    %0 = vector.load %arg4[%c0, %c0_0] : memref<8x8xbf16, #tpu.memory_space<vmem>>, vector<8x8xbf16>
    %c0_1 = arith.constant 0 : index
    %c0_2 = arith.constant 0 : index
    %c0_3 = arith.constant 0 : index
    %1 = vector.load %arg2[%c0_1, %c0_2, %c0_3] : memref<1x8x256xbf16, #tpu.memory_space<vmem>>, vector<1x8x256xbf16>
    %2 = vector.shape_cast %1 : vector<1x8x256xbf16> to vector<8x256xbf16>
    %cst = arith.constant dense<0.000000e+00> : vector<8x256xf32>
    %3 = tpu.matmul %0, %2, %cst {dimension_numbers = #tpu.dot_dimension_numbers<[1], [0], [0], [1], [0, 0, 1, 1], [], []>} : vector<8x8xbf16>, vector<8x256xbf16>, vector<8x256xf32> -> vector<8x256xf32>
    %c0_4 = arith.constant 0 : index
    %c0_5 = arith.constant 0 : index
    %4 = vector.load %arg5[%c0_4, %c0_5] : memref<8x8xbf16, #tpu.memory_space<vmem>>, vector<8x8xbf16>
    %c0_6 = arith.constant 0 : index
    %c0_7 = arith.constant 0 : index
    %c0_8 = arith.constant 0 : index
    %5 = vector.load %arg3[%c0_6, %c0_7, %c0_8] : memref<1x8x256xbf16, #tpu.memory_space<vmem>>, vector<1x8x256xbf16>
    %6 = vector.shape_cast %5 : vector<1x8x256xbf16> to vector<8x256xbf16>
    %cst_9 = arith.constant dense<0.000000e+00> : vector<8x256xf32>
    %7 = tpu.matmul %4, %6, %cst_9 {dimension_numbers = #tpu.dot_dimension_numbers<[1], [0], [0], [1], [0, 0, 1, 1], [], []>} : vector<8x8xbf16>, vector<8x256xbf16>, vector<8x256xf32> -> vector<8x256xf32>
    %8 = arith.addf %3, %7 : vector<8x256xf32>
    %c0_10 = arith.constant 0 : index
    %c0_11 = arith.constant 0 : index
    %9 = vector.load %arg6[%c0_10, %c0_11] : memref<8x1xf32, #tpu.memory_space<vmem>>, vector<8x1xf32>
    %10 = vector.broadcast %9 : vector<8x1xf32> to vector<8x256xf32>
    %11 = arith.addf %8, %10 : vector<8x256xf32>
    %cst_12 = arith.constant 0.000000e+00 : f32
    %cst_13 = arith.constant 6.000000e+00 : f32
    %12 = vector.broadcast %cst_12 : f32 to vector<8x256xf32>
    %13 = arith.maximumf %12, %11 : vector<8x256xf32>
    %14 = vector.broadcast %cst_13 : f32 to vector<8x256xf32>
    %15 = arith.minimumf %14, %13 : vector<8x256xf32>
    %c0_14 = arith.constant 0 : index
    %c0_15 = arith.constant 0 : index
    %c0_16 = arith.constant 0 : index
    %16 = vector.load %arg7[%c0_14, %c0_15, %c0_16] : memref<1x8x256xf32, #tpu.memory_space<vmem>>, vector<1x8x256xf32>
    %17 = vector.shape_cast %16 : vector<1x8x256xf32> to vector<8x256xf32>
    %18 = vector.shape_cast %15 : vector<8x256xf32> to vector<1x8x256xf32>
    tpu.vector_store %arg7[%c0_14, %c0_15, %c0_16], %18 {strides = array<i32>} : memref<1x8x256xf32, #tpu.memory_space<vmem>>, vector<1x8x256xf32>,
    return
  }
  func.func @transform_0(%arg0: i32, %arg1: i32) -> (i32, i32, i32) {
    %c0_i32 = arith.constant 0 : i32
    %c0_i32_0 = arith.constant 0 : i32
    return %arg0, %c0_i32, %arg1 : i32, i32, i32
  }
  func.func @transform_1(%arg0: i32, %arg1: i32) -> (i32, i32, i32) {
    %c0_i32 = arith.constant 0 : i32
    %c0_i32_0 = arith.constant 0 : i32
    return %arg0, %c0_i32, %arg1 : i32, i32, i32
  }
  func.func @transform_2(%arg0: i32, %arg1: i32) -> (i32, i32) {
    %c0_i32 = arith.constant 0 : i32
    %c0_i32_0 = arith.constant 0 : i32
    %c0_i32_1 = arith.constant 0 : i32
    return %c0_i32, %c0_i32_0 : i32, i32
  }
  func.func @transform_3(%arg0: i32, %arg1: i32) -> (i32, i32) {
    %c0_i32 = arith.constant 0 : i32
    %c0_i32_0 = arith.constant 0 : i32
    %c0_i32_1 = arith.constant 0 : i32
    return %c0_i32, %c0_i32_0 : i32, i32
  }
  func.func @transform_4(%arg0: i32, %arg1: i32) -> (i32, i32) {
    %c0_i32 = arith.constant 0 : i32
    %c0_i32_0 = arith.constant 0 : i32
    %c0_i32_1 = arith.constant 0 : i32
    return %c0_i32, %c0_i32_0 : i32, i32
  }
  func.func @transform_5(%arg0: i32, %arg1: i32) -> (i32, i32, i32) {
    %c0_i32 = arith.constant 0 : i32
    %c0_i32_0 = arith.constant 0 : i32
    return %arg0, %c0_i32, %arg1 : i32, i32, i32
  }
}

</mosaic_0001>

<llo_original>
// kernel: ciafm_forward.8
$region0: #{ciafm_forward.8}
  #allocation0 [shape = 'u32[]', space=smem, size = 0x4, offset = 0x4, fixed_abs, tag = 'smem constant byte address 0x4 - core index']
  #allocation1 [shape = 'u32[144,128]{1,0:T(1,128)}', space=vmem, size = 0x12000, scoped, tag = 'internal scratch']
  %s0 = inlined_call_operand.vmem [shape: bf16[2,8,128], index: 0, kind: input, shape index: {}]
  %s1 = inlined_call_operand.vmem [shape: bf16[16,8], index: 1, kind: input, shape index: {}]
  %s2 = inlined_call_operand.vmem [shape: f32[16,1], index: 2, kind: input, shape index: {}]
  %s3 = inlined_call_operand.vmem [shape: bf16[2,16,128], index: 3, kind: output, shape index: {}]
  %s4 = sld [smem:[#allocation0]]
  $region45: #{ciafm_forward.8} parent=0
    _
  %s6 = ssub.s32 1, %s4
  %s7 = scalar_select 0, %s6, %s4
  loop: start=0, step=1, limit=4
  $region2: #{ciafm_forward.8} parent=0 // loop_pre_header
    _
  $region3: #{ciafm_forward.8} parent=0 // loop_header
    %s9 = sphi 0, %s13
    %p10 = scmp.ge.s32.totalorder %s9, 4
    %s16 = sphi 0, %s28
    %s17 = sphi 0, %s24
    %s18 = sphi 0, %s16
    %s19 = sphi 0, %s17
    %s20 = sphi 0, %s18
    %s21 = sphi 0, %s19
    %s33 = sphi 0, %s35
    %s36 = sphi 0, %s33
    %s37 = sphi 0, %s36
    %s53 = sphi 0, %s37
    %s57 = sphi 0, %s57
    %s59 = sphi 0, %s57
    %s60 = sphi 0, %s59
    %s74 = sphi 0, %s60
    %s78 = sphi 0, %s78
    %s80 = sphi 0, %s78
    %s81 = sphi 0, %s80
    %s95 = sphi 0, %s81
    %s103 = sphi 0, %s105
    %s106 = sphi 0, %s103
    %s107 = sphi 0, %s106
    %s123 = sphi 0, %s107
  $region4: #{ciafm_forward.8} parent=0 // loop_header_branch
    %12 = sbr.rel (%p10) target = $region8
  $region5: #{ciafm_forward.8} parent=0 // loop_body
    %s14 = ssub.s32 %s9, 1
    %s15 = ssub.s32 %s9, 2
    %s22 = sadd.s32 1, %s17
    %p23 = scmp.ge.s32.totalorder %s22, 1
    %s24 = scalar_select %p23, 0, %s22
    %s25 = sadd.s32 1, %s16
    %s26 = scalar_select %p23, %s25, %s16
    %p27 = scmp.ge.s32.totalorder %s26, 2
    %s28 = scalar_select %p27, 0, %s26
    %s29 = ssub.s32 %s16, %s28
    %s30 = ssub.s32 %s17, %s24
    %s31 = sor.u32 %s29, %s30
    %p32 = scmp.eq.s32.totalorder %s31, 0
    %s34 = sadd.s32 %s33, 1
    %s35 = scalar_select %p32, %s33, %s34
    %p38 = pneg %p32
    %p39 = scmp.eq.s32.totalorder %s9, 1
    %p40 = por %p38, %p39
    %p41 = scmp.ne.s32.totalorder %s33, %s36
    %p42 = scmp.eq.s32.totalorder %s9, 0
    %p43 = por %p41, %p42
    %p44 = scmp.ne.s32.totalorder %s33, %s36
    %p45 = scmp.eq.s32.totalorder %s14, 1
    %p46 = por %p44, %p45
    %p47 = scmp.ne.s32.totalorder %s36, %s37
    %p48 = scmp.eq.s32.totalorder %s14, 0
    %p49 = por %p47, %p48
    %p50 = scmp.ne.s32.totalorder %s36, %s37
    %p51 = scmp.eq.s32.totalorder %s15, 1
    %p52 = por %p50, %p51
    %p54 = scmp.ne.s32.totalorder %s37, %s53
    %p55 = scmp.eq.s32.totalorder %s15, 0
    %p56 = por %p54, %p55
    %s58 = sadd.s32 %s57, 1
    %p61 = scmp.eq.s32.totalorder %s9, 1
    %p62 = scmp.ne.s32.totalorder %s57, %s59
    %p63 = scmp.eq.s32.totalorder %s9, 0
    %p64 = por %p62, %p63
    %p65 = scmp.ne.s32.totalorder %s57, %s59
    %p66 = scmp.eq.s32.totalorder %s14, 1
    %p67 = por %p65, %p66
    %p68 = scmp.ne.s32.totalorder %s59, %s60
    %p69 = scmp.eq.s32.totalorder %s14, 0
    %p70 = por %p68, %p69
    %p71 = scmp.ne.s32.totalorder %s59, %s60
    %p72 = scmp.eq.s32.totalorder %s15, 1
    %p73 = por %p71, %p72
    %p75 = scmp.ne.s32.totalorder %s60, %s74
    %p76 = scmp.eq.s32.totalorder %s15, 0
    %p77 = por %p75, %p76
    %s79 = sadd.s32 %s78, 1
    %p82 = scmp.eq.s32.totalorder %s9, 1
    %p83 = scmp.ne.s32.totalorder %s78, %s80
    %p84 = scmp.eq.s32.totalorder %s9, 0
    %p85 = por %p83, %p84
    %p86 = scmp.ne.s32.totalorder %s78, %s80
    %p87 = scmp.eq.s32.totalorder %s14, 1
    %p88 = por %p86, %p87
    %p89 = scmp.ne.s32.totalorder %s80, %s81
    %p90 = scmp.eq.s32.totalorder %s14, 0
    %p91 = por %p89, %p90
    %p92 = scmp.ne.s32.totalorder %s80, %s81
    %p93 = scmp.eq.s32.totalorder %s15, 1
    %p94 = por %p92, %p93
    %p96 = scmp.ne.s32.totalorder %s81, %s95
    %p97 = scmp.eq.s32.totalorder %s15, 0
    %p98 = por %p96, %p97
    %s99 = ssub.s32 %s16, %s28
    %s100 = ssub.s32 %s17, %s24
    %s101 = sor.u32 %s99, %s100
    %p102 = scmp.eq.s32.totalorder %s101, 0
    %s104 = sadd.s32 %s103, 1
    %s105 = scalar_select %p102, %s103, %s104
    %p108 = pneg %p102
    %p109 = scmp.eq.s32.totalorder %s9, 1
    %p110 = por %p108, %p109
    %p111 = scmp.ne.s32.totalorder %s103, %s106
    %p112 = scmp.eq.s32.totalorder %s9, 0
    %p113 = por %p111, %p112
    %p114 = scmp.ne.s32.totalorder %s103, %s106
    %p115 = scmp.eq.s32.totalorder %s14, 1
    %p116 = por %p114, %p115
    %p117 = scmp.ne.s32.totalorder %s106, %s107
    %p118 = scmp.eq.s32.totalorder %s14, 0
    %p119 = por %p117, %p118
    %p120 = scmp.ne.s32.totalorder %s106, %s107
    %p121 = scmp.eq.s32.totalorder %s15, 1
    %p122 = por %p120, %p121
    %p124 = scmp.ne.s32.totalorder %s107, %s123
    %p125 = scmp.eq.s32.totalorder %s15, 0
    %p126 = por %p124, %p125
    %p127 = scmp.le.s32.totalorder 1, %s9
    %p128 = scmp.lt.s32.totalorder %s9, 3
    %p129 = pnand %p127, %p128
    %p130 = pneg %p129
    // Predicated region
    $region9: #{ciafm_forward.8} parent=5 // pred_check
      _
    $region10: #{ciafm_forward.8} parent=5 // pred_check_branch
      %132 = sbr.rel (%p129) target = $region12
    $region11: #{ciafm_forward.8} parent=5 // pred_region
      %s133 = ssub.s32 %s9, 1
      // Predicated region
      $region13: #{ciafm_forward.8} parent=11 // pred_check
        %p134 = pneg %p70
      $region14: #{ciafm_forward.8} parent=11 // pred_check_branch
        %136 = sbr.rel (%p134) target = $region16
      $region15: #{ciafm_forward.8} parent=11 // pred_region
        _
      $region16: #{ciafm_forward.8} parent=11 // pred_fallthru
        _
      // Predicated region
      $region17: #{ciafm_forward.8} parent=11 // pred_check
        %p137 = pneg %p91
      $region18: #{ciafm_forward.8} parent=11 // pred_check_branch
        %139 = sbr.rel (%p137) target = $region20
      $region19: #{ciafm_forward.8} parent=11 // pred_region
        _
      $region20: #{ciafm_forward.8} parent=11 // pred_fallthru
        _
    $region12: #{ciafm_forward.8} parent=5 // pred_fallthru
      _
    %p140 = scmp.lt.s32.totalorder %s9, 2
    // Predicated region
    $region21: #{ciafm_forward.8} parent=5 // pred_check
      %p141 = pneg %p140
    $region22: #{ciafm_forward.8} parent=5 // pred_check_branch
      %143 = sbr.rel (%p141) target = $region24
    $region23: #{ciafm_forward.8} parent=5 // pred_region
      // Predicated region
      $region25: #{ciafm_forward.8} parent=23 // pred_check
        %p144 = pneg %p43
      $region26: #{ciafm_forward.8} parent=23 // pred_check_branch
        %146 = sbr.rel (%p144) target = $region28
      $region27: #{ciafm_forward.8} parent=23 // pred_region
        %p147 = scmp.lt.s32.totalorder %s16, 1
        %s148 = scalar_select %p147, %s16, 1
        %p149 = scmp.lt.s32.totalorder %s17, 0
        %s150 = scalar_select %p149, %s17, 0
        %s151 = sadd.s32 %s150, %s148
        %s152 = smul.addr %s151, 4
        %s153 = scalar_lea.vmem %s0, %s152
      $region28: #{ciafm_forward.8} parent=23 // pred_fallthru
        _
    $region24: #{ciafm_forward.8} parent=5 // pred_fallthru
      _
    %p154 = scmp.le.s32.totalorder 1, %s9
    %p155 = scmp.lt.s32.totalorder %s9, 3
    %p156 = pnand %p154, %p155
    %p157 = pneg %p156
    // Predicated region
    $region29: #{ciafm_forward.8} parent=5 // pred_check
      _
    $region30: #{ciafm_forward.8} parent=5 // pred_check_branch
      %159 = sbr.rel (%p156) target = $region32
    $region31: #{ciafm_forward.8} parent=5 // pred_region
      %s160 = ssub.s32 %s9, 1
      %p161 = scmp.lt.s32.totalorder %s18, 1
      %s162 = scalar_select %p161, %s18, 1
      %p163 = scmp.lt.s32.totalorder %s19, 0
      %s164 = scalar_select %p163, %s19, 0
      %s165 = sadd.s32 %s164, %s162
      %s166 = smul.addr %s165, 4
      %s167 = scalar_lea.vmem %s0, %s166
      %p168 = pneg %p49
      %p169 = pneg %p46
      %p170 = pneg %p70
      %p171 = pneg %p67
      %p172 = pneg %p91
      %p173 = pneg %p88
      %p174 = pneg %p119
      %p175 = pneg %p116
      %p176 = scmp.lt.s32.totalorder %s18, 1
      %s177 = scalar_select %p176, %s18, 1
      %p178 = scmp.lt.s32.totalorder %s19, 0
      %s179 = scalar_select %p178, %s19, 0
      %s180 = smul.addr %s177, 2
      %s181 = sadd.s32 %s179, %s180
      %s182 = smul.addr %s181, 4
      %s183 = scalar_lea.vmem %s3, %s182
      %p184 = scmp.lt.s32.totalorder %s18, 1
      %s185 = scalar_select %p184, %s18, 1
      %p186 = scmp.lt.s32.totalorder %s19, 0
      %s187 = scalar_select %p186, %s19, 0
      %s188 = sadd.s32 %s187, %s185
      %s189 = smul.addr %s188, 4
      %s190 = scalar_lea.vmem %s0, %s189
      %p191 = scmp.lt.s32.totalorder %s18, 1
      %s192 = scalar_select %p191, %s18, 1
      %p193 = scmp.lt.s32.totalorder %s19, 0
      %s194 = scalar_select %p193, %s19, 0
      %s195 = smul.addr %s192, 2
      %s196 = sadd.s32 %s194, %s195
      %s197 = smul.addr %s196, 4
      %s198 = scalar_lea.vmem %s3, %s197
      %v200 = vld [vmem:[%s1] sm:$0xf]
      %v201 = vld [vmem:[%s1 + $0x4] sm:$0xf]
      %v202 = vld [vmem:[%s190] sm:$0xf]
      %v203 = vld [vmem:[%s2] sm:$0xff]
      %v204 = vld [vmem:[%s2 + $0x8] sm:$0xff]
      %206 = vset.pattern.permute.xlu0 0
      %207 = vperm.xlu0 %206, %v203
      %v208 = vpop.permute.xlu0 %207
      %211 = vset.pattern.permute.xlu0 0
      %212 = vperm.xlu0 %211, %v204
      %v213 = vpop.permute.xlu0 %212
      %v217 = vunpack.c.l.b16 %v200
      %v218 = vunpack.c.l.b16 %v201
      %v219 = vpack.c.b16 %v218, %v217
      %vm220 = vcmask 64512
      %v222 = vsel %vm220, %v219, 0
      %vm224 = vcmask 1043456
      %v226 = vsel %vm224, %v202, 0
      %228 = vmatprep.subr.bf16.mxu0 0
      %229 = vmatpush1.bf16.msra.mxu0 0
      %230 = vmatprep.subr.bf16.mxu0 0
      %231 = vmatpush1.bf16.msra.mxu0 0
      %232 = vmatprep.subr.bf16.mxu0 0
      %233 = vmatpush1.bf16.msra.mxu0 0
      %234 = vmatprep.subr.bf16.mxu0 0
      %235 = vmatpush1.bf16.msra.mxu0 0
      %236 = vmatprep.subr.bf16.mxu0 0
      %237 = vmatpush1.bf16.msra.mxu0 0
      %238 = vmatprep.subr.bf16.mxu0 0
      %239 = vmatpush1.bf16.msra.mxu0 0
      %240 = vmatprep.subr.bf16.mxu0 0
      %241 = vmatpush1.bf16.msra.mxu0 0
      %242 = vmatprep.subr.bf16.mxu0 0
      %243 = vmatpush1.bf16.msra.mxu0 %v226
      %244 = vmatprep.subr.bf16.mxu0 0
      %245 = vmatpush2.bf16.msra.mxu0 0
      %246 = vmatprep.subr.bf16.mxu0 0
      %247 = vmatpush2.bf16.msra.mxu0 0
      %248 = vmatprep.subr.bf16.mxu0 0
      %249 = vmatpush2.bf16.msra.mxu0 0
      %250 = vmatprep.subr.bf16.mxu0 0
      %251 = vmatpush2.bf16.msra.mxu0 0
      %252 = vmatprep.subr.bf16.mxu0 0
      %253 = vmatpush2.bf16.msra.mxu0 0
      %254 = vmatprep.subr.bf16.mxu0 0
      %255 = vmatpush2.bf16.msra.mxu0 0
      %256 = vmatprep.subr.bf16.mxu0 0
      %257 = vmatpush2.bf16.msra.mxu0 0
      %258 = vmatprep.subr.bf16.mxu0 0
      %259 = vmatpush2.bf16.msra.mxu0 0
      %260 = vmatprep.mubr.bf16.mxu0 0
      %261 = vmatmul.mubr.bf16.gmra.mxu0 %v222
      %v262 = vpop.f32.mrf.mxu0
      %v263 = vadd.f32 %v208, %v262
      %v264 = vpop.f32.mrf.mxu0
      %v265 = vpop.f32.mrf.mxu0
      %v266 = vadd.f32 %v213, %v265
      %v267 = vpop.f32.mrf.mxu0
      %268 = vdwg.mxu0
      %v269 = vmax.f32 %v263, 0.0
      %v270 = vmax.f32 %v266, 0.0
      %v271 = vmin.f32 %v269, 6.0
      %v272 = vmin.f32 %v270, 6.0
      %v273 = vpack.c.bf16 %v272, %v271
      %v275 = vunpack.c.l.b16 %v273
      %v276 = vunpack.c.h.b16 %v273
      %v277 = vpack.c.b16 %v275, %v275
      %v278 = vpack.c.b16 %v276, %v276
      %281 = vst [vmem:[%s198] sm:$0xf] %v277
      %282 = vst [vmem:[%s198 + $0x4] sm:$0xf] %v278
      %p283 = scmp.lt.s32.totalorder %s18, 1
      %s284 = scalar_select %p283, %s18, 1
      %p285 = scmp.lt.s32.totalorder %s19, 0
      %s286 = scalar_select %p285, %s19, 0
      %s287 = smul.addr %s284, 2
      %s288 = sadd.s32 %s286, %s287
      %s289 = smul.addr %s288, 4
      %s290 = scalar_lea.vmem %s3, %s289
      // Predicated region
      $region33: #{ciafm_forward.8} parent=31 // pred_check
        %p291 = pneg %p116
      $region34: #{ciafm_forward.8} parent=31 // pred_check_branch
        %293 = sbr.rel (%p291) target = $region36
      $region35: #{ciafm_forward.8} parent=31 // pred_region
        _
      $region36: #{ciafm_forward.8} parent=31 // pred_fallthru
        _
    $region32: #{ciafm_forward.8} parent=5 // pred_fallthru
      _
    %p294 = scmp.le.s32.totalorder 2, %s9
    // Predicated region
    $region37: #{ciafm_forward.8} parent=5 // pred_check
      %p295 = pneg %p294
    $region38: #{ciafm_forward.8} parent=5 // pred_check_branch
      %297 = sbr.rel (%p295) target = $region40
    $region39: #{ciafm_forward.8} parent=5 // pred_region
      %s298 = ssub.s32 %s9, 2
      // Predicated region
      $region41: #{ciafm_forward.8} parent=39 // pred_check
        %p299 = pneg %p122
      $region42: #{ciafm_forward.8} parent=39 // pred_check_branch
        %301 = sbr.rel (%p299) target = $region44
      $region43: #{ciafm_forward.8} parent=39 // pred_region
        %p302 = scmp.lt.s32.totalorder %s20, 1
        %s303 = scalar_select %p302, %s20, 1
        %p304 = scmp.lt.s32.totalorder %s21, 0
        %s305 = scalar_select %p304, %s21, 0
        %s306 = smul.addr %s303, 2
        %s307 = sadd.s32 %s305, %s306
        %s308 = smul.addr %s307, 4
        %s309 = scalar_lea.vmem %s3, %s308
      $region44: #{ciafm_forward.8} parent=39 // pred_fallthru
        _
    $region40: #{ciafm_forward.8} parent=5 // pred_fallthru
      _
  $region6: #{ciafm_forward.8} parent=0 // loop_footer
    %s13 = sadd.s32 1, %s9
  $region7: #{ciafm_forward.8} parent=0 // loop_footer_branch
    %8 = sbr.rel target = $region3
  $region8: #{ciafm_forward.8} parent=0 // loop_exit
    _

// kernel: ciafm_forward.7
$region0: #{ciafm_forward.7}
  #allocation0 [shape = 'u32[]', space=smem, size = 0x4, offset = 0x4, fixed_abs, tag = 'smem constant byte address 0x4 - core index']
  #allocation1 [shape = 'u32[144,128]{1,0:T(1,128)}', space=vmem, size = 0x12000, scoped, tag = 'internal scratch']
  %s0 = inlined_call_operand.vmem [shape: bf16[2,1,8,290], index: 0, kind: input, shape index: {}]
  %s1 = inlined_call_operand.vmem [shape: bf16[8,72], index: 1, kind: input, shape index: {}]
  %s2 = inlined_call_operand.vmem [shape: f32[8,1], index: 2, kind: input, shape index: {}]
  %s3 = inlined_call_operand.vmem [shape: bf16[2,8,256], index: 3, kind: output, shape index: {}]
  %s4 = sld [smem:[#allocation0]]
  $region45: #{ciafm_forward.7} parent=0
    _
  %s6 = ssub.s32 1, %s4
  %s7 = scalar_select 0, %s6, %s4
  loop: start=0, step=1, limit=4
  $region2: #{ciafm_forward.7} parent=0 // loop_pre_header
    _
  $region3: #{ciafm_forward.7} parent=0 // loop_header
    %s9 = sphi 0, %s13
    %p10 = scmp.ge.s32.totalorder %s9, 4
    %s16 = sphi 0, %s28
    %s17 = sphi 0, %s24
    %s18 = sphi 0, %s16
    %s19 = sphi 0, %s17
    %s20 = sphi 0, %s18
    %s21 = sphi 0, %s19
    %s33 = sphi 0, %s35
    %s36 = sphi 0, %s33
    %s37 = sphi 0, %s36
    %s53 = sphi 0, %s37
    %s57 = sphi 0, %s57
    %s59 = sphi 0, %s57
    %s60 = sphi 0, %s59
    %s74 = sphi 0, %s60
    %s78 = sphi 0, %s78
    %s80 = sphi 0, %s78
    %s81 = sphi 0, %s80
    %s95 = sphi 0, %s81
    %s103 = sphi 0, %s105
    %s106 = sphi 0, %s103
    %s107 = sphi 0, %s106
    %s123 = sphi 0, %s107
  $region4: #{ciafm_forward.7} parent=0 // loop_header_branch
    %12 = sbr.rel (%p10) target = $region8
  $region5: #{ciafm_forward.7} parent=0 // loop_body
    %s14 = ssub.s32 %s9, 1
    %s15 = ssub.s32 %s9, 2
    %s22 = sadd.s32 1, %s17
    %p23 = scmp.ge.s32.totalorder %s22, 1
    %s24 = scalar_select %p23, 0, %s22
    %s25 = sadd.s32 1, %s16
    %s26 = scalar_select %p23, %s25, %s16
    %p27 = scmp.ge.s32.totalorder %s26, 2
    %s28 = scalar_select %p27, 0, %s26
    %s29 = ssub.s32 %s16, %s28
    %s30 = ssub.s32 %s17, %s24
    %s31 = sor.u32 %s29, %s30
    %p32 = scmp.eq.s32.totalorder %s31, 0
    %s34 = sadd.s32 %s33, 1
    %s35 = scalar_select %p32, %s33, %s34
    %p38 = pneg %p32
    %p39 = scmp.eq.s32.totalorder %s9, 1
    %p40 = por %p38, %p39
    %p41 = scmp.ne.s32.totalorder %s33, %s36
    %p42 = scmp.eq.s32.totalorder %s9, 0
    %p43 = por %p41, %p42
    %p44 = scmp.ne.s32.totalorder %s33, %s36
    %p45 = scmp.eq.s32.totalorder %s14, 1
    %p46 = por %p44, %p45
    %p47 = scmp.ne.s32.totalorder %s36, %s37
    %p48 = scmp.eq.s32.totalorder %s14, 0
    %p49 = por %p47, %p48
    %p50 = scmp.ne.s32.totalorder %s36, %s37
    %p51 = scmp.eq.s32.totalorder %s15, 1
    %p52 = por %p50, %p51
    %p54 = scmp.ne.s32.totalorder %s37, %s53
    %p55 = scmp.eq.s32.totalorder %s15, 0
    %p56 = por %p54, %p55
    %s58 = sadd.s32 %s57, 1
    %p61 = scmp.eq.s32.totalorder %s9, 1
    %p62 = scmp.ne.s32.totalorder %s57, %s59
    %p63 = scmp.eq.s32.totalorder %s9, 0
    %p64 = por %p62, %p63
    %p65 = scmp.ne.s32.totalorder %s57, %s59
    %p66 = scmp.eq.s32.totalorder %s14, 1
    %p67 = por %p65, %p66
    %p68 = scmp.ne.s32.totalorder %s59, %s60
    %p69 = scmp.eq.s32.totalorder %s14, 0
    %p70 = por %p68, %p69
    %p71 = scmp.ne.s32.totalorder %s59, %s60
    %p72 = scmp.eq.s32.totalorder %s15, 1
    %p73 = por %p71, %p72
    %p75 = scmp.ne.s32.totalorder %s60, %s74
    %p76 = scmp.eq.s32.totalorder %s15, 0
    %p77 = por %p75, %p76
    %s79 = sadd.s32 %s78, 1
    %p82 = scmp.eq.s32.totalorder %s9, 1
    %p83 = scmp.ne.s32.totalorder %s78, %s80
    %p84 = scmp.eq.s32.totalorder %s9, 0
    %p85 = por %p83, %p84
    %p86 = scmp.ne.s32.totalorder %s78, %s80
    %p87 = scmp.eq.s32.totalorder %s14, 1
    %p88 = por %p86, %p87
    %p89 = scmp.ne.s32.totalorder %s80, %s81
    %p90 = scmp.eq.s32.totalorder %s14, 0
    %p91 = por %p89, %p90
    %p92 = scmp.ne.s32.totalorder %s80, %s81
    %p93 = scmp.eq.s32.totalorder %s15, 1
    %p94 = por %p92, %p93
    %p96 = scmp.ne.s32.totalorder %s81, %s95
    %p97 = scmp.eq.s32.totalorder %s15, 0
    %p98 = por %p96, %p97
    %s99 = ssub.s32 %s16, %s28
    %s100 = ssub.s32 %s17, %s24
    %s101 = sor.u32 %s99, %s100
    %p102 = scmp.eq.s32.totalorder %s101, 0
    %s104 = sadd.s32 %s103, 1
    %s105 = scalar_select %p102, %s103, %s104
    %p108 = pneg %p102
    %p109 = scmp.eq.s32.totalorder %s9, 1
    %p110 = por %p108, %p109
    %p111 = scmp.ne.s32.totalorder %s103, %s106
    %p112 = scmp.eq.s32.totalorder %s9, 0
    %p113 = por %p111, %p112
    %p114 = scmp.ne.s32.totalorder %s103, %s106
    %p115 = scmp.eq.s32.totalorder %s14, 1
    %p116 = por %p114, %p115
    %p117 = scmp.ne.s32.totalorder %s106, %s107
    %p118 = scmp.eq.s32.totalorder %s14, 0
    %p119 = por %p117, %p118
    %p120 = scmp.ne.s32.totalorder %s106, %s107
    %p121 = scmp.eq.s32.totalorder %s15, 1
    %p122 = por %p120, %p121
    %p124 = scmp.ne.s32.totalorder %s107, %s123
    %p125 = scmp.eq.s32.totalorder %s15, 0
    %p126 = por %p124, %p125
    %p127 = scmp.le.s32.totalorder 1, %s9
    %p128 = scmp.lt.s32.totalorder %s9, 3
    %p129 = pnand %p127, %p128
    %p130 = pneg %p129
    // Predicated region
    $region9: #{ciafm_forward.7} parent=5 // pred_check
      _
    $region10: #{ciafm_forward.7} parent=5 // pred_check_branch
      %132 = sbr.rel (%p129) target = $region12
    $region11: #{ciafm_forward.7} parent=5 // pred_region
      %s133 = ssub.s32 %s9, 1
      // Predicated region
      $region13: #{ciafm_forward.7} parent=11 // pred_check
        %p134 = pneg %p70
      $region14: #{ciafm_forward.7} parent=11 // pred_check_branch
        %136 = sbr.rel (%p134) target = $region16
      $region15: #{ciafm_forward.7} parent=11 // pred_region
        _
      $region16: #{ciafm_forward.7} parent=11 // pred_fallthru
        _
      // Predicated region
      $region17: #{ciafm_forward.7} parent=11 // pred_check
        %p137 = pneg %p91
      $region18: #{ciafm_forward.7} parent=11 // pred_check_branch
        %139 = sbr.rel (%p137) target = $region20
      $region19: #{ciafm_forward.7} parent=11 // pred_region
        _
      $region20: #{ciafm_forward.7} parent=11 // pred_fallthru
        _
    $region12: #{ciafm_forward.7} parent=5 // pred_fallthru
      _
    %p140 = scmp.lt.s32.totalorder %s9, 2
    // Predicated region
    $region21: #{ciafm_forward.7} parent=5 // pred_check
      %p141 = pneg %p140
    $region22: #{ciafm_forward.7} parent=5 // pred_check_branch
      %143 = sbr.rel (%p141) target = $region24
    $region23: #{ciafm_forward.7} parent=5 // pred_region
      // Predicated region
      $region25: #{ciafm_forward.7} parent=23 // pred_check
        %p144 = pneg %p43
      $region26: #{ciafm_forward.7} parent=23 // pred_check_branch
        %146 = sbr.rel (%p144) target = $region28
      $region27: #{ciafm_forward.7} parent=23 // pred_region
        %p147 = scmp.lt.s32.totalorder %s16, 1
        %s148 = scalar_select %p147, %s16, 1
        %p149 = scmp.lt.s32.totalorder %s17, 0
        %s150 = scalar_select %p149, %s17, 0
        %s151 = smul.addr %s150, 3
        %s152 = smul.addr %s148, 3
        %s153 = sadd.s32 %s151, %s152
        %s154 = smul.addr %s153, 4
        %s155 = scalar_lea.vmem %s0, %s154
      $region28: #{ciafm_forward.7} parent=23 // pred_fallthru
        _
    $region24: #{ciafm_forward.7} parent=5 // pred_fallthru
      _
    %p156 = scmp.le.s32.totalorder 1, %s9
    %p157 = scmp.lt.s32.totalorder %s9, 3
    %p158 = pnand %p156, %p157
    %p159 = pneg %p158
    // Predicated region
    $region29: #{ciafm_forward.7} parent=5 // pred_check
      _
    $region30: #{ciafm_forward.7} parent=5 // pred_check_branch
      %161 = sbr.rel (%p158) target = $region32
    $region31: #{ciafm_forward.7} parent=5 // pred_region
      %s162 = ssub.s32 %s9, 1
      %p163 = scmp.lt.s32.totalorder %s18, 1
      %s164 = scalar_select %p163, %s18, 1
      %p165 = scmp.lt.s32.totalorder %s19, 0
      %s166 = scalar_select %p165, %s19, 0
      %s167 = smul.addr %s166, 3
      %s168 = smul.addr %s164, 3
      %s169 = sadd.s32 %s167, %s168
      %s170 = smul.addr %s169, 4
      %s171 = scalar_lea.vmem %s0, %s170
      %p172 = pneg %p49
      %p173 = pneg %p46
      %p174 = pneg %p70
      %p175 = pneg %p67
      %p176 = pneg %p91
      %p177 = pneg %p88
      %p178 = pneg %p119
      %p179 = pneg %p116
      %s180 = smul.u32 2, %s19
      %p181 = scmp.lt.s32.totalorder %s18, 1
      %s182 = scalar_select %p181, %s18, 1
      %p183 = scmp.lt.s32.totalorder %s180, 1
      %s184 = scalar_select %p183, %s180, 1
      %s185 = smul.addr %s182, 2
      %s186 = sadd.s32 %s184, %s185
      %s187 = smul.addr %s186, 4
      %s188 = scalar_lea.vmem %s3, %s187
      %p189 = scmp.lt.s32.totalorder %s18, 1
      %s190 = scalar_select %p189, %s18, 1
      %p191 = scmp.lt.s32.totalorder %s19, 0
      %s192 = scalar_select %p191, %s19, 0
      %s193 = smul.addr %s192, 3
      %s194 = smul.addr %s190, 3
      %s195 = sadd.s32 %s193, %s194
      %s196 = smul.addr %s195, 4
      %s197 = scalar_lea.vmem %s0, %s196
      %s198 = smul.u32 2, %s19
      %p199 = scmp.lt.s32.totalorder %s18, 1
      %s200 = scalar_select %p199, %s18, 1
      %p201 = scmp.lt.s32.totalorder %s198, 1
      %s202 = scalar_select %p201, %s198, 1
      %s203 = smul.addr %s200, 2
      %s204 = sadd.s32 %s202, %s203
      %s205 = smul.addr %s204, 4
      %s206 = scalar_lea.vmem %s3, %s205
      %s207 = smul.u32 2, %s19
      %v211 = vld [vmem:[%s197] sm:$0xff]
      %v212 = vld [vmem:[%s197 + $0x8] sm:$0xf]
      %v213 = vlaneseq
      %v214 = vand.u32 %v213, 127
      %v215 = vadd.s32 %v214, 128
      %vm216 = vcmp.lt.s32.totalorder %v214, 0
      %v217 = vsub.s32 0, %v214
      %v218 = vsel %vm216, %v217, %v214
      %v219 = vshrl.u32 %v218, 4
      %v220 = vand.u32 %v218, 15
      %v221 = vsub.s32 0, %v220
      %v222 = vsel %vm216, %v221, %v220
      %vm223 = vcmp.lt.s32.totalorder %v215, 0
      %v224 = vsub.s32 0, %v215
      %v225 = vsel %vm223, %v224, %v215
      %v226 = vshrl.u32 %v225, 4
      %v227 = vand.u32 %v225, 15
      %v228 = vsub.s32 0, %v227
      %v229 = vsel %vm223, %v228, %v227
      %vm230 = vcmp.ne.s32.totalorder %v222, 0
      %vm231 = vcmp.ne.s32.totalorder %v229, 0
      %vm232 = vcmp.lt.s32.totalorder %v222, 0
      %vm233 = vcmp.lt.s32.totalorder %v229, 0
      %vm234 = vmand %vm232, %vm230
      %vm235 = vmand %vm233, %vm231
      %v236 = vadd.s32 %v222, 16
      %v237 = vadd.s32 %v229, 16
      %v238 = vsel %vm234, %v236, %v222
      %v239 = vsel %vm235, %v237, %v229
      %vm240 = vcmp.gt.s32.totalorder %v238, 0
      %vm241 = vcmp.gt.s32.totalorder %v239, 0
      %vm242 = vcmp.lt.s32.totalorder %v238, 15
      %vm243 = vcmp.lt.s32.totalorder %v239, 15
      %v244 = vsel %vm240, 1, 0
      %v245 = vsel %vm241, 1, 0
      %vm246 = vcmp.eq.s32.totalorder %v244, 1
      %vm247 = vcmp.eq.s32.totalorder %v245, 1
      %vm248 = vmpackc.low %vm247, %vm246
      %v249 = vsel %vm248, %v211, 0
      %v250 = vsel %vm242, 1, 0
      %v251 = vsel %vm243, 1, 0
      %vm252 = vcmp.eq.s32.totalorder %v250, 1
      %vm253 = vcmp.eq.s32.totalorder %v251, 1
      %vm254 = vmpackc.low %vm253, %vm252
      %v255 = vsel %vm254, 65537, 0
      %256 = vrot.lane.b32.xlu0 %v255, 2
      %v257 = vpop.permute.xlu0 %256
      %v258 = vrot.slane %v257, 4
      %vm259 = vcmask 15360
      %v260 = vsel %vm259, %v258, %v257
      %vm261 = vcmp.ne.s16.totalorder %v260, 0
      %vm262 = vcmp.ne.s16.totalorder %v258, 0
      %v263 = vsel %vm261, %v211, 0
      %v264 = vsel %vm262, %v212, 0
      %v265 = vsel %vm248, 65537, 0
      %266 = vrot.lane.b32.xlu0 %v265, 16
      %v267 = vpop.permute.xlu0 %266
      %v268 = vrot.slane %v267, 4
      %vm269 = vcmask 130048
      %v270 = vsel %vm269, %v268, %v267
      %vm271 = vcmp.ne.s16.totalorder %v270, 0
      %vm272 = vcmp.ne.s16.totalorder %v268, 0
      %v273 = vsel %vm271, %v211, 0
      %v274 = vsel %vm272, %v212, 0
      %275 = vrot.lane.b32.xlu0 %v255, 18
      %v276 = vpop.permute.xlu0 %275
      %v277 = vrot.slane %v276, 4
      %vm278 = vcmask 146432
      %v279 = vsel %vm278, %v277, %v276
      %vm280 = vcmp.ne.s16.totalorder %v279, 0
      %vm281 = vcmp.ne.s16.totalorder %v277, 0
      %v282 = vsel %vm280, %v211, 0
      %v283 = vsel %vm281, %v212, 0
      %284 = vrot.lane.b32.xlu0 %v265, 32
      %v285 = vpop.permute.xlu0 %284
      %v286 = vrot.slane %v285, 4
      %vm287 = vcmask 261120
      %v288 = vsel %vm287, %v286, %v285
      %vm289 = vcmp.ne.s16.totalorder %v288, 0
      %vm290 = vcmp.ne.s16.totalorder %v286, 0
      %v291 = vsel %vm289, %v211, 0
      %v292 = vsel %vm290, %v212, 0
      %293 = vrot.lane.b32.xlu0 %v255, 34
      %v294 = vpop.permute.xlu0 %293
      %v295 = vrot.slane %v294, 4
      %vm296 = vcmask 277504
      %v297 = vsel %vm296, %v295, %v294
      %vm298 = vcmp.ne.s16.totalorder %v297, 0
      %vm299 = vcmp.ne.s16.totalorder %v295, 0
      %v300 = vsel %vm298, %v211, 0
      %v301 = vsel %vm299, %v212, 0
      %v303 = vunpack.c.l.b16 %v249
      %v304 = vunpack.c.h.b16 %v249
      %v305 = vpack.c.b16 %v303, %v303
      %v306 = vpack.c.b16 %v304, %v304
      %v309 = vunpack.c.l.b16 %v211
      %v310 = vunpack.c.h.b16 %v211
      %v311 = vunpack.c.l.b16 %v212
      %v312 = vpack.c.b16 %v309, %v309
      %v313 = vpack.c.b16 %v310, %v310
      %v314 = vpack.c.b16 %v311, %v311
      %315 = vrot.lane.b32.xlu0 %v312, 127
      %v316 = vpop.permute.xlu0 %315
      %317 = vrot.lane.b32.xlu0 %v313, 127
      %v318 = vpop.permute.xlu0 %317
      %319 = vrot.lane.b32.xlu0 %v314, 127
      %v320 = vpop.permute.xlu0 %319
      %vm321 = vcmask 1039360
      %v322 = vsel %vm321, %v316, %v318
      %v323 = vsel %vm321, %v318, %v320
      %v326 = vunpack.c.l.b16 %v263
      %v327 = vunpack.c.h.b16 %v263
      %v328 = vunpack.c.l.b16 %v264
      %v329 = vpack.c.b16 %v326, %v326
      %v330 = vpack.c.b16 %v327, %v327
      %v331 = vpack.c.b16 %v328, %v328
      %332 = vrot.lane.b32.xlu0 %v329, 126
      %v333 = vpop.permute.xlu0 %332
      %334 = vrot.lane.b32.xlu0 %v330, 126
      %v335 = vpop.permute.xlu0 %334
      %336 = vrot.lane.b32.xlu0 %v331, 126
      %v337 = vpop.permute.xlu0 %336
      %vm338 = vcmask 1031168
      %v339 = vsel %vm338, %v333, %v335
      %v340 = vsel %vm338, %v335, %v337
      %v343 = vunpack.c.l.b16 %v273
      %v344 = vunpack.c.h.b16 %v273
      %v345 = vunpack.c.l.b16 %v274
      %v346 = vpack.c.b16 %v343, %v343
      %v347 = vpack.c.b16 %v344, %v344
      %v348 = vpack.c.b16 %v345, %v345
      %349 = vrot.lane.b32.xlu0 %v346, 112
      %v350 = vpop.permute.xlu0 %349
      %351 = vrot.lane.b32.xlu0 %v347, 112
      %v352 = vpop.permute.xlu0 %351
      %353 = vrot.lane.b32.xlu0 %v348, 112
      %v354 = vpop.permute.xlu0 %353
      %vm355 = vcmask 916480
      %v356 = vsel %vm355, %v350, %v352
      %v357 = vsel %vm355, %v352, %v354
      %358 = vrot.lane.b32.xlu0 %v312, 111
      %v359 = vpop.permute.xlu0 %358
      %360 = vrot.lane.b32.xlu0 %v313, 111
      %v361 = vpop.permute.xlu0 %360
      %362 = vrot.lane.b32.xlu0 %v314, 111
      %v363 = vpop.permute.xlu0 %362
      %vm364 = vcmask 908288
      %v365 = vsel %vm364, %v359, %v361
      %v366 = vsel %vm364, %v361, %v363
      %v369 = vunpack.c.l.b16 %v282
      %v370 = vunpack.c.h.b16 %v282
      %v371 = vunpack.c.l.b16 %v283
      %v372 = vpack.c.b16 %v369, %v369
      %v373 = vpack.c.b16 %v370, %v370
      %v374 = vpack.c.b16 %v371, %v371
      %375 = vrot.lane.b32.xlu0 %v372, 110
      %v376 = vpop.permute.xlu0 %375
      %377 = vrot.lane.b32.xlu0 %v373, 110
      %v378 = vpop.permute.xlu0 %377
      %379 = vrot.lane.b32.xlu0 %v374, 110
      %v380 = vpop.permute.xlu0 %379
      %vm381 = vcmask 900096
      %v382 = vsel %vm381, %v376, %v378
      %v383 = vsel %vm381, %v378, %v380
      %v386 = vunpack.c.l.b16 %v291
      %v387 = vunpack.c.h.b16 %v291
      %v388 = vunpack.c.l.b16 %v292
      %v389 = vpack.c.b16 %v386, %v386
      %v390 = vpack.c.b16 %v387, %v387
      %v391 = vpack.c.b16 %v388, %v388
      %392 = vrot.lane.b32.xlu0 %v389, 96
      %v393 = vpop.permute.xlu0 %392
      %394 = vrot.lane.b32.xlu0 %v390, 96
      %v395 = vpop.permute.xlu0 %394
      %396 = vrot.lane.b32.xlu0 %v391, 96
      %v397 = vpop.permute.xlu0 %396
      %vm398 = vcmask 785408
      %v399 = vsel %vm398, %v393, %v395
      %v400 = vsel %vm398, %v395, %v397
      %401 = vrot.lane.b32.xlu0 %v312, 95
      %v402 = vpop.permute.xlu0 %401
      %403 = vrot.lane.b32.xlu0 %v313, 95
      %v404 = vpop.permute.xlu0 %403
      %405 = vrot.lane.b32.xlu0 %v314, 95
      %v406 = vpop.permute.xlu0 %405
      %vm407 = vcmask 777216
      %v408 = vsel %vm407, %v402, %v404
      %v409 = vsel %vm407, %v404, %v406
      %v412 = vunpack.c.l.b16 %v300
      %v413 = vunpack.c.h.b16 %v300
      %v414 = vunpack.c.l.b16 %v301
      %v415 = vpack.c.b16 %v412, %v412
      %v416 = vpack.c.b16 %v413, %v413
      %v417 = vpack.c.b16 %v414, %v414
      %418 = vrot.lane.b32.xlu0 %v415, 94
      %v419 = vpop.permute.xlu0 %418
      %420 = vrot.lane.b32.xlu0 %v416, 94
      %v421 = vpop.permute.xlu0 %420
      %422 = vrot.lane.b32.xlu0 %v417, 94
      %v423 = vpop.permute.xlu0 %422
      %vm424 = vcmask 769024
      %v425 = vsel %vm424, %v419, %v421
      %v426 = vsel %vm424, %v421, %v423
      %vm427 = vcmask 1043456
      %v430 = vsel %vm427, %v305, %v322
      %v434 = vsel %vm427, %v306, %v323
      %v438 = vsel %vm427, %v339, %v356
      %v442 = vsel %vm427, %v340, %v357
      %v446 = vsel %vm427, %v365, %v382
      %v450 = vsel %vm427, %v366, %v383
      %v454 = vsel %vm427, %v399, %v408
      %v458 = vsel %vm427, %v400, %v409
      %v460 = vld [vmem:[%s1] sm:$0xf]
      %v461 = vld [vmem:[%s2] sm:$0xff]
      %463 = vset.pattern.permute.xlu0 0
      %464 = vperm.xlu0 %463, %v461
      %v465 = vpop.permute.xlu0 %464
      %vm467 = vcmask 588800
      %v469 = vsel %vm467, %v460, 0
      %v472 = vsel %vm427, %v425, 0
      %v475 = vsel %vm427, %v426, 0
      %477 = vmatprep.subr.bf16.mxu0 0
      %478 = vmatpush1.bf16.msra.mxu0 0
      %479 = vmatprep.subr.bf16.mxu0 0
      %480 = vmatpush1.bf16.msra.mxu0 0
      %481 = vmatprep.subr.bf16.mxu0 0
      %482 = vmatpush1.bf16.msra.mxu0 0
      %483 = vmatprep.subr.bf16.mxu0 %v475
      %484 = vmatpush1.bf16.msra.mxu0 %v472
      %485 = vmatprep.subr.bf16.mxu0 %v458
      %486 = vmatpush1.bf16.msra.mxu0 %v454
      %487 = vmatprep.subr.bf16.mxu0 %v450
      %488 = vmatpush1.bf16.msra.mxu0 %v446
      %489 = vmatprep.subr.bf16.mxu0 %v442
      %490 = vmatpush1.bf16.msra.mxu0 %v438
      %491 = vmatprep.subr.bf16.mxu0 %v434
      %492 = vmatpush1.bf16.msra.mxu0 %v430
      %493 = vmatprep.subr.bf16.mxu0 0
      %494 = vmatpush2.bf16.msra.mxu0 0
      %495 = vmatprep.subr.bf16.mxu0 0
      %496 = vmatpush2.bf16.msra.mxu0 0
      %497 = vmatprep.subr.bf16.mxu0 0
      %498 = vmatpush2.bf16.msra.mxu0 0
      %499 = vmatprep.subr.bf16.mxu0 0
      %500 = vmatpush2.bf16.msra.mxu0 0
      %501 = vmatprep.subr.bf16.mxu0 0
      %502 = vmatpush2.bf16.msra.mxu0 0
      %503 = vmatprep.subr.bf16.mxu0 0
      %504 = vmatpush2.bf16.msra.mxu0 0
      %505 = vmatprep.subr.bf16.mxu0 0
      %506 = vmatpush2.bf16.msra.mxu0 0
      %507 = vmatprep.subr.bf16.mxu0 0
      %508 = vmatpush2.bf16.msra.mxu0 0
      %509 = vmatprep.mubr.bf16.mxu0 0
      %510 = vmatmul.mubr.bf16.gmra.mxu0 %v469
      %v511 = vpop.f32.mrf.mxu0
      %v512 = vadd.f32 %v465, %v511
      %v513 = vpop.f32.mrf.mxu0
      %v514 = vadd.f32 %v465, %v513
      %v515 = vpop.f32.mrf.mxu0
      %v516 = vpop.f32.mrf.mxu0
      %517 = vdwg.mxu0
      %v518 = vmax.f32 %v512, 0.0
      %v519 = vmax.f32 %v514, 0.0
      %v520 = vmin.f32 %v518, 6.0
      %v521 = vmin.f32 %v519, 6.0
      %v522 = vpack.c.bf16 %v520, %v520
      %v523 = vpack.c.bf16 %v521, %v521
      %v526 = vunpack.c.l.b16 %v522
      %v527 = vunpack.c.l.b16 %v523
      %v528 = vpack.c.b16 %v527, %v526
      %530 = vst [vmem:[%s206] sm:$0xff] %v528
      %s531 = smul.u32 2, %s19
      %p532 = scmp.lt.s32.totalorder %s18, 1
      %s533 = scalar_select %p532, %s18, 1
      %p534 = scmp.lt.s32.totalorder %s531, 1
      %s535 = scalar_select %p534, %s531, 1
      %s536 = smul.addr %s533, 2
      %s537 = sadd.s32 %s535, %s536
      %s538 = smul.addr %s537, 4
      %s539 = scalar_lea.vmem %s3, %s538
      // Predicated region
      $region33: #{ciafm_forward.7} parent=31 // pred_check
        %p540 = pneg %p116
      $region34: #{ciafm_forward.7} parent=31 // pred_check_branch
        %542 = sbr.rel (%p540) target = $region36
      $region35: #{ciafm_forward.7} parent=31 // pred_region
        %s543 = smul.u32 2, %s19
      $region36: #{ciafm_forward.7} parent=31 // pred_fallthru
        _
    $region32: #{ciafm_forward.7} parent=5 // pred_fallthru
      _
    %p544 = scmp.le.s32.totalorder 2, %s9
    // Predicated region
    $region37: #{ciafm_forward.7} parent=5 // pred_check
      %p545 = pneg %p544
    $region38: #{ciafm_forward.7} parent=5 // pred_check_branch
      %547 = sbr.rel (%p545) target = $region40
    $region39: #{ciafm_forward.7} parent=5 // pred_region
      %s548 = ssub.s32 %s9, 2
      // Predicated region
      $region41: #{ciafm_forward.7} parent=39 // pred_check
        %p549 = pneg %p122
      $region42: #{ciafm_forward.7} parent=39 // pred_check_branch
        %551 = sbr.rel (%p549) target = $region44
      $region43: #{ciafm_forward.7} parent=39 // pred_region
        %s552 = smul.u32 2, %s21
        %p553 = scmp.lt.s32.totalorder %s20, 1
        %s554 = scalar_select %p553, %s20, 1
        %p555 = scmp.lt.s32.totalorder %s552, 1
        %s556 = scalar_select %p555, %s552, 1
        %s557 = smul.addr %s554, 2
        %s558 = sadd.s32 %s556, %s557
        %s559 = smul.addr %s558, 4
        %s560 = scalar_lea.vmem %s3, %s559
      $region44: #{ciafm_forward.7} parent=39 // pred_fallthru
        _
    $region40: #{ciafm_forward.7} parent=5 // pred_fallthru
      _
  $region6: #{ciafm_forward.7} parent=0 // loop_footer
    %s13 = sadd.s32 1, %s9
  $region7: #{ciafm_forward.7} parent=0 // loop_footer_branch
    %8 = sbr.rel target = $region3
  $region8: #{ciafm_forward.7} parent=0 // loop_exit
    _

// kernel: ciafm_forward.9
$region0: #{ciafm_forward.9}
  #allocation0 [shape = 'u32[]', space=smem, size = 0x4, offset = 0x4, fixed_abs, tag = 'smem constant byte address 0x4 - core index']
  #allocation1 [shape = 'u32[144,128]{1,0:T(1,128)}', space=vmem, size = 0x12000, scoped, tag = 'internal scratch']
  #allocation2 [shape = 'f32[256,8]{1,0:T(8,128)}', space=vmem, size = 0x20000, scoped, tag = 'scratch operand']
  %s0 = inlined_call_operand.vmem [shape: bf16[2,8,256], index: 0, kind: input, shape index: {}]
  %s1 = inlined_call_operand.vmem [shape: bf16[2,16,128], index: 1, kind: input, shape index: {}]
  %s2 = inlined_call_operand.vmem [shape: bf16[2,8,256], index: 2, kind: output, shape index: {}]
  %s3 = sld [smem:[#allocation0]]
  $region49: #{ciafm_forward.9} parent=0
    _
  %s5 = ssub.s32 1, %s3
  %s6 = scalar_select 0, %s5, %s3
  loop: start=0, step=1, limit=4
  $region2: #{ciafm_forward.9} parent=0 // loop_pre_header
    _
  $region3: #{ciafm_forward.9} parent=0 // loop_header
    %s8 = sphi 0, %s12
    %p9 = scmp.ge.s32.totalorder %s8, 4
    %s15 = sphi 0, %s27
    %s16 = sphi 0, %s23
    %s17 = sphi 0, %s15
    %s18 = sphi 0, %s16
    %s19 = sphi 0, %s17
    %s20 = sphi 0, %s18
    %s30 = sphi 0, %s32
    %s33 = sphi 0, %s30
    %s34 = sphi 0, %s33
    %s50 = sphi 0, %s34
    %s58 = sphi 0, %s60
    %s61 = sphi 0, %s58
    %s62 = sphi 0, %s61
    %s78 = sphi 0, %s62
    %s84 = sphi 0, %s86
    %s87 = sphi 0, %s84
    %s88 = sphi 0, %s87
    %s104 = sphi 0, %s88
  $region4: #{ciafm_forward.9} parent=0 // loop_header_branch
    %11 = sbr.rel (%p9) target = $region8
  $region5: #{ciafm_forward.9} parent=0 // loop_body
    %s13 = ssub.s32 %s8, 1
    %s14 = ssub.s32 %s8, 2
    %s21 = sadd.s32 1, %s16
    %p22 = scmp.ge.s32.totalorder %s21, 1
    %s23 = scalar_select %p22, 0, %s21
    %s24 = sadd.s32 1, %s15
    %s25 = scalar_select %p22, %s24, %s15
    %p26 = scmp.ge.s32.totalorder %s25, 2
    %s27 = scalar_select %p26, 0, %s25
    %s28 = ssub.s32 %s15, %s27
    %p29 = scmp.eq.s32.totalorder %s28, 0
    %s31 = sadd.s32 %s30, 1
    %s32 = scalar_select %p29, %s30, %s31
    %p35 = pneg %p29
    %p36 = scmp.eq.s32.totalorder %s8, 1
    %p37 = por %p35, %p36
    %p38 = scmp.ne.s32.totalorder %s30, %s33
    %p39 = scmp.eq.s32.totalorder %s8, 0
    %p40 = por %p38, %p39
    %p41 = scmp.ne.s32.totalorder %s30, %s33
    %p42 = scmp.eq.s32.totalorder %s13, 1
    %p43 = por %p41, %p42
    %p44 = scmp.ne.s32.totalorder %s33, %s34
    %p45 = scmp.eq.s32.totalorder %s13, 0
    %p46 = por %p44, %p45
    %p47 = scmp.ne.s32.totalorder %s33, %s34
    %p48 = scmp.eq.s32.totalorder %s14, 1
    %p49 = por %p47, %p48
    %p51 = scmp.ne.s32.totalorder %s34, %s50
    %p52 = scmp.eq.s32.totalorder %s14, 0
    %p53 = por %p51, %p52
    %s54 = ssub.s32 %s15, %s27
    %s55 = ssub.s32 %s16, %s23
    %s56 = sor.u32 %s54, %s55
    %p57 = scmp.eq.s32.totalorder %s56, 0
    %s59 = sadd.s32 %s58, 1
    %s60 = scalar_select %p57, %s58, %s59
    %p63 = pneg %p57
    %p64 = scmp.eq.s32.totalorder %s8, 1
    %p65 = por %p63, %p64
    %p66 = scmp.ne.s32.totalorder %s58, %s61
    %p67 = scmp.eq.s32.totalorder %s8, 0
    %p68 = por %p66, %p67
    %p69 = scmp.ne.s32.totalorder %s58, %s61
    %p70 = scmp.eq.s32.totalorder %s13, 1
    %p71 = por %p69, %p70
    %p72 = scmp.ne.s32.totalorder %s61, %s62
    %p73 = scmp.eq.s32.totalorder %s13, 0
    %p74 = por %p72, %p73
    %p75 = scmp.ne.s32.totalorder %s61, %s62
    %p76 = scmp.eq.s32.totalorder %s14, 1
    %p77 = por %p75, %p76
    %p79 = scmp.ne.s32.totalorder %s62, %s78
    %p80 = scmp.eq.s32.totalorder %s14, 0
    %p81 = por %p79, %p80
    %s82 = ssub.s32 %s15, %s27
    %p83 = scmp.eq.s32.totalorder %s82, 0
    %s85 = sadd.s32 %s84, 1
    %s86 = scalar_select %p83, %s84, %s85
    %p89 = pneg %p83
    %p90 = scmp.eq.s32.totalorder %s8, 1
    %p91 = por %p89, %p90
    %p92 = scmp.ne.s32.totalorder %s84, %s87
    %p93 = scmp.eq.s32.totalorder %s8, 0
    %p94 = por %p92, %p93
    %p95 = scmp.ne.s32.totalorder %s84, %s87
    %p96 = scmp.eq.s32.totalorder %s13, 1
    %p97 = por %p95, %p96
    %p98 = scmp.ne.s32.totalorder %s87, %s88
    %p99 = scmp.eq.s32.totalorder %s13, 0
    %p100 = por %p98, %p99
    %p101 = scmp.ne.s32.totalorder %s87, %s88
    %p102 = scmp.eq.s32.totalorder %s14, 1
    %p103 = por %p101, %p102
    %p105 = scmp.ne.s32.totalorder %s88, %s104
    %p106 = scmp.eq.s32.totalorder %s14, 0
    %p107 = por %p105, %p106
    %p108 = scmp.le.s32.totalorder 1, %s8
    %p109 = scmp.lt.s32.totalorder %s8, 3
    %p110 = pnand %p108, %p109
    %p111 = pneg %p110
    // Predicated region
    $region9: #{ciafm_forward.9} parent=5 // pred_check
      _
    $region10: #{ciafm_forward.9} parent=5 // pred_check_branch
      %113 = sbr.rel (%p110) target = $region12
    $region11: #{ciafm_forward.9} parent=5 // pred_region
      %s114 = ssub.s32 %s8, 1
    $region12: #{ciafm_forward.9} parent=5 // pred_fallthru
      _
    %p115 = scmp.lt.s32.totalorder %s8, 2
    // Predicated region
    $region13: #{ciafm_forward.9} parent=5 // pred_check
      %p116 = pneg %p115
    $region14: #{ciafm_forward.9} parent=5 // pred_check_branch
      %118 = sbr.rel (%p116) target = $region16
    $region15: #{ciafm_forward.9} parent=5 // pred_region
      // Predicated region
      $region17: #{ciafm_forward.9} parent=15 // pred_check
        %p119 = pneg %p40
      $region18: #{ciafm_forward.9} parent=15 // pred_check_branch
        %121 = sbr.rel (%p119) target = $region20
      $region19: #{ciafm_forward.9} parent=15 // pred_region
        %p122 = scmp.lt.s32.totalorder %s15, 1
        %s123 = scalar_select %p122, %s15, 1
        %s124 = smul.addr %s123, 2
        %s125 = smul.addr %s124, 4
        %s126 = scalar_lea.vmem %s0, %s125
      $region20: #{ciafm_forward.9} parent=15 // pred_fallthru
        _
      // Predicated region
      $region21: #{ciafm_forward.9} parent=15 // pred_check
        %p127 = pneg %p68
      $region22: #{ciafm_forward.9} parent=15 // pred_check_branch
        %129 = sbr.rel (%p127) target = $region24
      $region23: #{ciafm_forward.9} parent=15 // pred_region
        %p130 = scmp.lt.s32.totalorder %s15, 1
        %s131 = scalar_select %p130, %s15, 1
        %p132 = scmp.lt.s32.totalorder %s16, 0
        %s133 = scalar_select %p132, %s16, 0
        %s134 = smul.addr %s131, 2
        %s135 = sadd.s32 %s133, %s134
        %s136 = smul.addr %s135, 4
        %s137 = scalar_lea.vmem %s1, %s136
      $region24: #{ciafm_forward.9} parent=15 // pred_fallthru
        _
    $region16: #{ciafm_forward.9} parent=5 // pred_fallthru
      _
    %p138 = scmp.le.s32.totalorder 1, %s8
    %p139 = scmp.lt.s32.totalorder %s8, 3
    %p140 = pnand %p138, %p139
    %p141 = pneg %p140
    // Predicated region
    $region25: #{ciafm_forward.9} parent=5 // pred_check
      _
    $region26: #{ciafm_forward.9} parent=5 // pred_check_branch
      %143 = sbr.rel (%p140) target = $region28
    $region27: #{ciafm_forward.9} parent=5 // pred_region
      %s144 = ssub.s32 %s8, 1
      %p145 = scmp.lt.s32.totalorder %s17, 1
      %s146 = scalar_select %p145, %s17, 1
      %s147 = smul.addr %s146, 2
      %s148 = smul.addr %s147, 4
      %s149 = scalar_lea.vmem %s0, %s148
      %p150 = pneg %p46
      %p151 = pneg %p43
      %p152 = scmp.lt.s32.totalorder %s17, 1
      %s153 = scalar_select %p152, %s17, 1
      %p154 = scmp.lt.s32.totalorder %s18, 0
      %s155 = scalar_select %p154, %s18, 0
      %s156 = smul.addr %s153, 2
      %s157 = sadd.s32 %s155, %s156
      %s158 = smul.addr %s157, 4
      %s159 = scalar_lea.vmem %s1, %s158
      %p160 = pneg %p74
      %p161 = pneg %p71
      %p162 = pneg %p100
      %p163 = pneg %p97
      %p164 = scmp.lt.s32.totalorder %s17, 1
      %s165 = scalar_select %p164, %s17, 1
      %s166 = smul.addr %s165, 2
      %s167 = smul.addr %s166, 4
      %s168 = scalar_lea.vmem %s2, %s167
      %p169 = scmp.lt.s32.totalorder %s17, 1
      %s170 = scalar_select %p169, %s17, 1
      %s171 = smul.addr %s170, 2
      %s172 = smul.addr %s171, 4
      %s173 = scalar_lea.vmem %s0, %s172
      %p174 = scmp.lt.s32.totalorder %s17, 1
      %s175 = scalar_select %p174, %s17, 1
      %p176 = scmp.lt.s32.totalorder %s18, 0
      %s177 = scalar_select %p176, %s18, 0
      %s178 = smul.addr %s175, 2
      %s179 = sadd.s32 %s177, %s178
      %s180 = smul.addr %s179, 4
      %s181 = scalar_lea.vmem %s1, %s180
      %p182 = scmp.lt.s32.totalorder %s17, 1
      %s183 = scalar_select %p182, %s17, 1
      %s184 = smul.addr %s183, 2
      %s185 = smul.addr %s184, 4
      %s186 = scalar_lea.vmem %s2, %s185
      %p188 = scmp.eq.s32.totalorder %s18, 0
      // Predicated region
      $region29: #{ciafm_forward.9} parent=27 // pred_check
        %p189 = pneg %p188
      $region30: #{ciafm_forward.9} parent=27 // pred_check_branch
        %191 = sbr.rel (%p189) target = $region32
      $region31: #{ciafm_forward.9} parent=27 // pred_region
        %vm192 = vcmask 64512
        %193 = vst.msk [vmem:[#allocation2] sm:$0xff] %vm192, 0.0
        %194 = vst.msk [vmem:[#allocation2 + $0x8] sm:$0xff] %vm192, 0.0
        %195 = vst.msk [vmem:[#allocation2 + $0x10] sm:$0xff] %vm192, 0.0
        %196 = vst.msk [vmem:[#allocation2 + $0x18] sm:$0xff] %vm192, 0.0
        %197 = vst.msk [vmem:[#allocation2 + $0x20] sm:$0xff] %vm192, 0.0
        %198 = vst.msk [vmem:[#allocation2 + $0x28] sm:$0xff] %vm192, 0.0
        %199 = vst.msk [vmem:[#allocation2 + $0x30] sm:$0xff] %vm192, 0.0
        %200 = vst.msk [vmem:[#allocation2 + $0x38] sm:$0xff] %vm192, 0.0
        %201 = vst.msk [vmem:[#allocation2 + $0x40] sm:$0xff] %vm192, 0.0
        %202 = vst.msk [vmem:[#allocation2 + $0x48] sm:$0xff] %vm192, 0.0
        %203 = vst.msk [vmem:[#allocation2 + $0x50] sm:$0xff] %vm192, 0.0
        %204 = vst.msk [vmem:[#allocation2 + $0x58] sm:$0xff] %vm192, 0.0
        %205 = vst.msk [vmem:[#allocation2 + $0x60] sm:$0xff] %vm192, 0.0
        %206 = vst.msk [vmem:[#allocation2 + $0x68] sm:$0xff] %vm192, 0.0
        %207 = vst.msk [vmem:[#allocation2 + $0x70] sm:$0xff] %vm192, 0.0
        %208 = vst.msk [vmem:[#allocation2 + $0x78] sm:$0xff] %vm192, 0.0
        %209 = vst.msk [vmem:[#allocation2 + $0x80] sm:$0xff] %vm192, 0.0
        %210 = vst.msk [vmem:[#allocation2 + $0x88] sm:$0xff] %vm192, 0.0
        %211 = vst.msk [vmem:[#allocation2 + $0x90] sm:$0xff] %vm192, 0.0
        %212 = vst.msk [vmem:[#allocation2 + $0x98] sm:$0xff] %vm192, 0.0
        %213 = vst.msk [vmem:[#allocation2 + $0xa0] sm:$0xff] %vm192, 0.0
        %214 = vst.msk [vmem:[#allocation2 + $0xa8] sm:$0xff] %vm192, 0.0
        %215 = vst.msk [vmem:[#allocation2 + $0xb0] sm:$0xff] %vm192, 0.0
        %216 = vst.msk [vmem:[#allocation2 + $0xb8] sm:$0xff] %vm192, 0.0
        %217 = vst.msk [vmem:[#allocation2 + $0xc0] sm:$0xff] %vm192, 0.0
        %218 = vst.msk [vmem:[#allocation2 + $0xc8] sm:$0xff] %vm192, 0.0
        %219 = vst.msk [vmem:[#allocation2 + $0xd0] sm:$0xff] %vm192, 0.0
        %220 = vst.msk [vmem:[#allocation2 + $0xd8] sm:$0xff] %vm192, 0.0
        %221 = vst.msk [vmem:[#allocation2 + $0xe0] sm:$0xff] %vm192, 0.0
        %222 = vst.msk [vmem:[#allocation2 + $0xe8] sm:$0xff] %vm192, 0.0
        %223 = vst.msk [vmem:[#allocation2 + $0xf0] sm:$0xff] %vm192, 0.0
        %224 = vst.msk [vmem:[#allocation2 + $0xf8] sm:$0xff] %vm192, 0.0
      $region32: #{ciafm_forward.9} parent=27 // pred_fallthru
        _
      %v225 = vld [vmem:[%s173] sm:$0xff]
      %v226 = vld [vmem:[%s181] sm:$0xf]
      %v227 = vld [vmem:[%s181 + $0x4] sm:$0xf]
      %v228 = vunpack.c.l.bf16 %v226
      %v229 = vmul.f32 %v228, 0.35355338
      %v230 = vpack.c.bf16 %v229, %v229
      %v231 = vlaneseq
      %v232 = vand.u32 %v231, 127
      %s233 = smul.u32 %s18, 128
      %v234 = vstv %s233
      %v235 = vadd.s32 %v232, %v234
      %vm236 = vcmp.lt.s32.totalorder %v235, 64
      %v237 = vsel %vm236, 1, 0
      %vm238 = vcmp.eq.s32.totalorder %v237, 1
      %vm239 = vmpackc.low %vm238, %vm238
      %v240 = vsel %vm239, %v227, 0
      %v242 = vunpack.c.l.b16 %v225
      %v243 = vunpack.c.h.b16 %v225
      %v244 = vpack.c.b16 %v242, %v242
      %v245 = vpack.c.b16 %v243, %v243
      %248 = vxpose.xlu0.c.b16.start [1/8] %v244, 128
      %249 = vxpose.xlu0.c.b16.cont [2/8] 0, 128
      %250 = vxpose.xlu0.c.b16.cont [3/8] 0, 128
      %251 = vxpose.xlu0.c.b16.cont [4/8] 0, 128
      %252 = vxpose.xlu0.c.b16.cont [5/8] 0, 128
      %253 = vxpose.xlu0.c.b16.cont [6/8] 0, 128
      %254 = vxpose.xlu0.c.b16.cont [7/8] 0, 128
      %255 = vxpose.xlu0.c.b16.end [8/8] 0, 128
      %v256 = vpop.trf.xlu0
      %v257 = vpop.trf.xlu0
      %v258 = vpop.trf.xlu0
      %v259 = vpop.trf.xlu0
      %v260 = vpop.trf.xlu0
      %v261 = vpop.trf.xlu0
      %v262 = vpop.trf.xlu0
      %v263 = vpop.trf.xlu0
      %264 = vxpose.xlu0.c.b16.start [1/8] %v245, 128
      %265 = vxpose.xlu0.c.b16.cont [2/8] 0, 128
      %266 = vxpose.xlu0.c.b16.cont [3/8] 0, 128
      %267 = vxpose.xlu0.c.b16.cont [4/8] 0, 128
      %268 = vxpose.xlu0.c.b16.cont [5/8] 0, 128
      %269 = vxpose.xlu0.c.b16.cont [6/8] 0, 128
      %270 = vxpose.xlu0.c.b16.cont [7/8] 0, 128
      %271 = vxpose.xlu0.c.b16.end [8/8] 0, 128
      %v272 = vpop.trf.xlu0
      %v273 = vpop.trf.xlu0
      %v274 = vpop.trf.xlu0
      %v275 = vpop.trf.xlu0
      %v276 = vpop.trf.xlu0
      %v277 = vpop.trf.xlu0
      %v278 = vpop.trf.xlu0
      %v279 = vpop.trf.xlu0
      %vm280 = vcmask 64512
      %v282 = vsel %vm280, %v256, 0
      %v285 = vsel %vm280, %v257, 0
      %v288 = vsel %vm280, %v258, 0
      %v291 = vsel %vm280, %v259, 0
      %v294 = vsel %vm280, %v260, 0
      %v297 = vsel %vm280, %v261, 0
      %v300 = vsel %vm280, %v262, 0
      %v303 = vsel %vm280, %v263, 0
      %v306 = vsel %vm280, %v272, 0
      %v309 = vsel %vm280, %v273, 0
      %v312 = vsel %vm280, %v274, 0
      %v315 = vsel %vm280, %v275, 0
      %v318 = vsel %vm280, %v276, 0
      %v321 = vsel %vm280, %v277, 0
      %v324 = vsel %vm280, %v278, 0
      %v327 = vsel %vm280, %v279, 0
      %vm329 = vcmask 1043456
      %v331 = vsel %vm329, %v230, 0
      %333 = vmatprep.subr.bf16.mxu0 0
      %334 = vmatpush1.bf16.msra.mxu0 0
      %335 = vmatprep.subr.bf16.mxu0 0
      %336 = vmatpush1.bf16.msra.mxu0 0
      %337 = vmatprep.subr.bf16.mxu0 0
      %338 = vmatpush1.bf16.msra.mxu0 0
      %339 = vmatprep.subr.bf16.mxu0 0
      %340 = vmatpush1.bf16.msra.mxu0 0
      %341 = vmatprep.subr.bf16.mxu0 0
      %342 = vmatpush1.bf16.msra.mxu0 0
      %343 = vmatprep.subr.bf16.mxu0 0
      %344 = vmatpush1.bf16.msra.mxu0 0
      %345 = vmatprep.subr.bf16.mxu0 0
      %346 = vmatpush1.bf16.msra.mxu0 0
      %347 = vmatprep.subr.bf16.mxu0 0
      %348 = vmatpush1.bf16.msra.mxu0 %v331
      %349 = vmatprep.subr.bf16.mxu0 0
      %350 = vmatpush2.bf16.msra.mxu0 0
      %351 = vmatprep.subr.bf16.mxu0 0
      %352 = vmatpush2.bf16.msra.mxu0 0
      %353 = vmatprep.subr.bf16.mxu0 0
      %354 = vmatpush2.bf16.msra.mxu0 0
      %355 = vmatprep.subr.bf16.mxu0 0
      %356 = vmatpush2.bf16.msra.mxu0 0
      %357 = vmatprep.subr.bf16.mxu0 0
      %358 = vmatpush2.bf16.msra.mxu0 0
      %359 = vmatprep.subr.bf16.mxu0 0
      %360 = vmatpush2.bf16.msra.mxu0 0
      %361 = vmatprep.subr.bf16.mxu0 0
      %362 = vmatpush2.bf16.msra.mxu0 0
      %363 = vmatprep.subr.bf16.mxu0 0
      %364 = vmatpush2.bf16.msra.mxu0 0
      %365 = vmatprep.mubr.bf16.mxu0 0
      %366 = vmatmul.mubr.bf16.gmra.mxu0 %v282
      %v367 = vpop.f32.mrf.mxu0
      %v368 = vadd.f32 0.0, %v367
      %v369 = vpop.f32.mrf.mxu0
      %v370 = vpop.f32.mrf.mxu0
      %v371 = vadd.f32 0.0, %v370
      %v372 = vpop.f32.mrf.mxu0
      %373 = vmatprep.mubr.bf16.mxu0 0
      %374 = vmatmul.mubr.bf16.gmra.mxu0 %v285
      %v375 = vpop.f32.mrf.mxu0
      %v376 = vadd.f32 0.0, %v375
      %v377 = vpop.f32.mrf.mxu0
      %v378 = vpop.f32.mrf.mxu0
      %v379 = vadd.f32 0.0, %v378
      %v380 = vpop.f32.mrf.mxu0
      %381 = vmatprep.mubr.bf16.mxu0 0
      %382 = vmatmul.mubr.bf16.gmra.mxu0 %v288
      %v383 = vpop.f32.mrf.mxu0
      %v384 = vadd.f32 0.0, %v383
      %v385 = vpop.f32.mrf.mxu0
      %v386 = vpop.f32.mrf.mxu0
      %v387 = vadd.f32 0.0, %v386
      %v388 = vpop.f32.mrf.mxu0
      %389 = vmatprep.mubr.bf16.mxu0 0
      %390 = vmatmul.mubr.bf16.gmra.mxu0 %v291
      %v391 = vpop.f32.mrf.mxu0
      %v392 = vadd.f32 0.0, %v391
      %v393 = vpop.f32.mrf.mxu0
      %v394 = vpop.f32.mrf.mxu0
      %v395 = vadd.f32 0.0, %v394
      %v396 = vpop.f32.mrf.mxu0
      %397 = vmatprep.mubr.bf16.mxu0 0
      %398 = vmatmul.mubr.bf16.gmra.mxu0 %v294
      %v399 = vpop.f32.mrf.mxu0
      %v400 = vadd.f32 0.0, %v399
      %v401 = vpop.f32.mrf.mxu0
      %v402 = vpop.f32.mrf.mxu0
      %v403 = vadd.f32 0.0, %v402
      %v404 = vpop.f32.mrf.mxu0
      %405 = vmatprep.mubr.bf16.mxu0 0
      %406 = vmatmul.mubr.bf16.gmra.mxu0 %v297
      %v407 = vpop.f32.mrf.mxu0
      %v408 = vadd.f32 0.0, %v407
      %v409 = vpop.f32.mrf.mxu0
      %v410 = vpop.f32.mrf.mxu0
      %v411 = vadd.f32 0.0, %v410
      %v412 = vpop.f32.mrf.mxu0
      %413 = vmatprep.mubr.bf16.mxu0 0
      %414 = vmatmul.mubr.bf16.gmra.mxu0 %v300
      %v415 = vpop.f32.mrf.mxu0
      %v416 = vadd.f32 0.0, %v415
      %v417 = vpop.f32.mrf.mxu0
      %v418 = vpop.f32.mrf.mxu0
      %v419 = vadd.f32 0.0, %v418
      %v420 = vpop.f32.mrf.mxu0
      %421 = vmatprep.mubr.bf16.mxu0 0
      %422 = vmatmul.mubr.bf16.gmra.mxu0 %v303
      %v423 = vpop.f32.mrf.mxu0
      %v424 = vadd.f32 0.0, %v423
      %v425 = vpop.f32.mrf.mxu0
      %v426 = vpop.f32.mrf.mxu0
      %v427 = vadd.f32 0.0, %v426
      %v428 = vpop.f32.mrf.mxu0
      %429 = vmatprep.mubr.bf16.mxu0 0
      %430 = vmatmul.mubr.bf16.gmra.mxu0 %v306
      %v431 = vpop.f32.mrf.mxu0
      %v432 = vadd.f32 0.0, %v431
      %v433 = vpop.f32.mrf.mxu0
      %v434 = vpop.f32.mrf.mxu0
      %v435 = vadd.f32 0.0, %v434
      %v436 = vpop.f32.mrf.mxu0
      %437 = vmatprep.mubr.bf16.mxu0 0
      %438 = vmatmul.mubr.bf16.gmra.mxu0 %v309
      %v439 = vpop.f32.mrf.mxu0
      %v440 = vadd.f32 0.0, %v439
      %v441 = vpop.f32.mrf.mxu0
      %v442 = vpop.f32.mrf.mxu0
      %v443 = vadd.f32 0.0, %v442
      %v444 = vpop.f32.mrf.mxu0
      %445 = vmatprep.mubr.bf16.mxu0 0
      %446 = vmatmul.mubr.bf16.gmra.mxu0 %v312
      %v447 = vpop.f32.mrf.mxu0
      %v448 = vadd.f32 0.0, %v447
      %v449 = vpop.f32.mrf.mxu0
      %v450 = vpop.f32.mrf.mxu0
      %v451 = vadd.f32 0.0, %v450
      %v452 = vpop.f32.mrf.mxu0
      %453 = vmatprep.mubr.bf16.mxu0 0
      %454 = vmatmul.mubr.bf16.gmra.mxu0 %v315
      %v455 = vpop.f32.mrf.mxu0
      %v456 = vadd.f32 0.0, %v455
      %v457 = vpop.f32.mrf.mxu0
      %v458 = vpop.f32.mrf.mxu0
      %v459 = vadd.f32 0.0, %v458
      %v460 = vpop.f32.mrf.mxu0
      %461 = vmatprep.mubr.bf16.mxu0 0
      %462 = vmatmul.mubr.bf16.gmra.mxu0 %v318
      %v463 = vpop.f32.mrf.mxu0
      %v464 = vadd.f32 0.0, %v463
      %v465 = vpop.f32.mrf.mxu0
      %v466 = vpop.f32.mrf.mxu0
      %v467 = vadd.f32 0.0, %v466
      %v468 = vpop.f32.mrf.mxu0
      %469 = vmatprep.mubr.bf16.mxu0 0
      %470 = vmatmul.mubr.bf16.gmra.mxu0 %v321
      %v471 = vpop.f32.mrf.mxu0
      %v472 = vadd.f32 0.0, %v471
      %v473 = vpop.f32.mrf.mxu0
      %v474 = vpop.f32.mrf.mxu0
      %v475 = vadd.f32 0.0, %v474
      %v476 = vpop.f32.mrf.mxu0
      %477 = vmatprep.mubr.bf16.mxu0 0
      %478 = vmatmul.mubr.bf16.gmra.mxu0 %v324
      %v479 = vpop.f32.mrf.mxu0
      %v480 = vadd.f32 0.0, %v479
      %v481 = vpop.f32.mrf.mxu0
      %v482 = vpop.f32.mrf.mxu0
      %v483 = vadd.f32 0.0, %v482
      %v484 = vpop.f32.mrf.mxu0
      %485 = vmatprep.mubr.bf16.mxu0 0
      %486 = vmatmul.mubr.bf16.gmra.mxu0 %v327
      %v487 = vpop.f32.mrf.mxu0
      %v488 = vadd.f32 0.0, %v487
      %v489 = vpop.f32.mrf.mxu0
      %v490 = vpop.f32.mrf.mxu0
      %v491 = vadd.f32 0.0, %v490
      %v492 = vpop.f32.mrf.mxu0
      %493 = vdwg.mxu0
      %v494 = vmax.f32 %v368, %v384
      %v495 = vmax.f32 %v371, %v387
      %v496 = vmax.f32 %v376, %v392
      %v497 = vmax.f32 %v379, %v395
      %v498 = vmax.f32 %v494, %v400
      %v499 = vmax.f32 %v495, %v403
      %v500 = vmax.f32 %v496, %v408
      %v501 = vmax.f32 %v497, %v411
      %v502 = vmax.f32 %v498, %v416
      %v503 = vmax.f32 %v499, %v419
      %v504 = vmax.f32 %v500, %v424
      %v505 = vmax.f32 %v501, %v427
      %v506 = vmax.f32 %v502, %v432
      %v507 = vmax.f32 %v503, %v435
      %v508 = vmax.f32 %v504, %v440
      %v509 = vmax.f32 %v505, %v443
      %v510 = vmax.f32 %v506, %v448
      %v511 = vmax.f32 %v507, %v451
      %v512 = vmax.f32 %v508, %v456
      %v513 = vmax.f32 %v509, %v459
      %v514 = vmax.f32 %v510, %v464
      %v515 = vmax.f32 %v511, %v467
      %v516 = vmax.f32 %v512, %v472
      %v517 = vmax.f32 %v513, %v475
      %v518 = vmax.f32 %v514, %v480
      %v519 = vmax.f32 %v515, %v483
      %v520 = vmax.f32 %v516, %v488
      %v521 = vmax.f32 %v517, %v491
      %v522 = vmax.f32 %v518, %v519
      %v523 = vmax.f32 %v520, %v521
      %v524 = vmax.f32 %v522, %v523
      %v525 = vrot.slane %v524, 4
      %v526 = vmax.f32 %v524, %v525
      %v527 = vrot.slane %v526, 2
      %v528 = vmax.f32 %v526, %v527
      %v529 = vrot.slane %v528, 1
      %v530 = vmax.f32 %v528, %v529
      %v531 = vsub.f32 %v368, %v530
      %v532 = vsub.f32 %v371, %v530
      %v533 = vsub.f32 %v376, %v530
      %v534 = vsub.f32 %v379, %v530
      %v535 = vsub.f32 %v384, %v530
      %v536 = vsub.f32 %v387, %v530
      %v537 = vsub.f32 %v392, %v530
      %v538 = vsub.f32 %v395, %v530
      %v539 = vsub.f32 %v400, %v530
      %v540 = vsub.f32 %v403, %v530
      %v541 = vsub.f32 %v408, %v530
      %v542 = vsub.f32 %v411, %v530
      %v543 = vsub.f32 %v416, %v530
      %v544 = vsub.f32 %v419, %v530
      %v545 = vsub.f32 %v424, %v530
      %v546 = vsub.f32 %v427, %v530
      %v547 = vsub.f32 %v432, %v530
      %v548 = vsub.f32 %v435, %v530
      %v549 = vsub.f32 %v440, %v530
      %v550 = vsub.f32 %v443, %v530
      %v551 = vsub.f32 %v448, %v530
      %v552 = vsub.f32 %v451, %v530
      %v553 = vsub.f32 %v456, %v530
      %v554 = vsub.f32 %v459, %v530
      %v555 = vsub.f32 %v464, %v530
      %v556 = vsub.f32 %v467, %v530
      %v557 = vsub.f32 %v472, %v530
      %v558 = vsub.f32 %v475, %v530
      %v559 = vsub.f32 %v480, %v530
      %v560 = vsub.f32 %v483, %v530
      %v561 = vsub.f32 %v488, %v530
      %v562 = vsub.f32 %v491, %v530
      %v563 = vmul.f32 %v531, 1.442695
      %v564 = vpow.pop %v563
      %v565 = vmul.f32 %v532, 1.442695
      %v566 = vpow.pop %v565
      %v567 = vmul.f32 %v533, 1.442695
      %v568 = vpow.pop %v567
      %v569 = vmul.f32 %v534, 1.442695
      %v570 = vpow.pop %v569
      %v571 = vmul.f32 %v535, 1.442695
      %v572 = vpow.pop %v571
      %v573 = vmul.f32 %v536, 1.442695
      %v574 = vpow.pop %v573
      %v575 = vmul.f32 %v537, 1.442695
      %v576 = vpow.pop %v575
      %v577 = vmul.f32 %v538, 1.442695
      %v578 = vpow.pop %v577
      %v579 = vmul.f32 %v539, 1.442695
      %v580 = vpow.pop %v579
      %v581 = vmul.f32 %v540, 1.442695
      %v582 = vpow.pop %v581
      %v583 = vmul.f32 %v541, 1.442695
      %v584 = vpow.pop %v583
      %v585 = vmul.f32 %v542, 1.442695
      %v586 = vpow.pop %v585
      %v587 = vmul.f32 %v543, 1.442695
      %v588 = vpow.pop %v587
      %v589 = vmul.f32 %v544, 1.442695
      %v590 = vpow.pop %v589
      %v591 = vmul.f32 %v545, 1.442695
      %v592 = vpow.pop %v591
      %v593 = vmul.f32 %v546, 1.442695
      %v594 = vpow.pop %v593
      %v595 = vmul.f32 %v547, 1.442695
      %v596 = vpow.pop %v595
      %v597 = vmul.f32 %v548, 1.442695
      %v598 = vpow.pop %v597
      %v599 = vmul.f32 %v549, 1.442695
      %v600 = vpow.pop %v599
      %v601 = vmul.f32 %v550, 1.442695
      %v602 = vpow.pop %v601
      %v603 = vmul.f32 %v551, 1.442695
      %v604 = vpow.pop %v603
      %v605 = vmul.f32 %v552, 1.442695
      %v606 = vpow.pop %v605
      %v607 = vmul.f32 %v553, 1.442695
      %v608 = vpow.pop %v607
      %v609 = vmul.f32 %v554, 1.442695
      %v610 = vpow.pop %v609
      %v611 = vmul.f32 %v555, 1.442695
      %v612 = vpow.pop %v611
      %v613 = vmul.f32 %v556, 1.442695
      %v614 = vpow.pop %v613
      %v615 = vmul.f32 %v557, 1.442695
      %v616 = vpow.pop %v615
      %v617 = vmul.f32 %v558, 1.442695
      %v618 = vpow.pop %v617
      %v619 = vmul.f32 %v559, 1.442695
      %v620 = vpow.pop %v619
      %v621 = vmul.f32 %v560, 1.442695
      %v622 = vpow.pop %v621
      %v623 = vmul.f32 %v561, 1.442695
      %v624 = vpow.pop %v623
      %v625 = vmul.f32 %v562, 1.442695
      %v626 = vpow.pop %v625
      %v627 = vadd.f32 %v564, %v566
      %v628 = vadd.f32 %v627, %v568
      %v629 = vadd.f32 %v628, %v570
      %v630 = vadd.f32 %v629, %v572
      %v631 = vadd.f32 %v630, %v574
      %v632 = vadd.f32 %v631, %v576
      %v633 = vadd.f32 %v632, %v578
      %v634 = vadd.f32 %v633, %v580
      %v635 = vadd.f32 %v634, %v582
      %v636 = vadd.f32 %v635, %v584
      %v637 = vadd.f32 %v636, %v586
      %v638 = vadd.f32 %v637, %v588
      %v639 = vadd.f32 %v638, %v590
      %v640 = vadd.f32 %v639, %v592
      %v641 = vadd.f32 %v640, %v594
      %v642 = vadd.f32 %v641, %v596
      %v643 = vadd.f32 %v642, %v598
      %v644 = vadd.f32 %v643, %v600
      %v645 = vadd.f32 %v644, %v602
      %v646 = vadd.f32 %v645, %v604
      %v647 = vadd.f32 %v646, %v606
      %v648 = vadd.f32 %v647, %v608
      %v649 = vadd.f32 %v648, %v610
      %v650 = vadd.f32 %v649, %v612
      %v651 = vadd.f32 %v650, %v614
      %v652 = vadd.f32 %v651, %v616
      %v653 = vadd.f32 %v652, %v618
      %v654 = vadd.f32 %v653, %v620
      %v655 = vadd.f32 %v654, %v622
      %v656 = vadd.f32 %v655, %v624
      %v657 = vadd.f32 %v656, %v626
      %v658 = vrot.slane %v657, 4
      %v659 = vadd.f32 %v657, %v658
      %v660 = vrot.slane %v659, 2
      %v661 = vadd.f32 %v659, %v660
      %v662 = vrot.slane %v661, 1
      %v663 = vadd.f32 %v661, %v662
      %v664 = vrcp.pop %v663
      %v665 = vmul.f32 %v564, %v664
      %v666 = vmul.f32 %v566, %v664
      %v667 = vmul.f32 %v568, %v664
      %v668 = vmul.f32 %v570, %v664
      %v669 = vmul.f32 %v572, %v664
      %v670 = vmul.f32 %v574, %v664
      %v671 = vmul.f32 %v576, %v664
      %v672 = vmul.f32 %v578, %v664
      %v673 = vmul.f32 %v580, %v664
      %v674 = vmul.f32 %v582, %v664
      %v675 = vmul.f32 %v584, %v664
      %v676 = vmul.f32 %v586, %v664
      %v677 = vmul.f32 %v588, %v664
      %v678 = vmul.f32 %v590, %v664
      %v679 = vmul.f32 %v592, %v664
      %v680 = vmul.f32 %v594, %v664
      %v681 = vmul.f32 %v596, %v664
      %v682 = vmul.f32 %v598, %v664
      %v683 = vmul.f32 %v600, %v664
      %v684 = vmul.f32 %v602, %v664
      %v685 = vmul.f32 %v604, %v664
      %v686 = vmul.f32 %v606, %v664
      %v687 = vmul.f32 %v608, %v664
      %v688 = vmul.f32 %v610, %v664
      %v689 = vmul.f32 %v612, %v664
      %v690 = vmul.f32 %v614, %v664
      %v691 = vmul.f32 %v616, %v664
      %v692 = vmul.f32 %v618, %v664
      %v693 = vmul.f32 %v620, %v664
      %v694 = vmul.f32 %v622, %v664
      %v695 = vmul.f32 %v624, %v664
      %v696 = vmul.f32 %v626, %v664
      %v697 = vld [vmem:[#allocation2] sm:$0xff]
      %v698 = vld [vmem:[#allocation2 + $0x8] sm:$0xff]
      %v699 = vld [vmem:[#allocation2 + $0x10] sm:$0xff]
      %v700 = vld [vmem:[#allocation2 + $0x18] sm:$0xff]
      %v701 = vld [vmem:[#allocation2 + $0x20] sm:$0xff]
      %v702 = vld [vmem:[#allocation2 + $0x28] sm:$0xff]
      %v703 = vld [vmem:[#allocation2 + $0x30] sm:$0xff]
      %v704 = vld [vmem:[#allocation2 + $0x38] sm:$0xff]
      %v705 = vld [vmem:[#allocation2 + $0x40] sm:$0xff]
      %v706 = vld [vmem:[#allocation2 + $0x48] sm:$0xff]
      %v707 = vld [vmem:[#allocation2 + $0x50] sm:$0xff]
      %v708 = vld [vmem:[#allocation2 + $0x58] sm:$0xff]
      %v709 = vld [vmem:[#allocation2 + $0x60] sm:$0xff]
      %v710 = vld [vmem:[#allocation2 + $0x68] sm:$0xff]
      %v711 = vld [vmem:[#allocation2 + $0x70] sm:$0xff]
      %v712 = vld [vmem:[#allocation2 + $0x78] sm:$0xff]
      %v713 = vld [vmem:[#allocation2 + $0x80] sm:$0xff]
      %v714 = vld [vmem:[#allocation2 + $0x88] sm:$0xff]
      %v715 = vld [vmem:[#allocation2 + $0x90] sm:$0xff]
      %v716 = vld [vmem:[#allocation2 + $0x98] sm:$0xff]
      %v717 = vld [vmem:[#allocation2 + $0xa0] sm:$0xff]
      %v718 = vld [vmem:[#allocation2 + $0xa8] sm:$0xff]
      %v719 = vld [vmem:[#allocation2 + $0xb0] sm:$0xff]
      %v720 = vld [vmem:[#allocation2 + $0xb8] sm:$0xff]
      %v721 = vld [vmem:[#allocation2 + $0xc0] sm:$0xff]
      %v722 = vld [vmem:[#allocation2 + $0xc8] sm:$0xff]
      %v723 = vld [vmem:[#allocation2 + $0xd0] sm:$0xff]
      %v724 = vld [vmem:[#allocation2 + $0xd8] sm:$0xff]
      %v725 = vld [vmem:[#allocation2 + $0xe0] sm:$0xff]
      %v726 = vld [vmem:[#allocation2 + $0xe8] sm:$0xff]
      %v727 = vld [vmem:[#allocation2 + $0xf0] sm:$0xff]
      %v728 = vld [vmem:[#allocation2 + $0xf8] sm:$0xff]
      %v729 = vpack.c.bf16 %v666, %v665
      %v730 = vpack.c.bf16 %v668, %v667
      %v731 = vpack.c.bf16 %v670, %v669
      %v732 = vpack.c.bf16 %v672, %v671
      %v733 = vpack.c.bf16 %v674, %v673
      %v734 = vpack.c.bf16 %v676, %v675
      %v735 = vpack.c.bf16 %v678, %v677
      %v736 = vpack.c.bf16 %v680, %v679
      %v737 = vpack.c.bf16 %v682, %v681
      %v738 = vpack.c.bf16 %v684, %v683
      %v739 = vpack.c.bf16 %v686, %v685
      %v740 = vpack.c.bf16 %v688, %v687
      %v741 = vpack.c.bf16 %v690, %v689
      %v742 = vpack.c.bf16 %v692, %v691
      %v743 = vpack.c.bf16 %v694, %v693
      %v744 = vpack.c.bf16 %v696, %v695
      %745 = vmatprep.subr.bf16.mxu0 0
      %746 = vmatpush1.bf16.xpose.msra.mxu0 0
      %747 = vmatprep.subr.bf16.mxu0 0
      %748 = vmatpush1.bf16.xpose.msra.mxu0 0
      %749 = vmatprep.subr.bf16.mxu0 0
      %750 = vmatpush1.bf16.xpose.msra.mxu0 0
      %751 = vmatprep.subr.bf16.mxu0 0
      %752 = vmatpush1.bf16.xpose.msra.mxu0 0
      %753 = vmatprep.subr.bf16.mxu0 0
      %754 = vmatpush1.bf16.xpose.msra.mxu0 0
      %755 = vmatprep.subr.bf16.mxu0 0
      %756 = vmatpush1.bf16.xpose.msra.mxu0 0
      %757 = vmatprep.subr.bf16.mxu0 0
      %758 = vmatpush1.bf16.xpose.msra.mxu0 0
      %759 = vmatprep.subr.bf16.mxu0 0
      %760 = vmatpush1.bf16.xpose.msra.mxu0 %v240
      %761 = vmatprep.subr.bf16.mxu0 0
      %762 = vmatpush2.bf16.xpose.msra.mxu0 0
      %763 = vmatprep.subr.bf16.mxu0 0
      %764 = vmatpush2.bf16.xpose.msra.mxu0 0
      %765 = vmatprep.subr.bf16.mxu0 0
      %766 = vmatpush2.bf16.xpose.msra.mxu0 0
      %767 = vmatprep.subr.bf16.mxu0 0
      %768 = vmatpush2.bf16.xpose.msra.mxu0 0
      %769 = vmatprep.subr.bf16.mxu0 0
      %770 = vmatpush2.bf16.xpose.msra.mxu0 0
      %771 = vmatprep.subr.bf16.mxu0 0
      %772 = vmatpush2.bf16.xpose.msra.mxu0 0
      %773 = vmatprep.subr.bf16.mxu0 0
      %774 = vmatpush2.bf16.xpose.msra.mxu0 0
      %775 = vmatprep.subr.bf16.mxu0 0
      %776 = vmatpush2.bf16.xpose.msra.mxu0 0
      %777 = vmatprep.mubr.bf16.mxu0 0
      %778 = vmatmul.mubr.bf16.gmra.mxu0 %v729
      %v779 = vpop.f32.mrf.mxu0
      %v780 = vadd.f32 0.0, %v779
      %v781 = vpop.f32.mrf.mxu0
      %v782 = vpop.f32.mrf.mxu0
      %v783 = vadd.f32 0.0, %v782
      %v784 = vpop.f32.mrf.mxu0
      %785 = vmatprep.mubr.bf16.mxu0 0
      %786 = vmatmul.mubr.bf16.gmra.mxu0 %v730
      %v787 = vpop.f32.mrf.mxu0
      %v788 = vadd.f32 0.0, %v787
      %v789 = vpop.f32.mrf.mxu0
      %v790 = vpop.f32.mrf.mxu0
      %v791 = vadd.f32 0.0, %v790
      %v792 = vpop.f32.mrf.mxu0
      %793 = vmatprep.mubr.bf16.mxu0 0
      %794 = vmatmul.mubr.bf16.gmra.mxu0 %v731
      %v795 = vpop.f32.mrf.mxu0
      %v796 = vadd.f32 0.0, %v795
      %v797 = vpop.f32.mrf.mxu0
      %v798 = vpop.f32.mrf.mxu0
      %v799 = vadd.f32 0.0, %v798
      %v800 = vpop.f32.mrf.mxu0
      %801 = vmatprep.mubr.bf16.mxu0 0
      %802 = vmatmul.mubr.bf16.gmra.mxu0 %v732
      %v803 = vpop.f32.mrf.mxu0
      %v804 = vadd.f32 0.0, %v803
      %v805 = vpop.f32.mrf.mxu0
      %v806 = vpop.f32.mrf.mxu0
      %v807 = vadd.f32 0.0, %v806
      %v808 = vpop.f32.mrf.mxu0
      %809 = vmatprep.mubr.bf16.mxu0 0
      %810 = vmatmul.mubr.bf16.gmra.mxu0 %v733
      %v811 = vpop.f32.mrf.mxu0
      %v812 = vadd.f32 0.0, %v811
      %v813 = vpop.f32.mrf.mxu0
      %v814 = vpop.f32.mrf.mxu0
      %v815 = vadd.f32 0.0, %v814
      %v816 = vpop.f32.mrf.mxu0
      %817 = vmatprep.mubr.bf16.mxu0 0
      %818 = vmatmul.mubr.bf16.gmra.mxu0 %v734
      %v819 = vpop.f32.mrf.mxu0
      %v820 = vadd.f32 0.0, %v819
      %v821 = vpop.f32.mrf.mxu0
      %v822 = vpop.f32.mrf.mxu0
      %v823 = vadd.f32 0.0, %v822
      %v824 = vpop.f32.mrf.mxu0
      %825 = vmatprep.mubr.bf16.mxu0 0
      %826 = vmatmul.mubr.bf16.gmra.mxu0 %v735
      %v827 = vpop.f32.mrf.mxu0
      %v828 = vadd.f32 0.0, %v827
      %v829 = vpop.f32.mrf.mxu0
      %v830 = vpop.f32.mrf.mxu0
      %v831 = vadd.f32 0.0, %v830
      %v832 = vpop.f32.mrf.mxu0
      %833 = vmatprep.mubr.bf16.mxu0 0
      %834 = vmatmul.mubr.bf16.gmra.mxu0 %v736
      %v835 = vpop.f32.mrf.mxu0
      %v836 = vadd.f32 0.0, %v835
      %v837 = vpop.f32.mrf.mxu0
      %v838 = vpop.f32.mrf.mxu0
      %v839 = vadd.f32 0.0, %v838
      %v840 = vpop.f32.mrf.mxu0
      %841 = vmatprep.mubr.bf16.mxu0 0
      %842 = vmatmul.mubr.bf16.gmra.mxu0 %v737
      %v843 = vpop.f32.mrf.mxu0
      %v844 = vadd.f32 0.0, %v843
      %v845 = vpop.f32.mrf.mxu0
      %v846 = vpop.f32.mrf.mxu0
      %v847 = vadd.f32 0.0, %v846
      %v848 = vpop.f32.mrf.mxu0
      %849 = vmatprep.mubr.bf16.mxu0 0
      %850 = vmatmul.mubr.bf16.gmra.mxu0 %v738
      %v851 = vpop.f32.mrf.mxu0
      %v852 = vadd.f32 0.0, %v851
      %v853 = vpop.f32.mrf.mxu0
      %v854 = vpop.f32.mrf.mxu0
      %v855 = vadd.f32 0.0, %v854
      %v856 = vpop.f32.mrf.mxu0
      %857 = vmatprep.mubr.bf16.mxu0 0
      %858 = vmatmul.mubr.bf16.gmra.mxu0 %v739
      %v859 = vpop.f32.mrf.mxu0
      %v860 = vadd.f32 0.0, %v859
      %v861 = vpop.f32.mrf.mxu0
      %v862 = vpop.f32.mrf.mxu0
      %v863 = vadd.f32 0.0, %v862
      %v864 = vpop.f32.mrf.mxu0
      %865 = vmatprep.mubr.bf16.mxu0 0
      %866 = vmatmul.mubr.bf16.gmra.mxu0 %v740
      %v867 = vpop.f32.mrf.mxu0
      %v868 = vadd.f32 0.0, %v867
      %v869 = vpop.f32.mrf.mxu0
      %v870 = vpop.f32.mrf.mxu0
      %v871 = vadd.f32 0.0, %v870
      %v872 = vpop.f32.mrf.mxu0
      %873 = vmatprep.mubr.bf16.mxu0 0
      %874 = vmatmul.mubr.bf16.gmra.mxu0 %v741
      %v875 = vpop.f32.mrf.mxu0
      %v876 = vadd.f32 0.0, %v875
      %v877 = vpop.f32.mrf.mxu0
      %v878 = vpop.f32.mrf.mxu0
      %v879 = vadd.f32 0.0, %v878
      %v880 = vpop.f32.mrf.mxu0
      %881 = vmatprep.mubr.bf16.mxu0 0
      %882 = vmatmul.mubr.bf16.gmra.mxu0 %v742
      %v883 = vpop.f32.mrf.mxu0
      %v884 = vadd.f32 0.0, %v883
      %v885 = vpop.f32.mrf.mxu0
      %v886 = vpop.f32.mrf.mxu0
      %v887 = vadd.f32 0.0, %v886
      %v888 = vpop.f32.mrf.mxu0
      %889 = vmatprep.mubr.bf16.mxu0 0
      %890 = vmatmul.mubr.bf16.gmra.mxu0 %v743
      %v891 = vpop.f32.mrf.mxu0
      %v892 = vadd.f32 0.0, %v891
      %v893 = vpop.f32.mrf.mxu0
      %v894 = vpop.f32.mrf.mxu0
      %v895 = vadd.f32 0.0, %v894
      %v896 = vpop.f32.mrf.mxu0
      %897 = vmatprep.mubr.bf16.mxu0 0
      %898 = vmatmul.mubr.bf16.gmra.mxu0 %v744
      %v899 = vpop.f32.mrf.mxu0
      %v900 = vadd.f32 0.0, %v899
      %v901 = vpop.f32.mrf.mxu0
      %v902 = vpop.f32.mrf.mxu0
      %v903 = vadd.f32 0.0, %v902
      %v904 = vpop.f32.mrf.mxu0
      %905 = vdwg.mxu0
      %v906 = vadd.f32 %v697, %v780
      %v907 = vadd.f32 %v698, %v783
      %v908 = vadd.f32 %v699, %v788
      %v909 = vadd.f32 %v700, %v791
      %v910 = vadd.f32 %v701, %v796
      %v911 = vadd.f32 %v702, %v799
      %v912 = vadd.f32 %v703, %v804
      %v913 = vadd.f32 %v704, %v807
      %v914 = vadd.f32 %v705, %v812
      %v915 = vadd.f32 %v706, %v815
      %v916 = vadd.f32 %v707, %v820
      %v917 = vadd.f32 %v708, %v823
      %v918 = vadd.f32 %v709, %v828
      %v919 = vadd.f32 %v710, %v831
      %v920 = vadd.f32 %v711, %v836
      %v921 = vadd.f32 %v712, %v839
      %v922 = vadd.f32 %v713, %v844
      %v923 = vadd.f32 %v714, %v847
      %v924 = vadd.f32 %v715, %v852
      %v925 = vadd.f32 %v716, %v855
      %v926 = vadd.f32 %v717, %v860
      %v927 = vadd.f32 %v718, %v863
      %v928 = vadd.f32 %v719, %v868
      %v929 = vadd.f32 %v720, %v871
      %v930 = vadd.f32 %v721, %v876
      %v931 = vadd.f32 %v722, %v879
      %v932 = vadd.f32 %v723, %v884
      %v933 = vadd.f32 %v724, %v887
      %v934 = vadd.f32 %v725, %v892
      %v935 = vadd.f32 %v726, %v895
      %v936 = vadd.f32 %v727, %v900
      %v937 = vadd.f32 %v728, %v903
      %938 = vst.msk [vmem:[#allocation2] sm:$0xff] %vm280, %v906
      %939 = vst.msk [vmem:[#allocation2 + $0x8] sm:$0xff] %vm280, %v907
      %940 = vst.msk [vmem:[#allocation2 + $0x10] sm:$0xff] %vm280, %v908
      %941 = vst.msk [vmem:[#allocation2 + $0x18] sm:$0xff] %vm280, %v909
      %942 = vst.msk [vmem:[#allocation2 + $0x20] sm:$0xff] %vm280, %v910
      %943 = vst.msk [vmem:[#allocation2 + $0x28] sm:$0xff] %vm280, %v911
      %944 = vst.msk [vmem:[#allocation2 + $0x30] sm:$0xff] %vm280, %v912
      %945 = vst.msk [vmem:[#allocation2 + $0x38] sm:$0xff] %vm280, %v913
      %946 = vst.msk [vmem:[#allocation2 + $0x40] sm:$0xff] %vm280, %v914
      %947 = vst.msk [vmem:[#allocation2 + $0x48] sm:$0xff] %vm280, %v915
      %948 = vst.msk [vmem:[#allocation2 + $0x50] sm:$0xff] %vm280, %v916
      %949 = vst.msk [vmem:[#allocation2 + $0x58] sm:$0xff] %vm280, %v917
      %950 = vst.msk [vmem:[#allocation2 + $0x60] sm:$0xff] %vm280, %v918
      %951 = vst.msk [vmem:[#allocation2 + $0x68] sm:$0xff] %vm280, %v919
      %952 = vst.msk [vmem:[#allocation2 + $0x70] sm:$0xff] %vm280, %v920
      %953 = vst.msk [vmem:[#allocation2 + $0x78] sm:$0xff] %vm280, %v921
      %954 = vst.msk [vmem:[#allocation2 + $0x80] sm:$0xff] %vm280, %v922
      %955 = vst.msk [vmem:[#allocation2 + $0x88] sm:$0xff] %vm280, %v923
      %956 = vst.msk [vmem:[#allocation2 + $0x90] sm:$0xff] %vm280, %v924
      %957 = vst.msk [vmem:[#allocation2 + $0x98] sm:$0xff] %vm280, %v925
      %958 = vst.msk [vmem:[#allocation2 + $0xa0] sm:$0xff] %vm280, %v926
      %959 = vst.msk [vmem:[#allocation2 + $0xa8] sm:$0xff] %vm280, %v927
      %960 = vst.msk [vmem:[#allocation2 + $0xb0] sm:$0xff] %vm280, %v928
      %961 = vst.msk [vmem:[#allocation2 + $0xb8] sm:$0xff] %vm280, %v929
      %962 = vst.msk [vmem:[#allocation2 + $0xc0] sm:$0xff] %vm280, %v930
      %963 = vst.msk [vmem:[#allocation2 + $0xc8] sm:$0xff] %vm280, %v931
      %964 = vst.msk [vmem:[#allocation2 + $0xd0] sm:$0xff] %vm280, %v932
      %965 = vst.msk [vmem:[#allocation2 + $0xd8] sm:$0xff] %vm280, %v933
      %966 = vst.msk [vmem:[#allocation2 + $0xe0] sm:$0xff] %vm280, %v934
      %967 = vst.msk [vmem:[#allocation2 + $0xe8] sm:$0xff] %vm280, %v935
      %968 = vst.msk [vmem:[#allocation2 + $0xf0] sm:$0xff] %vm280, %v936
      %969 = vst.msk [vmem:[#allocation2 + $0xf8] sm:$0xff] %vm280, %v937
      // Predicated region
      $region33: #{ciafm_forward.9} parent=27 // pred_check
        %p970 = pneg %p188
      $region34: #{ciafm_forward.9} parent=27 // pred_check_branch
        %972 = sbr.rel (%p970) target = $region36
      $region35: #{ciafm_forward.9} parent=27 // pred_region
        %v973 = vld [vmem:[#allocation2] sm:$0xff]
        %v974 = vld [vmem:[#allocation2 + $0x8] sm:$0xff]
        %v975 = vld [vmem:[#allocation2 + $0x10] sm:$0xff]
        %v976 = vld [vmem:[#allocation2 + $0x18] sm:$0xff]
        %v977 = vld [vmem:[#allocation2 + $0x20] sm:$0xff]
        %v978 = vld [vmem:[#allocation2 + $0x28] sm:$0xff]
        %v979 = vld [vmem:[#allocation2 + $0x30] sm:$0xff]
        %v980 = vld [vmem:[#allocation2 + $0x38] sm:$0xff]
        %v981 = vld [vmem:[#allocation2 + $0x40] sm:$0xff]
        %v982 = vld [vmem:[#allocation2 + $0x48] sm:$0xff]
        %v983 = vld [vmem:[#allocation2 + $0x50] sm:$0xff]
        %v984 = vld [vmem:[#allocation2 + $0x58] sm:$0xff]
        %v985 = vld [vmem:[#allocation2 + $0x60] sm:$0xff]
        %v986 = vld [vmem:[#allocation2 + $0x68] sm:$0xff]
        %v987 = vld [vmem:[#allocation2 + $0x70] sm:$0xff]
        %v988 = vld [vmem:[#allocation2 + $0x78] sm:$0xff]
        %v989 = vld [vmem:[#allocation2 + $0x80] sm:$0xff]
        %v990 = vld [vmem:[#allocation2 + $0x88] sm:$0xff]
        %v991 = vld [vmem:[#allocation2 + $0x90] sm:$0xff]
        %v992 = vld [vmem:[#allocation2 + $0x98] sm:$0xff]
        %v993 = vld [vmem:[#allocation2 + $0xa0] sm:$0xff]
        %v994 = vld [vmem:[#allocation2 + $0xa8] sm:$0xff]
        %v995 = vld [vmem:[#allocation2 + $0xb0] sm:$0xff]
        %v996 = vld [vmem:[#allocation2 + $0xb8] sm:$0xff]
        %v997 = vld [vmem:[#allocation2 + $0xc0] sm:$0xff]
        %v998 = vld [vmem:[#allocation2 + $0xc8] sm:$0xff]
        %v999 = vld [vmem:[#allocation2 + $0xd0] sm:$0xff]
        %v1000 = vld [vmem:[#allocation2 + $0xd8] sm:$0xff]
        %v1001 = vld [vmem:[#allocation2 + $0xe0] sm:$0xff]
        %v1002 = vld [vmem:[#allocation2 + $0xe8] sm:$0xff]
        %v1003 = vld [vmem:[#allocation2 + $0xf0] sm:$0xff]
        %v1004 = vld [vmem:[#allocation2 + $0xf8] sm:$0xff]
        %1005 = vxpose.xlu0.b32.start [1/16] %v973, 128
        %1006 = vxpose.xlu0.b32.cont [2/16] %v974, 128
        %1007 = vxpose.xlu0.b32.cont [3/16] %v975, 128
        %1008 = vxpose.xlu0.b32.cont [4/16] %v976, 128
        %1009 = vxpose.xlu0.b32.cont [5/16] %v977, 128
        %1010 = vxpose.xlu0.b32.cont [6/16] %v978, 128
        %1011 = vxpose.xlu0.b32.cont [7/16] %v979, 128
        %1012 = vxpose.xlu0.b32.cont [8/16] %v980, 128
        %1013 = vxpose.xlu0.b32.cont [9/16] %v981, 128
        %1014 = vxpose.xlu0.b32.cont [10/16] %v982, 128
        %1015 = vxpose.xlu0.b32.cont [11/16] %v983, 128
        %1016 = vxpose.xlu0.b32.cont [12/16] %v984, 128
        %1017 = vxpose.xlu0.b32.cont [13/16] %v985, 128
        %1018 = vxpose.xlu0.b32.cont [14/16] %v986, 128
        %1019 = vxpose.xlu0.b32.cont [15/16] %v987, 128
        %1020 = vxpose.xlu0.b32.end [16/16] %v988, 128
        %v1021 = vpop.trf.xlu0
        %v1022 = vpop.trf.xlu0
        %v1023 = vpop.trf.xlu0
        %v1024 = vpop.trf.xlu0
        %v1025 = vpop.trf.xlu0
        %v1026 = vpop.trf.xlu0
        %v1027 = vpop.trf.xlu0
        %v1028 = vpop.trf.xlu0
        %v1029 = vpop.trf.xlu0
        %v1030 = vpop.trf.xlu0
        %v1031 = vpop.trf.xlu0
        %v1032 = vpop.trf.xlu0
        %v1033 = vpop.trf.xlu0
        %v1034 = vpop.trf.xlu0
        %v1035 = vpop.trf.xlu0
        %v1036 = vpop.trf.xlu0
        %1037 = vxpose.xlu0.b32.start [1/16] %v989, 128
        %1038 = vxpose.xlu0.b32.cont [2/16] %v990, 128
        %1039 = vxpose.xlu0.b32.cont [3/16] %v991, 128
        %1040 = vxpose.xlu0.b32.cont [4/16] %v992, 128
        %1041 = vxpose.xlu0.b32.cont [5/16] %v993, 128
        %1042 = vxpose.xlu0.b32.cont [6/16] %v994, 128
        %1043 = vxpose.xlu0.b32.cont [7/16] %v995, 128
        %1044 = vxpose.xlu0.b32.cont [8/16] %v996, 128
        %1045 = vxpose.xlu0.b32.cont [9/16] %v997, 128
        %1046 = vxpose.xlu0.b32.cont [10/16] %v998, 128
        %1047 = vxpose.xlu0.b32.cont [11/16] %v999, 128
        %1048 = vxpose.xlu0.b32.cont [12/16] %v1000, 128
        %1049 = vxpose.xlu0.b32.cont [13/16] %v1001, 128
        %1050 = vxpose.xlu0.b32.cont [14/16] %v1002, 128
        %1051 = vxpose.xlu0.b32.cont [15/16] %v1003, 128
        %1052 = vxpose.xlu0.b32.end [16/16] %v1004, 128
        %v1053 = vpop.trf.xlu0
        %v1054 = vpop.trf.xlu0
        %v1055 = vpop.trf.xlu0
        %v1056 = vpop.trf.xlu0
        %v1057 = vpop.trf.xlu0
        %v1058 = vpop.trf.xlu0
        %v1059 = vpop.trf.xlu0
        %v1060 = vpop.trf.xlu0
        %v1061 = vpop.trf.xlu0
        %v1062 = vpop.trf.xlu0
        %v1063 = vpop.trf.xlu0
        %v1064 = vpop.trf.xlu0
        %v1065 = vpop.trf.xlu0
        %v1066 = vpop.trf.xlu0
        %v1067 = vpop.trf.xlu0
        %v1068 = vpop.trf.xlu0
        %v1069 = vpack.c.bf16 %v1021, %v1021
        %v1070 = vpack.c.bf16 %v1053, %v1053
        %v1073 = vunpack.c.l.b16 %v1069
        %v1074 = vunpack.c.l.b16 %v1070
        %v1075 = vpack.c.b16 %v1074, %v1073
        %1077 = vst [vmem:[%s186] sm:$0xff] %v1075
      $region36: #{ciafm_forward.9} parent=27 // pred_fallthru
        _
      %p1078 = scmp.lt.s32.totalorder %s17, 1
      %s1079 = scalar_select %p1078, %s17, 1
      %s1080 = smul.addr %s1079, 2
      %s1081 = smul.addr %s1080, 4
      %s1082 = scalar_lea.vmem %s2, %s1081
      // Predicated region
      $region37: #{ciafm_forward.9} parent=27 // pred_check
        %p1083 = pneg %p97
      $region38: #{ciafm_forward.9} parent=27 // pred_check_branch
        %1085 = sbr.rel (%p1083) target = $region40
      $region39: #{ciafm_forward.9} parent=27 // pred_region
        _
      $region40: #{ciafm_forward.9} parent=27 // pred_fallthru
        _
    $region28: #{ciafm_forward.9} parent=5 // pred_fallthru
      _
    %p1086 = scmp.le.s32.totalorder 2, %s8
    // Predicated region
    $region41: #{ciafm_forward.9} parent=5 // pred_check
      %p1087 = pneg %p1086
    $region42: #{ciafm_forward.9} parent=5 // pred_check_branch
      %1089 = sbr.rel (%p1087) target = $region44
    $region43: #{ciafm_forward.9} parent=5 // pred_region
      %s1090 = ssub.s32 %s8, 2
      // Predicated region
      $region45: #{ciafm_forward.9} parent=43 // pred_check
        %p1091 = pneg %p103
      $region46: #{ciafm_forward.9} parent=43 // pred_check_branch
        %1093 = sbr.rel (%p1091) target = $region48
      $region47: #{ciafm_forward.9} parent=43 // pred_region
        %p1094 = scmp.lt.s32.totalorder %s19, 1
        %s1095 = scalar_select %p1094, %s19, 1
        %s1096 = smul.addr %s1095, 2
        %s1097 = smul.addr %s1096, 4
        %s1098 = scalar_lea.vmem %s2, %s1097
      $region48: #{ciafm_forward.9} parent=43 // pred_fallthru
        _
    $region44: #{ciafm_forward.9} parent=5 // pred_fallthru
      _
  $region6: #{ciafm_forward.9} parent=0 // loop_footer
    %s12 = sadd.s32 1, %s8
  $region7: #{ciafm_forward.9} parent=0 // loop_footer_branch
    %7 = sbr.rel target = $region3
  $region8: #{ciafm_forward.9} parent=0 // loop_exit
    _

// kernel: ciafm_forward.10
$region0: #{ciafm_forward.10}
  #allocation0 [shape = 'u32[]', space=smem, size = 0x4, offset = 0x4, fixed_abs, tag = 'smem constant byte address 0x4 - core index']
  #allocation1 [shape = 'u32[144,128]{1,0:T(1,128)}', space=vmem, size = 0x12000, scoped, tag = 'internal scratch']
  %s0 = inlined_call_operand.vmem [shape: bf16[2,8,256], index: 0, kind: input, shape index: {}]
  %s1 = inlined_call_operand.vmem [shape: bf16[8,8], index: 1, kind: input, shape index: {}]
  %s2 = inlined_call_operand.vmem [shape: f32[8,1], index: 2, kind: input, shape index: {}]
  %s3 = inlined_call_operand.vmem [shape: bf16[2,8,256], index: 3, kind: input, shape index: {}]
  %s4 = inlined_call_operand.vmem [shape: bf16[2,8,256], index: 4, kind: output, shape index: {}]
  %s5 = sld [smem:[#allocation0]]
  $region49: #{ciafm_forward.10} parent=0
    _
  %s7 = ssub.s32 1, %s5
  %s8 = scalar_select 0, %s7, %s5
  loop: start=0, step=1, limit=4
  $region2: #{ciafm_forward.10} parent=0 // loop_pre_header
    _
  $region3: #{ciafm_forward.10} parent=0 // loop_header
    %s10 = sphi 0, %s14
    %p11 = scmp.ge.s32.totalorder %s10, 4
    %s17 = sphi 0, %s29
    %s18 = sphi 0, %s25
    %s19 = sphi 0, %s17
    %s20 = sphi 0, %s18
    %s21 = sphi 0, %s19
    %s22 = sphi 0, %s20
    %s34 = sphi 0, %s36
    %s37 = sphi 0, %s34
    %s38 = sphi 0, %s37
    %s54 = sphi 0, %s38
    %s58 = sphi 0, %s58
    %s60 = sphi 0, %s58
    %s61 = sphi 0, %s60
    %s75 = sphi 0, %s61
    %s79 = sphi 0, %s79
    %s81 = sphi 0, %s79
    %s82 = sphi 0, %s81
    %s96 = sphi 0, %s82
    %s104 = sphi 0, %s106
    %s107 = sphi 0, %s104
    %s108 = sphi 0, %s107
    %s124 = sphi 0, %s108
    %s132 = sphi 0, %s134
    %s135 = sphi 0, %s132
    %s136 = sphi 0, %s135
    %s152 = sphi 0, %s136
  $region4: #{ciafm_forward.10} parent=0 // loop_header_branch
    %13 = sbr.rel (%p11) target = $region8
  $region5: #{ciafm_forward.10} parent=0 // loop_body
    %s15 = ssub.s32 %s10, 1
    %s16 = ssub.s32 %s10, 2
    %s23 = sadd.s32 1, %s18
    %p24 = scmp.ge.s32.totalorder %s23, 1
    %s25 = scalar_select %p24, 0, %s23
    %s26 = sadd.s32 1, %s17
    %s27 = scalar_select %p24, %s26, %s17
    %p28 = scmp.ge.s32.totalorder %s27, 2
    %s29 = scalar_select %p28, 0, %s27
    %s30 = ssub.s32 %s17, %s29
    %s31 = ssub.s32 %s18, %s25
    %s32 = sor.u32 %s30, %s31
    %p33 = scmp.eq.s32.totalorder %s32, 0
    %s35 = sadd.s32 %s34, 1
    %s36 = scalar_select %p33, %s34, %s35
    %p39 = pneg %p33
    %p40 = scmp.eq.s32.totalorder %s10, 1
    %p41 = por %p39, %p40
    %p42 = scmp.ne.s32.totalorder %s34, %s37
    %p43 = scmp.eq.s32.totalorder %s10, 0
    %p44 = por %p42, %p43
    %p45 = scmp.ne.s32.totalorder %s34, %s37
    %p46 = scmp.eq.s32.totalorder %s15, 1
    %p47 = por %p45, %p46
    %p48 = scmp.ne.s32.totalorder %s37, %s38
    %p49 = scmp.eq.s32.totalorder %s15, 0
    %p50 = por %p48, %p49
    %p51 = scmp.ne.s32.totalorder %s37, %s38
    %p52 = scmp.eq.s32.totalorder %s16, 1
    %p53 = por %p51, %p52
    %p55 = scmp.ne.s32.totalorder %s38, %s54
    %p56 = scmp.eq.s32.totalorder %s16, 0
    %p57 = por %p55, %p56
    %s59 = sadd.s32 %s58, 1
    %p62 = scmp.eq.s32.totalorder %s10, 1
    %p63 = scmp.ne.s32.totalorder %s58, %s60
    %p64 = scmp.eq.s32.totalorder %s10, 0
    %p65 = por %p63, %p64
    %p66 = scmp.ne.s32.totalorder %s58, %s60
    %p67 = scmp.eq.s32.totalorder %s15, 1
    %p68 = por %p66, %p67
    %p69 = scmp.ne.s32.totalorder %s60, %s61
    %p70 = scmp.eq.s32.totalorder %s15, 0
    %p71 = por %p69, %p70
    %p72 = scmp.ne.s32.totalorder %s60, %s61
    %p73 = scmp.eq.s32.totalorder %s16, 1
    %p74 = por %p72, %p73
    %p76 = scmp.ne.s32.totalorder %s61, %s75
    %p77 = scmp.eq.s32.totalorder %s16, 0
    %p78 = por %p76, %p77
    %s80 = sadd.s32 %s79, 1
    %p83 = scmp.eq.s32.totalorder %s10, 1
    %p84 = scmp.ne.s32.totalorder %s79, %s81
    %p85 = scmp.eq.s32.totalorder %s10, 0
    %p86 = por %p84, %p85
    %p87 = scmp.ne.s32.totalorder %s79, %s81
    %p88 = scmp.eq.s32.totalorder %s15, 1
    %p89 = por %p87, %p88
    %p90 = scmp.ne.s32.totalorder %s81, %s82
    %p91 = scmp.eq.s32.totalorder %s15, 0
    %p92 = por %p90, %p91
    %p93 = scmp.ne.s32.totalorder %s81, %s82
    %p94 = scmp.eq.s32.totalorder %s16, 1
    %p95 = por %p93, %p94
    %p97 = scmp.ne.s32.totalorder %s82, %s96
    %p98 = scmp.eq.s32.totalorder %s16, 0
    %p99 = por %p97, %p98
    %s100 = ssub.s32 %s17, %s29
    %s101 = ssub.s32 %s18, %s25
    %s102 = sor.u32 %s100, %s101
    %p103 = scmp.eq.s32.totalorder %s102, 0
    %s105 = sadd.s32 %s104, 1
    %s106 = scalar_select %p103, %s104, %s105
    %p109 = pneg %p103
    %p110 = scmp.eq.s32.totalorder %s10, 1
    %p111 = por %p109, %p110
    %p112 = scmp.ne.s32.totalorder %s104, %s107
    %p113 = scmp.eq.s32.totalorder %s10, 0
    %p114 = por %p112, %p113
    %p115 = scmp.ne.s32.totalorder %s104, %s107
    %p116 = scmp.eq.s32.totalorder %s15, 1
    %p117 = por %p115, %p116
    %p118 = scmp.ne.s32.totalorder %s107, %s108
    %p119 = scmp.eq.s32.totalorder %s15, 0
    %p120 = por %p118, %p119
    %p121 = scmp.ne.s32.totalorder %s107, %s108
    %p122 = scmp.eq.s32.totalorder %s16, 1
    %p123 = por %p121, %p122
    %p125 = scmp.ne.s32.totalorder %s108, %s124
    %p126 = scmp.eq.s32.totalorder %s16, 0
    %p127 = por %p125, %p126
    %s128 = ssub.s32 %s17, %s29
    %s129 = ssub.s32 %s18, %s25
    %s130 = sor.u32 %s128, %s129
    %p131 = scmp.eq.s32.totalorder %s130, 0
    %s133 = sadd.s32 %s132, 1
    %s134 = scalar_select %p131, %s132, %s133
    %p137 = pneg %p131
    %p138 = scmp.eq.s32.totalorder %s10, 1
    %p139 = por %p137, %p138
    %p140 = scmp.ne.s32.totalorder %s132, %s135
    %p141 = scmp.eq.s32.totalorder %s10, 0
    %p142 = por %p140, %p141
    %p143 = scmp.ne.s32.totalorder %s132, %s135
    %p144 = scmp.eq.s32.totalorder %s15, 1
    %p145 = por %p143, %p144
    %p146 = scmp.ne.s32.totalorder %s135, %s136
    %p147 = scmp.eq.s32.totalorder %s15, 0
    %p148 = por %p146, %p147
    %p149 = scmp.ne.s32.totalorder %s135, %s136
    %p150 = scmp.eq.s32.totalorder %s16, 1
    %p151 = por %p149, %p150
    %p153 = scmp.ne.s32.totalorder %s136, %s152
    %p154 = scmp.eq.s32.totalorder %s16, 0
    %p155 = por %p153, %p154
    %p156 = scmp.le.s32.totalorder 1, %s10
    %p157 = scmp.lt.s32.totalorder %s10, 3
    %p158 = pnand %p156, %p157
    %p159 = pneg %p158
    // Predicated region
    $region9: #{ciafm_forward.10} parent=5 // pred_check
      _
    $region10: #{ciafm_forward.10} parent=5 // pred_check_branch
      %161 = sbr.rel (%p158) target = $region12
    $region11: #{ciafm_forward.10} parent=5 // pred_region
      %s162 = ssub.s32 %s10, 1
      // Predicated region
      $region13: #{ciafm_forward.10} parent=11 // pred_check
        %p163 = pneg %p71
      $region14: #{ciafm_forward.10} parent=11 // pred_check_branch
        %165 = sbr.rel (%p163) target = $region16
      $region15: #{ciafm_forward.10} parent=11 // pred_region
        _
      $region16: #{ciafm_forward.10} parent=11 // pred_fallthru
        _
      // Predicated region
      $region17: #{ciafm_forward.10} parent=11 // pred_check
        %p166 = pneg %p92
      $region18: #{ciafm_forward.10} parent=11 // pred_check_branch
        %168 = sbr.rel (%p166) target = $region20
      $region19: #{ciafm_forward.10} parent=11 // pred_region
        _
      $region20: #{ciafm_forward.10} parent=11 // pred_fallthru
        _
    $region12: #{ciafm_forward.10} parent=5 // pred_fallthru
      _
    %p169 = scmp.lt.s32.totalorder %s10, 2
    // Predicated region
    $region21: #{ciafm_forward.10} parent=5 // pred_check
      %p170 = pneg %p169
    $region22: #{ciafm_forward.10} parent=5 // pred_check_branch
      %172 = sbr.rel (%p170) target = $region24
    $region23: #{ciafm_forward.10} parent=5 // pred_region
      // Predicated region
      $region25: #{ciafm_forward.10} parent=23 // pred_check
        %p173 = pneg %p44
      $region26: #{ciafm_forward.10} parent=23 // pred_check_branch
        %175 = sbr.rel (%p173) target = $region28
      $region27: #{ciafm_forward.10} parent=23 // pred_region
        %s176 = smul.u32 2, %s18
        %p177 = scmp.lt.s32.totalorder %s17, 1
        %s178 = scalar_select %p177, %s17, 1
        %p179 = scmp.lt.s32.totalorder %s176, 1
        %s180 = scalar_select %p179, %s176, 1
        %s181 = smul.addr %s178, 2
        %s182 = sadd.s32 %s180, %s181
        %s183 = smul.addr %s182, 4
        %s184 = scalar_lea.vmem %s0, %s183
        %s185 = smul.u32 2, %s18
      $region28: #{ciafm_forward.10} parent=23 // pred_fallthru
        _
      // Predicated region
      $region29: #{ciafm_forward.10} parent=23 // pred_check
        %p186 = pneg %p114
      $region30: #{ciafm_forward.10} parent=23 // pred_check_branch
        %188 = sbr.rel (%p186) target = $region32
      $region31: #{ciafm_forward.10} parent=23 // pred_region
        %s189 = smul.u32 2, %s18
        %p190 = scmp.lt.s32.totalorder %s17, 1
        %s191 = scalar_select %p190, %s17, 1
        %p192 = scmp.lt.s32.totalorder %s189, 1
        %s193 = scalar_select %p192, %s189, 1
        %s194 = smul.addr %s191, 2
        %s195 = sadd.s32 %s193, %s194
        %s196 = smul.addr %s195, 4
        %s197 = scalar_lea.vmem %s3, %s196
        %s198 = smul.u32 2, %s18
      $region32: #{ciafm_forward.10} parent=23 // pred_fallthru
        _
    $region24: #{ciafm_forward.10} parent=5 // pred_fallthru
      _
    %p199 = scmp.le.s32.totalorder 1, %s10
    %p200 = scmp.lt.s32.totalorder %s10, 3
    %p201 = pnand %p199, %p200
    %p202 = pneg %p201
    // Predicated region
    $region33: #{ciafm_forward.10} parent=5 // pred_check
      _
    $region34: #{ciafm_forward.10} parent=5 // pred_check_branch
      %204 = sbr.rel (%p201) target = $region36
    $region35: #{ciafm_forward.10} parent=5 // pred_region
      %s205 = ssub.s32 %s10, 1
      %s206 = smul.u32 2, %s20
      %p207 = scmp.lt.s32.totalorder %s19, 1
      %s208 = scalar_select %p207, %s19, 1
      %p209 = scmp.lt.s32.totalorder %s206, 1
      %s210 = scalar_select %p209, %s206, 1
      %s211 = smul.addr %s208, 2
      %s212 = sadd.s32 %s210, %s211
      %s213 = smul.addr %s212, 4
      %s214 = scalar_lea.vmem %s0, %s213
      %p215 = pneg %p50
      %p216 = pneg %p47
      %p217 = pneg %p71
      %p218 = pneg %p68
      %p219 = pneg %p92
      %p220 = pneg %p89
      %s221 = smul.u32 2, %s20
      %p222 = scmp.lt.s32.totalorder %s19, 1
      %s223 = scalar_select %p222, %s19, 1
      %p224 = scmp.lt.s32.totalorder %s221, 1
      %s225 = scalar_select %p224, %s221, 1
      %s226 = smul.addr %s223, 2
      %s227 = sadd.s32 %s225, %s226
      %s228 = smul.addr %s227, 4
      %s229 = scalar_lea.vmem %s3, %s228
      %p230 = pneg %p120
      %p231 = pneg %p117
      %p232 = pneg %p148
      %p233 = pneg %p145
      %s234 = smul.u32 2, %s20
      %p235 = scmp.lt.s32.totalorder %s19, 1
      %s236 = scalar_select %p235, %s19, 1
      %p237 = scmp.lt.s32.totalorder %s234, 1
      %s238 = scalar_select %p237, %s234, 1
      %s239 = smul.addr %s236, 2
      %s240 = sadd.s32 %s238, %s239
      %s241 = smul.addr %s240, 4
      %s242 = scalar_lea.vmem %s4, %s241
      %s243 = smul.u32 2, %s20
      %p244 = scmp.lt.s32.totalorder %s19, 1
      %s245 = scalar_select %p244, %s19, 1
      %p246 = scmp.lt.s32.totalorder %s243, 1
      %s247 = scalar_select %p246, %s243, 1
      %s248 = smul.addr %s245, 2
      %s249 = sadd.s32 %s247, %s248
      %s250 = smul.addr %s249, 4
      %s251 = scalar_lea.vmem %s0, %s250
      %s252 = smul.u32 2, %s20
      %s253 = smul.u32 2, %s20
      %p254 = scmp.lt.s32.totalorder %s19, 1
      %s255 = scalar_select %p254, %s19, 1
      %p256 = scmp.lt.s32.totalorder %s253, 1
      %s257 = scalar_select %p256, %s253, 1
      %s258 = smul.addr %s255, 2
      %s259 = sadd.s32 %s257, %s258
      %s260 = smul.addr %s259, 4
      %s261 = scalar_lea.vmem %s3, %s260
      %s262 = smul.u32 2, %s20
      %s263 = smul.u32 2, %s20
      %p264 = scmp.lt.s32.totalorder %s19, 1
      %s265 = scalar_select %p264, %s19, 1
      %p266 = scmp.lt.s32.totalorder %s263, 1
      %s267 = scalar_select %p266, %s263, 1
      %s268 = smul.addr %s265, 2
      %s269 = sadd.s32 %s267, %s268
      %s270 = smul.addr %s269, 4
      %s271 = scalar_lea.vmem %s4, %s270
      %s272 = smul.u32 2, %s20
      %v274 = vld [vmem:[%s1] sm:$0xf]
      %v275 = vld [vmem:[%s251] sm:$0xff]
      %v276 = vld [vmem:[%s2] sm:$0xff]
      %278 = vset.pattern.permute.xlu0 0
      %279 = vperm.xlu0 %278, %v276
      %v280 = vpop.permute.xlu0 %279
      %v283 = vunpack.c.l.b16 %v275
      %v284 = vunpack.c.h.b16 %v275
      %v285 = vpack.c.b16 %v283, %v283
      %v286 = vpack.c.b16 %v284, %v284
      %vm287 = vcmask 64512
      %v289 = vsel %vm287, %v274, 0
      %vm291 = vcmask 1043456
      %v293 = vsel %vm291, %v285, 0
      %v296 = vsel %vm291, %v286, 0
      %298 = vmatprep.subr.bf16.mxu0 0
      %299 = vmatpush1.bf16.msra.mxu0 0
      %300 = vmatprep.subr.bf16.mxu0 0
      %301 = vmatpush1.bf16.msra.mxu0 0
      %302 = vmatprep.subr.bf16.mxu0 0
      %303 = vmatpush1.bf16.msra.mxu0 0
      %304 = vmatprep.subr.bf16.mxu0 0
      %305 = vmatpush1.bf16.msra.mxu0 0
      %306 = vmatprep.subr.bf16.mxu0 0
      %307 = vmatpush1.bf16.msra.mxu0 0
      %308 = vmatprep.subr.bf16.mxu0 0
      %309 = vmatpush1.bf16.msra.mxu0 0
      %310 = vmatprep.subr.bf16.mxu0 0
      %311 = vmatpush1.bf16.msra.mxu0 0
      %312 = vmatprep.subr.bf16.mxu0 %v296
      %313 = vmatpush1.bf16.msra.mxu0 %v293
      %314 = vmatprep.subr.bf16.mxu0 0
      %315 = vmatpush2.bf16.msra.mxu0 0
      %316 = vmatprep.subr.bf16.mxu0 0
      %317 = vmatpush2.bf16.msra.mxu0 0
      %318 = vmatprep.subr.bf16.mxu0 0
      %319 = vmatpush2.bf16.msra.mxu0 0
      %320 = vmatprep.subr.bf16.mxu0 0
      %321 = vmatpush2.bf16.msra.mxu0 0
      %322 = vmatprep.subr.bf16.mxu0 0
      %323 = vmatpush2.bf16.msra.mxu0 0
      %324 = vmatprep.subr.bf16.mxu0 0
      %325 = vmatpush2.bf16.msra.mxu0 0
      %326 = vmatprep.subr.bf16.mxu0 0
      %327 = vmatpush2.bf16.msra.mxu0 0
      %328 = vmatprep.subr.bf16.mxu0 0
      %329 = vmatpush2.bf16.msra.mxu0 0
      %330 = vmatprep.mubr.bf16.mxu0 0
      %331 = vmatmul.mubr.bf16.gmra.mxu0 %v289
      %v332 = vpop.f32.mrf.mxu0
      %v333 = vadd.f32 %v280, %v332
      %v334 = vpop.f32.mrf.mxu0
      %v335 = vadd.f32 %v280, %v334
      %v336 = vpop.f32.mrf.mxu0
      %v337 = vpop.f32.mrf.mxu0
      %338 = vdwg.mxu0
      %v339 = vmax.f32 %v333, 0.0
      %v340 = vmax.f32 %v335, 0.0
      %v341 = vmin.f32 %v339, 6.0
      %v342 = vmin.f32 %v340, 6.0
      %v343 = vld [vmem:[%s261] sm:$0xff]
      %v344 = vunpack.c.l.bf16 %v343
      %v345 = vunpack.c.h.bf16 %v343
      %v346 = vadd.f32 %v341, %v344
      %v347 = vadd.f32 %v342, %v345
      %v348 = vpack.c.bf16 %v346, %v346
      %v349 = vpack.c.bf16 %v347, %v347
      %v352 = vunpack.c.l.b16 %v348
      %v353 = vunpack.c.l.b16 %v349
      %v354 = vpack.c.b16 %v353, %v352
      %356 = vst [vmem:[%s271] sm:$0xff] %v354
      %s357 = smul.u32 2, %s20
      %p358 = scmp.lt.s32.totalorder %s19, 1
      %s359 = scalar_select %p358, %s19, 1
      %p360 = scmp.lt.s32.totalorder %s357, 1
      %s361 = scalar_select %p360, %s357, 1
      %s362 = smul.addr %s359, 2
      %s363 = sadd.s32 %s361, %s362
      %s364 = smul.addr %s363, 4
      %s365 = scalar_lea.vmem %s4, %s364
      // Predicated region
      $region37: #{ciafm_forward.10} parent=35 // pred_check
        %p366 = pneg %p145
      $region38: #{ciafm_forward.10} parent=35 // pred_check_branch
        %368 = sbr.rel (%p366) target = $region40
      $region39: #{ciafm_forward.10} parent=35 // pred_region
        %s369 = smul.u32 2, %s20
      $region40: #{ciafm_forward.10} parent=35 // pred_fallthru
        _
    $region36: #{ciafm_forward.10} parent=5 // pred_fallthru
      _
    %p370 = scmp.le.s32.totalorder 2, %s10
    // Predicated region
    $region41: #{ciafm_forward.10} parent=5 // pred_check
      %p371 = pneg %p370
    $region42: #{ciafm_forward.10} parent=5 // pred_check_branch
      %373 = sbr.rel (%p371) target = $region44
    $region43: #{ciafm_forward.10} parent=5 // pred_region
      %s374 = ssub.s32 %s10, 2
      // Predicated region
      $region45: #{ciafm_forward.10} parent=43 // pred_check
        %p375 = pneg %p151
      $region46: #{ciafm_forward.10} parent=43 // pred_check_branch
        %377 = sbr.rel (%p375) target = $region48
      $region47: #{ciafm_forward.10} parent=43 // pred_region
        %s378 = smul.u32 2, %s22
        %p379 = scmp.lt.s32.totalorder %s21, 1
        %s380 = scalar_select %p379, %s21, 1
        %p381 = scmp.lt.s32.totalorder %s378, 1
        %s382 = scalar_select %p381, %s378, 1
        %s383 = smul.addr %s380, 2
        %s384 = sadd.s32 %s382, %s383
        %s385 = smul.addr %s384, 4
        %s386 = scalar_lea.vmem %s4, %s385
      $region48: #{ciafm_forward.10} parent=43 // pred_fallthru
        _
    $region44: #{ciafm_forward.10} parent=5 // pred_fallthru
      _
  $region6: #{ciafm_forward.10} parent=0 // loop_footer
    %s14 = sadd.s32 1, %s10
  $region7: #{ciafm_forward.10} parent=0 // loop_footer_branch
    %9 = sbr.rel target = $region3
  $region8: #{ciafm_forward.10} parent=0 // loop_exit
    _

// kernel: ciafm_forward.13
$region0: #{ciafm_forward.13}
  #allocation0 [shape = 'u32[]', space=smem, size = 0x4, offset = 0x4, fixed_abs, tag = 'smem constant byte address 0x4 - core index']
  #allocation1 [shape = 'u32[144,128]{1,0:T(1,128)}', space=vmem, size = 0x12000, scoped, tag = 'internal scratch']
  %s0 = inlined_call_operand.vmem [shape: bf16[2,8,256], index: 0, kind: input, shape index: {}]
  %s1 = inlined_call_operand.vmem [shape: bf16[2,8,256], index: 1, kind: input, shape index: {}]
  %s2 = inlined_call_operand.vmem [shape: bf16[8,8], index: 2, kind: input, shape index: {}]
  %s3 = inlined_call_operand.vmem [shape: bf16[8,8], index: 3, kind: input, shape index: {}]
  %s4 = inlined_call_operand.vmem [shape: f32[8,1], index: 4, kind: input, shape index: {}]
  %s5 = inlined_call_operand.vmem [shape: f32[2,8,256], index: 5, kind: output, shape index: {}]
  %s6 = sld [smem:[#allocation0]]
  $region53: #{ciafm_forward.13} parent=0
    _
  %s8 = ssub.s32 1, %s6
  %s9 = scalar_select 0, %s8, %s6
  loop: start=0, step=1, limit=4
  $region2: #{ciafm_forward.13} parent=0 // loop_pre_header
    _
  $region3: #{ciafm_forward.13} parent=0 // loop_header
    %s11 = sphi 0, %s15
    %p12 = scmp.ge.s32.totalorder %s11, 4
    %s18 = sphi 0, %s30
    %s19 = sphi 0, %s26
    %s20 = sphi 0, %s18
    %s21 = sphi 0, %s19
    %s22 = sphi 0, %s20
    %s23 = sphi 0, %s21
    %s35 = sphi 0, %s37
    %s38 = sphi 0, %s35
    %s39 = sphi 0, %s38
    %s55 = sphi 0, %s39
    %s63 = sphi 0, %s65
    %s66 = sphi 0, %s63
    %s67 = sphi 0, %s66
    %s83 = sphi 0, %s67
    %s87 = sphi 0, %s87
    %s89 = sphi 0, %s87
    %s90 = sphi 0, %s89
    %s104 = sphi 0, %s90
    %s108 = sphi 0, %s108
    %s110 = sphi 0, %s108
    %s111 = sphi 0, %s110
    %s125 = sphi 0, %s111
    %s129 = sphi 0, %s129
    %s131 = sphi 0, %s129
    %s132 = sphi 0, %s131
    %s146 = sphi 0, %s132
    %s154 = sphi 0, %s156
    %s157 = sphi 0, %s154
    %s158 = sphi 0, %s157
    %s174 = sphi 0, %s158
  $region4: #{ciafm_forward.13} parent=0 // loop_header_branch
    %14 = sbr.rel (%p12) target = $region8
  $region5: #{ciafm_forward.13} parent=0 // loop_body
    %s16 = ssub.s32 %s11, 1
    %s17 = ssub.s32 %s11, 2
    %s24 = sadd.s32 1, %s19
    %p25 = scmp.ge.s32.totalorder %s24, 1
    %s26 = scalar_select %p25, 0, %s24
    %s27 = sadd.s32 1, %s18
    %s28 = scalar_select %p25, %s27, %s18
    %p29 = scmp.ge.s32.totalorder %s28, 2
    %s30 = scalar_select %p29, 0, %s28
    %s31 = ssub.s32 %s18, %s30
    %s32 = ssub.s32 %s19, %s26
    %s33 = sor.u32 %s31, %s32
    %p34 = scmp.eq.s32.totalorder %s33, 0
    %s36 = sadd.s32 %s35, 1
    %s37 = scalar_select %p34, %s35, %s36
    %p40 = pneg %p34
    %p41 = scmp.eq.s32.totalorder %s11, 1
    %p42 = por %p40, %p41
    %p43 = scmp.ne.s32.totalorder %s35, %s38
    %p44 = scmp.eq.s32.totalorder %s11, 0
    %p45 = por %p43, %p44
    %p46 = scmp.ne.s32.totalorder %s35, %s38
    %p47 = scmp.eq.s32.totalorder %s16, 1
    %p48 = por %p46, %p47
    %p49 = scmp.ne.s32.totalorder %s38, %s39
    %p50 = scmp.eq.s32.totalorder %s16, 0
    %p51 = por %p49, %p50
    %p52 = scmp.ne.s32.totalorder %s38, %s39
    %p53 = scmp.eq.s32.totalorder %s17, 1
    %p54 = por %p52, %p53
    %p56 = scmp.ne.s32.totalorder %s39, %s55
    %p57 = scmp.eq.s32.totalorder %s17, 0
    %p58 = por %p56, %p57
    %s59 = ssub.s32 %s18, %s30
    %s60 = ssub.s32 %s19, %s26
    %s61 = sor.u32 %s59, %s60
    %p62 = scmp.eq.s32.totalorder %s61, 0
    %s64 = sadd.s32 %s63, 1
    %s65 = scalar_select %p62, %s63, %s64
    %p68 = pneg %p62
    %p69 = scmp.eq.s32.totalorder %s11, 1
    %p70 = por %p68, %p69
    %p71 = scmp.ne.s32.totalorder %s63, %s66
    %p72 = scmp.eq.s32.totalorder %s11, 0
    %p73 = por %p71, %p72
    %p74 = scmp.ne.s32.totalorder %s63, %s66
    %p75 = scmp.eq.s32.totalorder %s16, 1
    %p76 = por %p74, %p75
    %p77 = scmp.ne.s32.totalorder %s66, %s67
    %p78 = scmp.eq.s32.totalorder %s16, 0
    %p79 = por %p77, %p78
    %p80 = scmp.ne.s32.totalorder %s66, %s67
    %p81 = scmp.eq.s32.totalorder %s17, 1
    %p82 = por %p80, %p81
    %p84 = scmp.ne.s32.totalorder %s67, %s83
    %p85 = scmp.eq.s32.totalorder %s17, 0
    %p86 = por %p84, %p85
    %s88 = sadd.s32 %s87, 1
    %p91 = scmp.eq.s32.totalorder %s11, 1
    %p92 = scmp.ne.s32.totalorder %s87, %s89
    %p93 = scmp.eq.s32.totalorder %s11, 0
    %p94 = por %p92, %p93
    %p95 = scmp.ne.s32.totalorder %s87, %s89
    %p96 = scmp.eq.s32.totalorder %s16, 1
    %p97 = por %p95, %p96
    %p98 = scmp.ne.s32.totalorder %s89, %s90
    %p99 = scmp.eq.s32.totalorder %s16, 0
    %p100 = por %p98, %p99
    %p101 = scmp.ne.s32.totalorder %s89, %s90
    %p102 = scmp.eq.s32.totalorder %s17, 1
    %p103 = por %p101, %p102
    %p105 = scmp.ne.s32.totalorder %s90, %s104
    %p106 = scmp.eq.s32.totalorder %s17, 0
    %p107 = por %p105, %p106
    %s109 = sadd.s32 %s108, 1
    %p112 = scmp.eq.s32.totalorder %s11, 1
    %p113 = scmp.ne.s32.totalorder %s108, %s110
    %p114 = scmp.eq.s32.totalorder %s11, 0
    %p115 = por %p113, %p114
    %p116 = scmp.ne.s32.totalorder %s108, %s110
    %p117 = scmp.eq.s32.totalorder %s16, 1
    %p118 = por %p116, %p117
    %p119 = scmp.ne.s32.totalorder %s110, %s111
    %p120 = scmp.eq.s32.totalorder %s16, 0
    %p121 = por %p119, %p120
    %p122 = scmp.ne.s32.totalorder %s110, %s111
    %p123 = scmp.eq.s32.totalorder %s17, 1
    %p124 = por %p122, %p123
    %p126 = scmp.ne.s32.totalorder %s111, %s125
    %p127 = scmp.eq.s32.totalorder %s17, 0
    %p128 = por %p126, %p127
    %s130 = sadd.s32 %s129, 1
    %p133 = scmp.eq.s32.totalorder %s11, 1
    %p134 = scmp.ne.s32.totalorder %s129, %s131
    %p135 = scmp.eq.s32.totalorder %s11, 0
    %p136 = por %p134, %p135
    %p137 = scmp.ne.s32.totalorder %s129, %s131
    %p138 = scmp.eq.s32.totalorder %s16, 1
    %p139 = por %p137, %p138
    %p140 = scmp.ne.s32.totalorder %s131, %s132
    %p141 = scmp.eq.s32.totalorder %s16, 0
    %p142 = por %p140, %p141
    %p143 = scmp.ne.s32.totalorder %s131, %s132
    %p144 = scmp.eq.s32.totalorder %s17, 1
    %p145 = por %p143, %p144
    %p147 = scmp.ne.s32.totalorder %s132, %s146
    %p148 = scmp.eq.s32.totalorder %s17, 0
    %p149 = por %p147, %p148
    %s150 = ssub.s32 %s18, %s30
    %s151 = ssub.s32 %s19, %s26
    %s152 = sor.u32 %s150, %s151
    %p153 = scmp.eq.s32.totalorder %s152, 0
    %s155 = sadd.s32 %s154, 1
    %s156 = scalar_select %p153, %s154, %s155
    %p159 = pneg %p153
    %p160 = scmp.eq.s32.totalorder %s11, 1
    %p161 = por %p159, %p160
    %p162 = scmp.ne.s32.totalorder %s154, %s157
    %p163 = scmp.eq.s32.totalorder %s11, 0
    %p164 = por %p162, %p163
    %p165 = scmp.ne.s32.totalorder %s154, %s157
    %p166 = scmp.eq.s32.totalorder %s16, 1
    %p167 = por %p165, %p166
    %p168 = scmp.ne.s32.totalorder %s157, %s158
    %p169 = scmp.eq.s32.totalorder %s16, 0
    %p170 = por %p168, %p169
    %p171 = scmp.ne.s32.totalorder %s157, %s158
    %p172 = scmp.eq.s32.totalorder %s17, 1
    %p173 = por %p171, %p172
    %p175 = scmp.ne.s32.totalorder %s158, %s174
    %p176 = scmp.eq.s32.totalorder %s17, 0
    %p177 = por %p175, %p176
    %p178 = scmp.le.s32.totalorder 1, %s11
    %p179 = scmp.lt.s32.totalorder %s11, 3
    %p180 = pnand %p178, %p179
    %p181 = pneg %p180
    // Predicated region
    $region9: #{ciafm_forward.13} parent=5 // pred_check
      _
    $region10: #{ciafm_forward.13} parent=5 // pred_check_branch
      %183 = sbr.rel (%p180) target = $region12
    $region11: #{ciafm_forward.13} parent=5 // pred_region
      %s184 = ssub.s32 %s11, 1
      // Predicated region
      $region13: #{ciafm_forward.13} parent=11 // pred_check
        %p185 = pneg %p100
      $region14: #{ciafm_forward.13} parent=11 // pred_check_branch
        %187 = sbr.rel (%p185) target = $region16
      $region15: #{ciafm_forward.13} parent=11 // pred_region
        _
      $region16: #{ciafm_forward.13} parent=11 // pred_fallthru
        _
      // Predicated region
      $region17: #{ciafm_forward.13} parent=11 // pred_check
        %p188 = pneg %p121
      $region18: #{ciafm_forward.13} parent=11 // pred_check_branch
        %190 = sbr.rel (%p188) target = $region20
      $region19: #{ciafm_forward.13} parent=11 // pred_region
        _
      $region20: #{ciafm_forward.13} parent=11 // pred_fallthru
        _
      // Predicated region
      $region21: #{ciafm_forward.13} parent=11 // pred_check
        %p191 = pneg %p142
      $region22: #{ciafm_forward.13} parent=11 // pred_check_branch
        %193 = sbr.rel (%p191) target = $region24
      $region23: #{ciafm_forward.13} parent=11 // pred_region
        _
      $region24: #{ciafm_forward.13} parent=11 // pred_fallthru
        _
    $region12: #{ciafm_forward.13} parent=5 // pred_fallthru
      _
    %p194 = scmp.lt.s32.totalorder %s11, 2
    // Predicated region
    $region25: #{ciafm_forward.13} parent=5 // pred_check
      %p195 = pneg %p194
    $region26: #{ciafm_forward.13} parent=5 // pred_check_branch
      %197 = sbr.rel (%p195) target = $region28
    $region27: #{ciafm_forward.13} parent=5 // pred_region
      // Predicated region
      $region29: #{ciafm_forward.13} parent=27 // pred_check
        %p198 = pneg %p45
      $region30: #{ciafm_forward.13} parent=27 // pred_check_branch
        %200 = sbr.rel (%p198) target = $region32
      $region31: #{ciafm_forward.13} parent=27 // pred_region
        %s201 = smul.u32 2, %s19
        %p202 = scmp.lt.s32.totalorder %s18, 1
        %s203 = scalar_select %p202, %s18, 1
        %p204 = scmp.lt.s32.totalorder %s201, 1
        %s205 = scalar_select %p204, %s201, 1
        %s206 = smul.addr %s203, 2
        %s207 = sadd.s32 %s205, %s206
        %s208 = smul.addr %s207, 4
        %s209 = scalar_lea.vmem %s0, %s208
        %s210 = smul.u32 2, %s19
      $region32: #{ciafm_forward.13} parent=27 // pred_fallthru
        _
      // Predicated region
      $region33: #{ciafm_forward.13} parent=27 // pred_check
        %p211 = pneg %p73
      $region34: #{ciafm_forward.13} parent=27 // pred_check_branch
        %213 = sbr.rel (%p211) target = $region36
      $region35: #{ciafm_forward.13} parent=27 // pred_region
        %s214 = smul.u32 2, %s19
        %p215 = scmp.lt.s32.totalorder %s18, 1
        %s216 = scalar_select %p215, %s18, 1
        %p217 = scmp.lt.s32.totalorder %s214, 1
        %s218 = scalar_select %p217, %s214, 1
        %s219 = smul.addr %s216, 2
        %s220 = sadd.s32 %s218, %s219
        %s221 = smul.addr %s220, 4
        %s222 = scalar_lea.vmem %s1, %s221
        %s223 = smul.u32 2, %s19
      $region36: #{ciafm_forward.13} parent=27 // pred_fallthru
        _
    $region28: #{ciafm_forward.13} parent=5 // pred_fallthru
      _
    %p224 = scmp.le.s32.totalorder 1, %s11
    %p225 = scmp.lt.s32.totalorder %s11, 3
    %p226 = pnand %p224, %p225
    %p227 = pneg %p226
    // Predicated region
    $region37: #{ciafm_forward.13} parent=5 // pred_check
      _
    $region38: #{ciafm_forward.13} parent=5 // pred_check_branch
      %229 = sbr.rel (%p226) target = $region40
    $region39: #{ciafm_forward.13} parent=5 // pred_region
      %s230 = ssub.s32 %s11, 1
      %s231 = smul.u32 2, %s21
      %p232 = scmp.lt.s32.totalorder %s20, 1
      %s233 = scalar_select %p232, %s20, 1
      %p234 = scmp.lt.s32.totalorder %s231, 1
      %s235 = scalar_select %p234, %s231, 1
      %s236 = smul.addr %s233, 2
      %s237 = sadd.s32 %s235, %s236
      %s238 = smul.addr %s237, 4
      %s239 = scalar_lea.vmem %s0, %s238
      %p240 = pneg %p51
      %p241 = pneg %p48
      %s242 = smul.u32 2, %s21
      %p243 = scmp.lt.s32.totalorder %s20, 1
      %s244 = scalar_select %p243, %s20, 1
      %p245 = scmp.lt.s32.totalorder %s242, 1
      %s246 = scalar_select %p245, %s242, 1
      %s247 = smul.addr %s244, 2
      %s248 = sadd.s32 %s246, %s247
      %s249 = smul.addr %s248, 4
      %s250 = scalar_lea.vmem %s1, %s249
      %p251 = pneg %p79
      %p252 = pneg %p76
      %p253 = pneg %p100
      %p254 = pneg %p97
      %p255 = pneg %p121
      %p256 = pneg %p118
      %p257 = pneg %p142
      %p258 = pneg %p139
      %p259 = pneg %p170
      %p260 = pneg %p167
      %s261 = smul.u32 2, %s21
      %p262 = scmp.lt.s32.totalorder %s20, 1
      %s263 = scalar_select %p262, %s20, 1
      %p264 = scmp.lt.s32.totalorder %s261, 1
      %s265 = scalar_select %p264, %s261, 1
      %s266 = smul.addr %s263, 2
      %s267 = sadd.s32 %s265, %s266
      %s268 = smul.addr %s267, 8
      %s269 = scalar_lea.vmem %s5, %s268
      %s270 = smul.u32 2, %s21
      %p271 = scmp.lt.s32.totalorder %s20, 1
      %s272 = scalar_select %p271, %s20, 1
      %p273 = scmp.lt.s32.totalorder %s270, 1
      %s274 = scalar_select %p273, %s270, 1
      %s275 = smul.addr %s272, 2
      %s276 = sadd.s32 %s274, %s275
      %s277 = smul.addr %s276, 4
      %s278 = scalar_lea.vmem %s0, %s277
      %s279 = smul.u32 2, %s21
      %s280 = smul.u32 2, %s21
      %p281 = scmp.lt.s32.totalorder %s20, 1
      %s282 = scalar_select %p281, %s20, 1
      %p283 = scmp.lt.s32.totalorder %s280, 1
      %s284 = scalar_select %p283, %s280, 1
      %s285 = smul.addr %s282, 2
      %s286 = sadd.s32 %s284, %s285
      %s287 = smul.addr %s286, 4
      %s288 = scalar_lea.vmem %s1, %s287
      %s289 = smul.u32 2, %s21
      %s290 = smul.u32 2, %s21
      %p291 = scmp.lt.s32.totalorder %s20, 1
      %s292 = scalar_select %p291, %s20, 1
      %p293 = scmp.lt.s32.totalorder %s290, 1
      %s294 = scalar_select %p293, %s290, 1
      %s295 = smul.addr %s292, 2
      %s296 = sadd.s32 %s294, %s295
      %s297 = smul.addr %s296, 8
      %s298 = scalar_lea.vmem %s5, %s297
      %s299 = smul.u32 2, %s21
      %v301 = vld [vmem:[%s2] sm:$0xf]
      %v302 = vld [vmem:[%s278] sm:$0xff]
      %v303 = vld [vmem:[%s3] sm:$0xf]
      %v304 = vld [vmem:[%s288] sm:$0xff]
      %v306 = vunpack.c.l.b16 %v304
      %v307 = vunpack.c.h.b16 %v304
      %v308 = vpack.c.b16 %v306, %v306
      %v309 = vpack.c.b16 %v307, %v307
      %vm310 = vcmask 64512
      %v312 = vsel %vm310, %v303, 0
      %vm314 = vcmask 1043456
      %v316 = vsel %vm314, %v308, 0
      %v319 = vsel %vm314, %v309, 0
      %321 = vmatprep.subr.bf16.mxu0 0
      %322 = vmatpush1.bf16.msra.mxu0 0
      %323 = vmatprep.subr.bf16.mxu0 0
      %324 = vmatpush1.bf16.msra.mxu0 0
      %325 = vmatprep.subr.bf16.mxu0 0
      %326 = vmatpush1.bf16.msra.mxu0 0
      %327 = vmatprep.subr.bf16.mxu0 0
      %328 = vmatpush1.bf16.msra.mxu0 0
      %329 = vmatprep.subr.bf16.mxu0 0
      %330 = vmatpush1.bf16.msra.mxu0 0
      %331 = vmatprep.subr.bf16.mxu0 0
      %332 = vmatpush1.bf16.msra.mxu0 0
      %333 = vmatprep.subr.bf16.mxu0 0
      %334 = vmatpush1.bf16.msra.mxu0 0
      %335 = vmatprep.subr.bf16.mxu0 %v319
      %336 = vmatpush1.bf16.msra.mxu0 %v316
      %337 = vmatprep.subr.bf16.mxu0 0
      %338 = vmatpush2.bf16.msra.mxu0 0
      %339 = vmatprep.subr.bf16.mxu0 0
      %340 = vmatpush2.bf16.msra.mxu0 0
      %341 = vmatprep.subr.bf16.mxu0 0
      %342 = vmatpush2.bf16.msra.mxu0 0
      %343 = vmatprep.subr.bf16.mxu0 0
      %344 = vmatpush2.bf16.msra.mxu0 0
      %345 = vmatprep.subr.bf16.mxu0 0
      %346 = vmatpush2.bf16.msra.mxu0 0
      %347 = vmatprep.subr.bf16.mxu0 0
      %348 = vmatpush2.bf16.msra.mxu0 0
      %349 = vmatprep.subr.bf16.mxu0 0
      %350 = vmatpush2.bf16.msra.mxu0 0
      %351 = vmatprep.subr.bf16.mxu0 0
      %352 = vmatpush2.bf16.msra.mxu0 0
      %353 = vmatprep.mubr.bf16.mxu0 0
      %354 = vmatmul.mubr.bf16.gmra.mxu0 %v312
      %v355 = vpop.f32.mrf.mxu0
      %v356 = vadd.f32 0.0, %v355
      %v357 = vpop.f32.mrf.mxu0
      %v358 = vadd.f32 0.0, %v357
      %v359 = vpop.f32.mrf.mxu0
      %v360 = vpop.f32.mrf.mxu0
      %361 = vdwg.mxu0
      %v363 = vunpack.c.l.b16 %v302
      %v364 = vunpack.c.h.b16 %v302
      %v365 = vpack.c.b16 %v363, %v363
      %v366 = vpack.c.b16 %v364, %v364
      %v368 = vsel %vm310, %v301, 0
      %v371 = vsel %vm314, %v365, 0
      %v374 = vsel %vm314, %v366, 0
      %376 = vmatprep.subr.bf16.mxu0 0
      %377 = vmatpush1.bf16.msra.mxu0 0
      %378 = vmatprep.subr.bf16.mxu0 0
      %379 = vmatpush1.bf16.msra.mxu0 0
      %380 = vmatprep.subr.bf16.mxu0 0
      %381 = vmatpush1.bf16.msra.mxu0 0
      %382 = vmatprep.subr.bf16.mxu0 0
      %383 = vmatpush1.bf16.msra.mxu0 0
      %384 = vmatprep.subr.bf16.mxu0 0
      %385 = vmatpush1.bf16.msra.mxu0 0
      %386 = vmatprep.subr.bf16.mxu0 0
      %387 = vmatpush1.bf16.msra.mxu0 0
      %388 = vmatprep.subr.bf16.mxu0 0
      %389 = vmatpush1.bf16.msra.mxu0 0
      %390 = vmatprep.subr.bf16.mxu0 %v374
      %391 = vmatpush1.bf16.msra.mxu0 %v371
      %392 = vmatprep.subr.bf16.mxu0 0
      %393 = vmatpush2.bf16.msra.mxu0 0
      %394 = vmatprep.subr.bf16.mxu0 0
      %395 = vmatpush2.bf16.msra.mxu0 0
      %396 = vmatprep.subr.bf16.mxu0 0
      %397 = vmatpush2.bf16.msra.mxu0 0
      %398 = vmatprep.subr.bf16.mxu0 0
      %399 = vmatpush2.bf16.msra.mxu0 0
      %400 = vmatprep.subr.bf16.mxu0 0
      %401 = vmatpush2.bf16.msra.mxu0 0
      %402 = vmatprep.subr.bf16.mxu0 0
      %403 = vmatpush2.bf16.msra.mxu0 0
      %404 = vmatprep.subr.bf16.mxu0 0
      %405 = vmatpush2.bf16.msra.mxu0 0
      %406 = vmatprep.subr.bf16.mxu0 0
      %407 = vmatpush2.bf16.msra.mxu0 0
      %408 = vmatprep.mubr.bf16.mxu0 0
      %409 = vmatmul.mubr.bf16.gmra.mxu0 %v368
      %v410 = vpop.f32.mrf.mxu0
      %v411 = vadd.f32 %v356, %v410
      %v412 = vpop.f32.mrf.mxu0
      %v413 = vadd.f32 %v358, %v412
      %v414 = vpop.f32.mrf.mxu0
      %v415 = vpop.f32.mrf.mxu0
      %416 = vdwg.mxu0
      %v417 = vld [vmem:[%s4] sm:$0xff]
      %419 = vset.pattern.permute.xlu0 0
      %420 = vperm.xlu0 %419, %v417
      %v421 = vpop.permute.xlu0 %420
      %v423 = vadd.f32 %v411, %v421
      %v424 = vadd.f32 %v413, %v421
      %v425 = vmax.f32 %v423, 0.0
      %v426 = vmax.f32 %v424, 0.0
      %v427 = vmin.f32 %v425, 6.0
      %v428 = vmin.f32 %v426, 6.0
      %429 = vst [vmem:[%s298] sm:$0xff] %v427
      %430 = vst [vmem:[%s298 + $0x8] sm:$0xff] %v428
      %s431 = smul.u32 2, %s21
      %p432 = scmp.lt.s32.totalorder %s20, 1
      %s433 = scalar_select %p432, %s20, 1
      %p434 = scmp.lt.s32.totalorder %s431, 1
      %s435 = scalar_select %p434, %s431, 1
      %s436 = smul.addr %s433, 2
      %s437 = sadd.s32 %s435, %s436
      %s438 = smul.addr %s437, 8
      %s439 = scalar_lea.vmem %s5, %s438
      // Predicated region
      $region41: #{ciafm_forward.13} parent=39 // pred_check
        %p440 = pneg %p167
      $region42: #{ciafm_forward.13} parent=39 // pred_check_branch
        %442 = sbr.rel (%p440) target = $region44
      $region43: #{ciafm_forward.13} parent=39 // pred_region
        %s443 = smul.u32 2, %s21
      $region44: #{ciafm_forward.13} parent=39 // pred_fallthru
        _
    $region40: #{ciafm_forward.13} parent=5 // pred_fallthru
      _
    %p444 = scmp.le.s32.totalorder 2, %s11
    // Predicated region
    $region45: #{ciafm_forward.13} parent=5 // pred_check
      %p445 = pneg %p444
    $region46: #{ciafm_forward.13} parent=5 // pred_check_branch
      %447 = sbr.rel (%p445) target = $region48
    $region47: #{ciafm_forward.13} parent=5 // pred_region
      %s448 = ssub.s32 %s11, 2
      // Predicated region
      $region49: #{ciafm_forward.13} parent=47 // pred_check
        %p449 = pneg %p173
      $region50: #{ciafm_forward.13} parent=47 // pred_check_branch
        %451 = sbr.rel (%p449) target = $region52
      $region51: #{ciafm_forward.13} parent=47 // pred_region
        %s452 = smul.u32 2, %s23
        %p453 = scmp.lt.s32.totalorder %s22, 1
        %s454 = scalar_select %p453, %s22, 1
        %p455 = scmp.lt.s32.totalorder %s452, 1
        %s456 = scalar_select %p455, %s452, 1
        %s457 = smul.addr %s454, 2
        %s458 = sadd.s32 %s456, %s457
        %s459 = smul.addr %s458, 8
        %s460 = scalar_lea.vmem %s5, %s459
      $region52: #{ciafm_forward.13} parent=47 // pred_fallthru
        _
    $region48: #{ciafm_forward.13} parent=5 // pred_fallthru
      _
  $region6: #{ciafm_forward.13} parent=0 // loop_footer
    %s15 = sadd.s32 1, %s11
  $region7: #{ciafm_forward.13} parent=0 // loop_footer_branch
    %10 = sbr.rel target = $region3
  $region8: #{ciafm_forward.13} parent=0 // loop_exit
    _

</llo_original>
